<compile_context>
chip_gen: v6e
topology: v6e:2x2x1
jax: 0.10.0
libtpu: 0.0.40
codegen_flags: <defaults>
</compile_context>

<pallas_src>
import jax
import jax.numpy as jnp
import numpy as np
from jax import lax
from jax.experimental import pallas as pl
from jax.experimental.pallas import tpu as pltpu

K = 5      # conv kernel size
PAD = 2    # conv padding
C1 = 32    # conv1 out channels
C2 = 64    # conv2 out channels


def _battery_cnn_kernel(x_ref, w1_ref, b1_ref, w2_ref, b2_ref, w3_ref, b3_ref,
                        out_ref, pad1_ref, xcol1_ref, pad2_ref, xcol2_ref):
    """One batch tile. Activations are (channels, L*bt), temporal-major,
    batch-minor on the lane axis with bt % 128 == 0 (all slices lane-aligned)."""
    c_in = x_ref.shape[1]
    n = x_ref.shape[2]                     # L * bt
    bt = out_ref.shape[2]                  # batch tile (lane-minor, % 128 == 0)
    L = n // bt
    L2 = L // 2
    n2 = L2 * bt
    c_pad = pad1_ref.shape[0]              # c_in rounded up to a multiple of 8
    cdt = pad1_ref.dtype                   # MXU operand dtype (f32 or bf16)

    # ---- Conv1d(c_in -> 32, k=5, pad=2) + ReLU: one im2col matmul -----------
    # Zero only the temporal border blocks (the interior is fully overwritten
    # every step) and the zero-padded channel rows, so correctness never
    # depends on scratch persistence / megacore sharding.
    pad1_ref[:c_in, : PAD * bt] = jnp.zeros((c_in, PAD * bt), cdt)
    pad1_ref[:c_in, (PAD + L) * bt:] = jnp.zeros((c_in, PAD * bt), cdt)
    if c_pad > c_in:
        pad1_ref[c_in:, :] = jnp.zeros((c_pad - c_in, (L + 2 * PAD) * bt), cdt)
    pad1_ref[:c_in, PAD * bt: (PAD + L) * bt] = x_ref[0]

    # im2col into a preallocated scratch: K aligned block copies (no concat).
    for k in range(K):                      # static unroll; starts are k*bt (aligned)
        xcol1_ref[k * c_pad:(k + 1) * c_pad, :] = pad1_ref[:, k * bt: k * bt + n]
    y1 = jnp.dot(w1_ref[...], xcol1_ref[...], preferred_element_type=jnp.float32)
    y1 = jnp.maximum(y1 + b1_ref[...], 0.0)                  # (C1, L*bt) f32

    # ---- MaxPool1d(2): aligned block-wise max, written straight into pad2 ---
    pad2_ref[:, : PAD * bt] = jnp.zeros((C1, PAD * bt), cdt)
    pad2_ref[:, (PAD + L2) * bt:] = jnp.zeros((C1, PAD * bt), cdt)
    for t in range(L2):                     # static unroll over pooled positions
        a = y1[:, (2 * t) * bt: (2 * t + 1) * bt]
        b = y1[:, (2 * t + 1) * bt: (2 * t + 2) * bt]
        pad2_ref[:, (PAD + t) * bt: (PAD + t + 1) * bt] = jnp.maximum(a, b).astype(cdt)

    # ---- Conv1d(32 -> 64, k=5, pad=2) + ReLU: one im2col matmul -------------
    for k in range(K):
        xcol2_ref[k * C1:(k + 1) * C1, :] = pad2_ref[:, k * bt: k * bt + n2]
    y2 = jnp.dot(w2_ref[...], xcol2_ref[...], preferred_element_type=jnp.float32)
    y2 = jnp.maximum(y2 + b2_ref[...], 0.0)                   # (C2, L2*bt) f32

    # ---- AdaptiveAvgPool1d(1) + Flatten: tree of lane-aligned adds ----------
    parts = [y2[:, t * bt: (t + 1) * bt] for t in range(L2)]
    while len(parts) > 1:
        nxt = [parts[i] + parts[i + 1] for i in range(0, len(parts) - 1, 2)]
        if len(parts) % 2:
            nxt.append(parts[-1])
        parts = nxt
    feat = parts[0] * (1.0 / L2)                              # (C2, bt) f32

    # Dropout(0.3) is identity at inference (eval mode).
    # TODO(synk): training-mode stochastic dropout masking not implemented.

    # ---- Linear(64 -> n_classes), lane-dense (n_classes, bt) output ---------
    logits = jnp.dot(w3_ref[...], feat, preferred_element_type=jnp.float32)
    out_ref[0] = (logits + b3_ref[...]).astype(out_ref.dtype)


def _round_up(v, m):
    return ((v + m - 1) // m) * m


def _pick_batch_tile(B, L, target_cols=16384, min_tiles=2):
    """Batch tile: multiple of 128, L*bt <= target_cols, no more batch padding
    than one tile, and (when the batch allows) >= min_tiles grid steps so the
    'parallel' axis can feed both v7x TensorCores."""
    bt = max(128, (target_cols // max(L, 1)) // 128 * 128)
    bt = min(bt, _round_up(B, 128))
    bt = max(bt, 128)
    while bt > 128 and -(-B // bt) < min_tiles:
        bt -= 128
    return bt
    # TODO(synk): very long sequences (L*128 >> target_cols) would need a
    # temporal tiling axis in addition to the batch tiling.


def battery_1d_cnn(x, params, *, batch_tile=None, target_cols=16384,
                   compute_dtype=jnp.float32):
    """x: (B, n_features, L) float32. Returns (B, n_classes) float32."""
    w1, b1, w2, b2, w3, b3 = (params[k] for k in ("w1", "b1", "w2", "b2", "w3", "b3"))
    B, c_in, L = x.shape
    assert L >= 2, "sequence length must be >= 2 (MaxPool1d(2))"
    n_classes = w3.shape[0]
    L2 = L // 2

    if batch_tile is None:
        bt = _pick_batch_tile(B, L, target_cols=target_cols)
    else:
        bt = batch_tile
        assert bt % 128 == 0, "batch_tile must be a multiple of 128 (lane width)"

    num_tiles = -(-B // bt)
    B_pad = num_tiles * bt
    n = L * bt
    n2 = L2 * bt
    c_pad = _round_up(c_in, 8)          # sublane-align the im2col chunks

    # Pad the batch (zeros) to whole lane-aligned tiles and pack it onto the
    # lane axis (temporal-major, batch-minor); under jit the pad + transpose +
    # cast fuse into one XLA copy pass feeding the kernel.
    if B_pad != B:
        x = jnp.pad(x, ((0, B_pad - B), (0, 0), (0, 0)))
    xp = x.reshape(num_tiles, bt, c_in, L)
    xp = jnp.transpose(xp, (0, 2, 3, 1)).reshape(num_tiles, c_in, n)
    xp = xp.astype(compute_dtype)

    # Fuse the K taps into single matmuls: (C_out, K*C_in_padded) weights whose
    # column order matches the kernel's im2col row order [k*c_pad + ci].
    # Padded input channels get zero weight columns (values in the scratch's
    # padded rows are also zeroed, so they contribute exactly 0).
    w1_t = jnp.transpose(w1, (0, 2, 1)).astype(compute_dtype)          # (C1, K, c_in)
    w1_mat = jnp.zeros((C1, K, c_pad), compute_dtype).at[:, :, :c_in].set(
        w1_t).reshape(C1, K * c_pad)
    w2_mat = jnp.transpose(w2, (0, 2, 1)).reshape(C2, K * C1).astype(compute_dtype)
    b1_c = b1.reshape(C1, 1).astype(jnp.float32)
    b2_c = b2.reshape(C2, 1).astype(jnp.float32)
    b3_c = b3.reshape(n_classes, 1).astype(jnp.float32)
    w3_c = w3.astype(jnp.float32)

    grid_spec = pltpu.PrefetchScalarGridSpec(
        num_scalar_prefetch=0,
        grid=(num_tiles,),
        in_specs=[
            pl.BlockSpec((1, c_in, n), lambda i: (i, 0, 0)),        # packed x tile
            pl.BlockSpec((C1, K * c_pad), lambda i: (0, 0)),        # conv1 weights
            pl.BlockSpec((C1, 1), lambda i: (0, 0)),                # b1
            pl.BlockSpec((C2, K * C1), lambda i: (0, 0)),           # conv2 weights
            pl.BlockSpec((C2, 1), lambda i: (0, 0)),                # b2
            pl.BlockSpec((n_classes, C2), lambda i: (0, 0)),        # w3
            pl.BlockSpec((n_classes, 1), lambda i: (0, 0)),         # b3
        ],
        out_specs=pl.BlockSpec((1, n_classes, bt), lambda i: (i, 0, 0)),
        scratch_shapes=[
            pltpu.VMEM((c_pad, (L + 2 * PAD) * bt), compute_dtype),    # padded conv1 in
            pltpu.VMEM((K * c_pad, n), compute_dtype),                 # conv1 im2col
            pltpu.VMEM((C1, (L2 + 2 * PAD) * bt), compute_dtype),      # padded conv2 in
            pltpu.VMEM((K * C1, n2), compute_dtype),                   # conv2 im2col
        ],
    )

    elem = jnp.dtype(compute_dtype).itemsize
    # Live-VMEM estimate: double-buffered input block + scratches + f32 y1/y2
    # temporaries. Clamp the scoped limit to 64 MiB so the same tiling fits
    # v7x's smaller per-core VMEM as well as v5e/v6e.
    live_bytes = (2 * c_in * n * elem
                  + c_pad * (n + 2 * PAD * bt) * elem
                  + K * c_pad * n * elem
                  + C1 * (n2 + 2 * PAD * bt) * elem
                  + K * C1 * n2 * elem
                  + (C1 * n + C2 * n2) * 4)
    vmem_limit = int(min(max(2 * live_bytes + (8 << 20), 32 << 20), 64 << 20))

    cost = pl.CostEstimate(
        flops=2 * B_pad * (K * c_pad * C1 * L + K * C1 * C2 * L2 + C2 * n_classes),
        transcendentals=0,
        bytes_accessed=(B_pad * c_in * L * elem + B_pad * n_classes * 4
                        + (w1_mat.size + w2_mat.size) * elem
                        + (w3.size + C1 + C2 + n_classes) * 4),
    )

    out = pl.pallas_call(
        _battery_cnn_kernel,
        out_shape=jax.ShapeDtypeStruct((num_tiles, n_classes, bt), jnp.float32),
        grid_spec=grid_spec,
        compiler_params=pltpu.CompilerParams(
            dimension_semantics=("parallel",),
            vmem_limit_bytes=vmem_limit),
        cost_estimate=cost,
    )(xp, w1_mat, b1_c, w2_mat, b2_c, w3_c, b3_c)

    # (tiles, n_classes, bt) -> (B_pad, n_classes) -> drop the batch padding.
    out = jnp.transpose(out, (0, 2, 1)).reshape(B_pad, n_classes)
    return out[:B]


def reference_forward(x, params):
    """Pure-JAX reference mirroring the PyTorch forward (eval mode)."""
    w1, b1, w2, b2, w3, b3 = (params[k] for k in ("w1", "b1", "w2", "b2", "w3", "b3"))
    y1 = lax.conv_general_dilated(x, w1, window_strides=(1,), padding=[(PAD, PAD)],
                                  dimension_numbers=("NCH", "OIH", "NCH"))
    y1 = jax.nn.relu(y1 + b1[None, :, None])
    B, C, L = y1.shape
    p1 = jnp.max(y1[:, :, : (L // 2) * 2].reshape(B, C, L // 2, 2), axis=-1)
    y2 = lax.conv_general_dilated(p1, w2, window_strides=(1,), padding=[(PAD, PAD)],
                                  dimension_numbers=("NCH", "OIH", "NCH"))
    y2 = jax.nn.relu(y2 + b2[None, :, None])
    feat = jnp.mean(y2, axis=-1)                   # AdaptiveAvgPool1d(1) + Flatten
    return feat @ w3.T + b3[None, :]               # Dropout is identity in eval mode


if __name__ == "__main__":
    n_features, n_classes = 4, 5

    key = jax.random.PRNGKey(0)
    ks = jax.random.split(key, 7)
    params = {
        "w1": 0.1 * jax.random.normal(ks[0], (C1, n_features, K), jnp.float32),
        "b1": 0.1 * jax.random.normal(ks[1], (C1,), jnp.float32),
        "w2": 0.1 * jax.random.normal(ks[2], (C2, C1, K), jnp.float32),
        "b2": 0.1 * jax.random.normal(ks[3], (C2,), jnp.float32),
        "w3": 0.1 * jax.random.normal(ks[4], (n_classes, C2), jnp.float32),
        "b3": 0.1 * jax.random.normal(ks[5], (n_classes,), jnp.float32),
    }

    # Small shape from the spec: batch=2, channels=4, L=16. The batch is
    # zero-padded to one 128-wide lane tile inside the wrapper; padded rows
    # are sliced off the output.
    x = jax.random.normal(ks[6], (2, n_features, 16), jnp.float32)
    fwd = jax.jit(lambda xx: battery_1d_cnn(xx, params))
    out = jax.block_until_ready(fwd(x))
    ref = reference_forward(x, params)
    np.testing.assert_allclose(np.asarray(out), np.asarray(ref), rtol=1e-4, atol=1e-5)

    # Multi-tile grid path: 256 samples, 128 per grid step -> 2 "parallel"
    # grid steps (exercises megacore sharding and the aligned tiling).
    x2 = jax.random.normal(jax.random.PRNGKey(1), (256, n_features, 32), jnp.float32)
    fwd2 = jax.jit(lambda xx: battery_1d_cnn(xx, params, batch_tile=128))
    out2 = jax.block_until_ready(fwd2(x2))
    ref2 = reference_forward(x2, params)
    np.testing.assert_allclose(np.asarray(out2), np.asarray(ref2), rtol=1e-4, atol=1e-5)

    # bf16 MXU operands (v6e/v7x-friendly), f32 accumulation; loose tolerance.
    fwd_bf16 = jax.jit(lambda xx: battery_1d_cnn(xx, params, compute_dtype=jnp.bfloat16))
    out_bf16 = jax.block_until_ready(fwd_bf16(x))
    np.testing.assert_allclose(np.asarray(out_bf16), np.asarray(ref),
                               rtol=5e-2, atol=5e-2)

    print("KERNEL_OK")
</pallas_src>

<mosaic_0001>
module attributes {stable_mosaic.version = 11 : i64} {
  func.func @_battery_cnn_kernel(%arg0: i32, %arg1: memref<1x4x2048xf32, #tpu.memory_space<vmem>>, %arg2: memref<32x40xf32, #tpu.memory_space<vmem>>, %arg3: memref<32x1xf32, #tpu.memory_space<vmem>>, %arg4: memref<64x160xf32, #tpu.memory_space<vmem>>, %arg5: memref<64x1xf32, #tpu.memory_space<vmem>>, %arg6: memref<5x64xf32, #tpu.memory_space<vmem>>, %arg7: memref<5x1xf32, #tpu.memory_space<vmem>>, %arg8: memref<1x5x128xf32, #tpu.memory_space<vmem>>, %arg9: memref<8x2560xf32, #tpu.memory_space<vmem>>, %arg10: memref<40x2048xf32, #tpu.memory_space<vmem>>, %arg11: memref<32x1536xf32, #tpu.memory_space<vmem>>, %arg12: memref<160x1024xf32, #tpu.memory_space<vmem>>) attributes {dimension_semantics = [#tpu.dimension_semantics<parallel>], iteration_bounds = array<i64: 1>, scalar_prefetch = 0 : i64, scratch_operands = 4 : i64, tpu.core_type = #tpu.core_type<tc>, window_params = [{transform_indices = @transform_0, window_bounds = array<i64: 1, 4, 2048>}, {pipeline_mode = #tpu.pipeline_mode<synchronous>, transform_indices = @transform_1, window_bounds = array<i64: 32, 40>}, {pipeline_mode = #tpu.pipeline_mode<synchronous>, transform_indices = @transform_2, window_bounds = array<i64: 32, 1>}, {pipeline_mode = #tpu.pipeline_mode<synchronous>, transform_indices = @transform_3, window_bounds = array<i64: 64, 160>}, {pipeline_mode = #tpu.pipeline_mode<synchronous>, transform_indices = @transform_4, window_bounds = array<i64: 64, 1>}, {pipeline_mode = #tpu.pipeline_mode<synchronous>, transform_indices = @transform_5, window_bounds = array<i64: 5, 64>}, {pipeline_mode = #tpu.pipeline_mode<synchronous>, transform_indices = @transform_6, window_bounds = array<i64: 5, 1>}, {transform_indices = @transform_7, window_bounds = array<i64: 1, 5, 128>}]} {
    %cst = arith.constant 0.000000e+00 : f32
    %0 = vector.broadcast %cst : f32 to vector<4x256xf32>
    %c0 = arith.constant 0 : index
    %c0_0 = arith.constant 0 : index
    %1 = vector.load %arg9[%c0, %c0_0] : memref<8x2560xf32, #tpu.memory_space<vmem>>, vector<4x256xf32>
    tpu.vector_store %arg9[%c0, %c0_0], %0 {strides = array<i32>} : memref<8x2560xf32, #tpu.memory_space<vmem>>, vector<4x256xf32>,
    %cst_1 = arith.constant 0.000000e+00 : f32
    %2 = vector.broadcast %cst_1 : f32 to vector<4x256xf32>
    %c0_2 = arith.constant 0 : index
    %c2304 = arith.constant 2304 : index
    %3 = vector.load %arg9[%c0_2, %c2304] : memref<8x2560xf32, #tpu.memory_space<vmem>>, vector<4x256xf32>
    tpu.vector_store %arg9[%c0_2, %c2304], %2 {strides = array<i32>} : memref<8x2560xf32, #tpu.memory_space<vmem>>, vector<4x256xf32>,
    %cst_3 = arith.constant 0.000000e+00 : f32
    %4 = vector.broadcast %cst_3 : f32 to vector<4x2560xf32>
    %c4 = arith.constant 4 : index
    %c0_4 = arith.constant 0 : index
    %5 = vector.load %arg9[%c4, %c0_4] : memref<8x2560xf32, #tpu.memory_space<vmem>>, vector<4x2560xf32>
    tpu.vector_store %arg9[%c4, %c0_4], %4 {strides = array<i32>} : memref<8x2560xf32, #tpu.memory_space<vmem>>, vector<4x2560xf32>,
    %c0_5 = arith.constant 0 : index
    %c0_6 = arith.constant 0 : index
    %c0_7 = arith.constant 0 : index
    %6 = vector.load %arg1[%c0_5, %c0_6, %c0_7] : memref<1x4x2048xf32, #tpu.memory_space<vmem>>, vector<1x4x2048xf32>
    %7 = vector.shape_cast %6 : vector<1x4x2048xf32> to vector<4x2048xf32>
    %c0_8 = arith.constant 0 : index
    %c256 = arith.constant 256 : index
    %8 = vector.load %arg9[%c0_8, %c256] : memref<8x2560xf32, #tpu.memory_space<vmem>>, vector<4x2048xf32>
    tpu.vector_store %arg9[%c0_8, %c256], %7 {strides = array<i32>} : memref<8x2560xf32, #tpu.memory_space<vmem>>, vector<4x2048xf32>,
    %c0_9 = arith.constant 0 : index
    %c0_10 = arith.constant 0 : index
    %9 = vector.load %arg9[%c0_9, %c0_10] : memref<8x2560xf32, #tpu.memory_space<vmem>>, vector<8x2048xf32>
    %c0_11 = arith.constant 0 : index
    %c0_12 = arith.constant 0 : index
    %10 = vector.load %arg10[%c0_11, %c0_12] : memref<40x2048xf32, #tpu.memory_space<vmem>>, vector<8x2048xf32>
    tpu.vector_store %arg10[%c0_11, %c0_12], %9 {strides = array<i32>} : memref<40x2048xf32, #tpu.memory_space<vmem>>, vector<8x2048xf32>,
    %c0_13 = arith.constant 0 : index
    %c128 = arith.constant 128 : index
    %11 = vector.load %arg9[%c0_13, %c128] : memref<8x2560xf32, #tpu.memory_space<vmem>>, vector<8x2048xf32>
    %c8 = arith.constant 8 : index
    %c0_14 = arith.constant 0 : index
    %12 = vector.load %arg10[%c8, %c0_14] : memref<40x2048xf32, #tpu.memory_space<vmem>>, vector<8x2048xf32>
    tpu.vector_store %arg10[%c8, %c0_14], %11 {strides = array<i32>} : memref<40x2048xf32, #tpu.memory_space<vmem>>, vector<8x2048xf32>,
    %c0_15 = arith.constant 0 : index
    %c256_16 = arith.constant 256 : index
    %13 = vector.load %arg9[%c0_15, %c256_16] : memref<8x2560xf32, #tpu.memory_space<vmem>>, vector<8x2048xf32>
    %c16 = arith.constant 16 : index
    %c0_17 = arith.constant 0 : index
    %14 = vector.load %arg10[%c16, %c0_17] : memref<40x2048xf32, #tpu.memory_space<vmem>>, vector<8x2048xf32>
    tpu.vector_store %arg10[%c16, %c0_17], %13 {strides = array<i32>} : memref<40x2048xf32, #tpu.memory_space<vmem>>, vector<8x2048xf32>,
    %c0_18 = arith.constant 0 : index
    %c384 = arith.constant 384 : index
    %15 = vector.load %arg9[%c0_18, %c384] : memref<8x2560xf32, #tpu.memory_space<vmem>>, vector<8x2048xf32>
    %c24 = arith.constant 24 : index
    %c0_19 = arith.constant 0 : index
    %16 = vector.load %arg10[%c24, %c0_19] : memref<40x2048xf32, #tpu.memory_space<vmem>>, vector<8x2048xf32>
    tpu.vector_store %arg10[%c24, %c0_19], %15 {strides = array<i32>} : memref<40x2048xf32, #tpu.memory_space<vmem>>, vector<8x2048xf32>,
    %c0_20 = arith.constant 0 : index
    %c512 = arith.constant 512 : index
    %17 = vector.load %arg9[%c0_20, %c512] : memref<8x2560xf32, #tpu.memory_space<vmem>>, vector<8x2048xf32>
    %c32 = arith.constant 32 : index
    %c0_21 = arith.constant 0 : index
    %18 = vector.load %arg10[%c32, %c0_21] : memref<40x2048xf32, #tpu.memory_space<vmem>>, vector<8x2048xf32>
    tpu.vector_store %arg10[%c32, %c0_21], %17 {strides = array<i32>} : memref<40x2048xf32, #tpu.memory_space<vmem>>, vector<8x2048xf32>,
    %c0_22 = arith.constant 0 : index
    %c0_23 = arith.constant 0 : index
    %19 = vector.load %arg2[%c0_22, %c0_23] : memref<32x40xf32, #tpu.memory_space<vmem>>, vector<32x40xf32>
    %c0_24 = arith.constant 0 : index
    %c0_25 = arith.constant 0 : index
    %20 = vector.load %arg10[%c0_24, %c0_25] : memref<40x2048xf32, #tpu.memory_space<vmem>>, vector<40x2048xf32>
    %cst_26 = arith.constant dense<0.000000e+00> : vector<32x2048xf32>
    %21 = tpu.matmul %19, %20, %cst_26 {dimension_numbers = #tpu.dot_dimension_numbers<[1], [0], [0], [1], [0, 0, 1, 1], [], []>} : vector<32x40xf32>, vector<40x2048xf32>, vector<32x2048xf32> -> vector<32x2048xf32>
    %c0_27 = arith.constant 0 : index
    %c0_28 = arith.constant 0 : index
    %22 = vector.load %arg3[%c0_27, %c0_28] : memref<32x1xf32, #tpu.memory_space<vmem>>, vector<32x1xf32>
    %23 = vector.broadcast %22 : vector<32x1xf32> to vector<32x2048xf32>
    %24 = arith.addf %21, %23 : vector<32x2048xf32>
    %cst_29 = arith.constant 0.000000e+00 : f32
    %25 = vector.broadcast %cst_29 : f32 to vector<32x2048xf32>
    %26 = arith.maximumf %24, %25 : vector<32x2048xf32>
    %cst_30 = arith.constant 0.000000e+00 : f32
    %27 = vector.broadcast %cst_30 : f32 to vector<32x256xf32>
    %c0_31 = arith.constant 0 : index
    %c0_32 = arith.constant 0 : index
    %28 = vector.load %arg11[%c0_31, %c0_32] : memref<32x1536xf32, #tpu.memory_space<vmem>>, vector<32x256xf32>
    tpu.vector_store %arg11[%c0_31, %c0_32], %27 {strides = array<i32>} : memref<32x1536xf32, #tpu.memory_space<vmem>>, vector<32x256xf32>,
    %cst_33 = arith.constant 0.000000e+00 : f32
    %29 = vector.broadcast %cst_33 : f32 to vector<32x256xf32>
    %c0_34 = arith.constant 0 : index
    %c1280 = arith.constant 1280 : index
    %30 = vector.load %arg11[%c0_34, %c1280] : memref<32x1536xf32, #tpu.memory_space<vmem>>, vector<32x256xf32>
    tpu.vector_store %arg11[%c0_34, %c1280], %29 {strides = array<i32>} : memref<32x1536xf32, #tpu.memory_space<vmem>>, vector<32x256xf32>,
    %31 = vector.extract_strided_slice %26 {offsets = [0, 0], sizes = [32, 128], strides = [1, 1]} : vector<32x2048xf32> to vector<32x128xf32>
    %32 = vector.extract_strided_slice %26 {offsets = [0, 128], sizes = [32, 128], strides = [1, 1]} : vector<32x2048xf32> to vector<32x128xf32>
    %33 = arith.maximumf %31, %32 : vector<32x128xf32>
    %c0_35 = arith.constant 0 : index
    %c256_36 = arith.constant 256 : index
    %34 = vector.load %arg11[%c0_35, %c256_36] : memref<32x1536xf32, #tpu.memory_space<vmem>>, vector<32x128xf32>
    tpu.vector_store %arg11[%c0_35, %c256_36], %33 {strides = array<i32>} : memref<32x1536xf32, #tpu.memory_space<vmem>>, vector<32x128xf32>,
    %35 = vector.extract_strided_slice %26 {offsets = [0, 256], sizes = [32, 128], strides = [1, 1]} : vector<32x2048xf32> to vector<32x128xf32>
    %36 = vector.extract_strided_slice %26 {offsets = [0, 384], sizes = [32, 128], strides = [1, 1]} : vector<32x2048xf32> to vector<32x128xf32>
    %37 = arith.maximumf %35, %36 : vector<32x128xf32>
    %c0_37 = arith.constant 0 : index
    %c384_38 = arith.constant 384 : index
    %38 = vector.load %arg11[%c0_37, %c384_38] : memref<32x1536xf32, #tpu.memory_space<vmem>>, vector<32x128xf32>
    tpu.vector_store %arg11[%c0_37, %c384_38], %37 {strides = array<i32>} : memref<32x1536xf32, #tpu.memory_space<vmem>>, vector<32x128xf32>,
    %39 = vector.extract_strided_slice %26 {offsets = [0, 512], sizes = [32, 128], strides = [1, 1]} : vector<32x2048xf32> to vector<32x128xf32>
    %40 = vector.extract_strided_slice %26 {offsets = [0, 640], sizes = [32, 128], strides = [1, 1]} : vector<32x2048xf32> to vector<32x128xf32>
    %41 = arith.maximumf %39, %40 : vector<32x128xf32>
    %c0_39 = arith.constant 0 : index
    %c512_40 = arith.constant 512 : index
    %42 = vector.load %arg11[%c0_39, %c512_40] : memref<32x1536xf32, #tpu.memory_space<vmem>>, vector<32x128xf32>
    tpu.vector_store %arg11[%c0_39, %c512_40], %41 {strides = array<i32>} : memref<32x1536xf32, #tpu.memory_space<vmem>>, vector<32x128xf32>,
    %43 = vector.extract_strided_slice %26 {offsets = [0, 768], sizes = [32, 128], strides = [1, 1]} : vector<32x2048xf32> to vector<32x128xf32>
    %44 = vector.extract_strided_slice %26 {offsets = [0, 896], sizes = [32, 128], strides = [1, 1]} : vector<32x2048xf32> to vector<32x128xf32>
    %45 = arith.maximumf %43, %44 : vector<32x128xf32>
    %c0_41 = arith.constant 0 : index
    %c640 = arith.constant 640 : index
    %46 = vector.load %arg11[%c0_41, %c640] : memref<32x1536xf32, #tpu.memory_space<vmem>>, vector<32x128xf32>
    tpu.vector_store %arg11[%c0_41, %c640], %45 {strides = array<i32>} : memref<32x1536xf32, #tpu.memory_space<vmem>>, vector<32x128xf32>,
    %47 = vector.extract_strided_slice %26 {offsets = [0, 1024], sizes = [32, 128], strides = [1, 1]} : vector<32x2048xf32> to vector<32x128xf32>
    %48 = vector.extract_strided_slice %26 {offsets = [0, 1152], sizes = [32, 128], strides = [1, 1]} : vector<32x2048xf32> to vector<32x128xf32>
    %49 = arith.maximumf %47, %48 : vector<32x128xf32>
    %c0_42 = arith.constant 0 : index
    %c768 = arith.constant 768 : index
    %50 = vector.load %arg11[%c0_42, %c768] : memref<32x1536xf32, #tpu.memory_space<vmem>>, vector<32x128xf32>
    tpu.vector_store %arg11[%c0_42, %c768], %49 {strides = array<i32>} : memref<32x1536xf32, #tpu.memory_space<vmem>>, vector<32x128xf32>,
    %51 = vector.extract_strided_slice %26 {offsets = [0, 1280], sizes = [32, 128], strides = [1, 1]} : vector<32x2048xf32> to vector<32x128xf32>
    %52 = vector.extract_strided_slice %26 {offsets = [0, 1408], sizes = [32, 128], strides = [1, 1]} : vector<32x2048xf32> to vector<32x128xf32>
    %53 = arith.maximumf %51, %52 : vector<32x128xf32>
    %c0_43 = arith.constant 0 : index
    %c896 = arith.constant 896 : index
    %54 = vector.load %arg11[%c0_43, %c896] : memref<32x1536xf32, #tpu.memory_space<vmem>>, vector<32x128xf32>
    tpu.vector_store %arg11[%c0_43, %c896], %53 {strides = array<i32>} : memref<32x1536xf32, #tpu.memory_space<vmem>>, vector<32x128xf32>,
    %55 = vector.extract_strided_slice %26 {offsets = [0, 1536], sizes = [32, 128], strides = [1, 1]} : vector<32x2048xf32> to vector<32x128xf32>
    %56 = vector.extract_strided_slice %26 {offsets = [0, 1664], sizes = [32, 128], strides = [1, 1]} : vector<32x2048xf32> to vector<32x128xf32>
    %57 = arith.maximumf %55, %56 : vector<32x128xf32>
    %c0_44 = arith.constant 0 : index
    %c1024 = arith.constant 1024 : index
    %58 = vector.load %arg11[%c0_44, %c1024] : memref<32x1536xf32, #tpu.memory_space<vmem>>, vector<32x128xf32>
    tpu.vector_store %arg11[%c0_44, %c1024], %57 {strides = array<i32>} : memref<32x1536xf32, #tpu.memory_space<vmem>>, vector<32x128xf32>,
    %59 = vector.extract_strided_slice %26 {offsets = [0, 1792], sizes = [32, 128], strides = [1, 1]} : vector<32x2048xf32> to vector<32x128xf32>
    %60 = vector.extract_strided_slice %26 {offsets = [0, 1920], sizes = [32, 128], strides = [1, 1]} : vector<32x2048xf32> to vector<32x128xf32>
    %61 = arith.maximumf %59, %60 : vector<32x128xf32>
    %c0_45 = arith.constant 0 : index
    %c1152 = arith.constant 1152 : index
    %62 = vector.load %arg11[%c0_45, %c1152] : memref<32x1536xf32, #tpu.memory_space<vmem>>, vector<32x128xf32>
    tpu.vector_store %arg11[%c0_45, %c1152], %61 {strides = array<i32>} : memref<32x1536xf32, #tpu.memory_space<vmem>>, vector<32x128xf32>,
    %c0_46 = arith.constant 0 : index
    %c0_47 = arith.constant 0 : index
    %63 = vector.load %arg11[%c0_46, %c0_47] : memref<32x1536xf32, #tpu.memory_space<vmem>>, vector<32x1024xf32>
    %c0_48 = arith.constant 0 : index
    %c0_49 = arith.constant 0 : index
    %64 = vector.load %arg12[%c0_48, %c0_49] : memref<160x1024xf32, #tpu.memory_space<vmem>>, vector<32x1024xf32>
    tpu.vector_store %arg12[%c0_48, %c0_49], %63 {strides = array<i32>} : memref<160x1024xf32, #tpu.memory_space<vmem>>, vector<32x1024xf32>,
    %c0_50 = arith.constant 0 : index
    %c128_51 = arith.constant 128 : index
    %65 = vector.load %arg11[%c0_50, %c128_51] : memref<32x1536xf32, #tpu.memory_space<vmem>>, vector<32x1024xf32>
    %c32_52 = arith.constant 32 : index
    %c0_53 = arith.constant 0 : index
    %66 = vector.load %arg12[%c32_52, %c0_53] : memref<160x1024xf32, #tpu.memory_space<vmem>>, vector<32x1024xf32>
    tpu.vector_store %arg12[%c32_52, %c0_53], %65 {strides = array<i32>} : memref<160x1024xf32, #tpu.memory_space<vmem>>, vector<32x1024xf32>,
    %c0_54 = arith.constant 0 : index
    %c256_55 = arith.constant 256 : index
    %67 = vector.load %arg11[%c0_54, %c256_55] : memref<32x1536xf32, #tpu.memory_space<vmem>>, vector<32x1024xf32>
    %c64 = arith.constant 64 : index
    %c0_56 = arith.constant 0 : index
    %68 = vector.load %arg12[%c64, %c0_56] : memref<160x1024xf32, #tpu.memory_space<vmem>>, vector<32x1024xf32>
    tpu.vector_store %arg12[%c64, %c0_56], %67 {strides = array<i32>} : memref<160x1024xf32, #tpu.memory_space<vmem>>, vector<32x1024xf32>,
    %c0_57 = arith.constant 0 : index
    %c384_58 = arith.constant 384 : index
    %69 = vector.load %arg11[%c0_57, %c384_58] : memref<32x1536xf32, #tpu.memory_space<vmem>>, vector<32x1024xf32>
    %c96 = arith.constant 96 : index
    %c0_59 = arith.constant 0 : index
    %70 = vector.load %arg12[%c96, %c0_59] : memref<160x1024xf32, #tpu.memory_space<vmem>>, vector<32x1024xf32>
    tpu.vector_store %arg12[%c96, %c0_59], %69 {strides = array<i32>} : memref<160x1024xf32, #tpu.memory_space<vmem>>, vector<32x1024xf32>,
    %c0_60 = arith.constant 0 : index
    %c512_61 = arith.constant 512 : index
    %71 = vector.load %arg11[%c0_60, %c512_61] : memref<32x1536xf32, #tpu.memory_space<vmem>>, vector<32x1024xf32>
    %c128_62 = arith.constant 128 : index
    %c0_63 = arith.constant 0 : index
    %72 = vector.load %arg12[%c128_62, %c0_63] : memref<160x1024xf32, #tpu.memory_space<vmem>>, vector<32x1024xf32>
    tpu.vector_store %arg12[%c128_62, %c0_63], %71 {strides = array<i32>} : memref<160x1024xf32, #tpu.memory_space<vmem>>, vector<32x1024xf32>,
    %c0_64 = arith.constant 0 : index
    %c0_65 = arith.constant 0 : index
    %73 = vector.load %arg4[%c0_64, %c0_65] : memref<64x160xf32, #tpu.memory_space<vmem>>, vector<64x160xf32>
    %c0_66 = arith.constant 0 : index
    %c0_67 = arith.constant 0 : index
    %74 = vector.load %arg12[%c0_66, %c0_67] : memref<160x1024xf32, #tpu.memory_space<vmem>>, vector<160x1024xf32>
    %cst_68 = arith.constant dense<0.000000e+00> : vector<64x1024xf32>
    %75 = tpu.matmul %73, %74, %cst_68 {dimension_numbers = #tpu.dot_dimension_numbers<[1], [0], [0], [1], [0, 0, 1, 1], [], []>} : vector<64x160xf32>, vector<160x1024xf32>, vector<64x1024xf32> -> vector<64x1024xf32>
    %c0_69 = arith.constant 0 : index
    %c0_70 = arith.constant 0 : index
    %76 = vector.load %arg5[%c0_69, %c0_70] : memref<64x1xf32, #tpu.memory_space<vmem>>, vector<64x1xf32>
    %77 = vector.broadcast %76 : vector<64x1xf32> to vector<64x1024xf32>
    %78 = arith.addf %75, %77 : vector<64x1024xf32>
    %cst_71 = arith.constant 0.000000e+00 : f32
    %79 = vector.broadcast %cst_71 : f32 to vector<64x1024xf32>
    %80 = arith.maximumf %78, %79 : vector<64x1024xf32>
    %81 = vector.extract_strided_slice %80 {offsets = [0, 0], sizes = [64, 128], strides = [1, 1]} : vector<64x1024xf32> to vector<64x128xf32>
    %82 = vector.extract_strided_slice %80 {offsets = [0, 128], sizes = [64, 128], strides = [1, 1]} : vector<64x1024xf32> to vector<64x128xf32>
    %83 = vector.extract_strided_slice %80 {offsets = [0, 256], sizes = [64, 128], strides = [1, 1]} : vector<64x1024xf32> to vector<64x128xf32>
    %84 = vector.extract_strided_slice %80 {offsets = [0, 384], sizes = [64, 128], strides = [1, 1]} : vector<64x1024xf32> to vector<64x128xf32>
    %85 = vector.extract_strided_slice %80 {offsets = [0, 512], sizes = [64, 128], strides = [1, 1]} : vector<64x1024xf32> to vector<64x128xf32>
    %86 = vector.extract_strided_slice %80 {offsets = [0, 640], sizes = [64, 128], strides = [1, 1]} : vector<64x1024xf32> to vector<64x128xf32>
    %87 = vector.extract_strided_slice %80 {offsets = [0, 768], sizes = [64, 128], strides = [1, 1]} : vector<64x1024xf32> to vector<64x128xf32>
    %88 = vector.extract_strided_slice %80 {offsets = [0, 896], sizes = [64, 128], strides = [1, 1]} : vector<64x1024xf32> to vector<64x128xf32>
    %89 = arith.addf %81, %82 : vector<64x128xf32>
    %90 = arith.addf %83, %84 : vector<64x128xf32>
    %91 = arith.addf %85, %86 : vector<64x128xf32>
    %92 = arith.addf %87, %88 : vector<64x128xf32>
    %93 = arith.addf %89, %90 : vector<64x128xf32>
    %94 = arith.addf %91, %92 : vector<64x128xf32>
    %95 = arith.addf %93, %94 : vector<64x128xf32>
    %cst_72 = arith.constant 1.250000e-01 : f32
    %96 = vector.broadcast %cst_72 : f32 to vector<64x128xf32>
    %97 = arith.mulf %95, %96 : vector<64x128xf32>
    %c0_73 = arith.constant 0 : index
    %c0_74 = arith.constant 0 : index
    %98 = vector.load %arg6[%c0_73, %c0_74] : memref<5x64xf32, #tpu.memory_space<vmem>>, vector<5x64xf32>
    %cst_75 = arith.constant dense<0.000000e+00> : vector<5x128xf32>
    %99 = tpu.matmul %98, %97, %cst_75 {dimension_numbers = #tpu.dot_dimension_numbers<[1], [0], [0], [1], [0, 0, 1, 1], [], []>} : vector<5x64xf32>, vector<64x128xf32>, vector<5x128xf32> -> vector<5x128xf32>
    %c0_76 = arith.constant 0 : index
    %c0_77 = arith.constant 0 : index
    %100 = vector.load %arg7[%c0_76, %c0_77] : memref<5x1xf32, #tpu.memory_space<vmem>>, vector<5x1xf32>
    %101 = vector.broadcast %100 : vector<5x1xf32> to vector<5x128xf32>
    %102 = arith.addf %99, %101 : vector<5x128xf32>
    %c0_78 = arith.constant 0 : index
    %c0_79 = arith.constant 0 : index
    %c0_80 = arith.constant 0 : index
    %103 = vector.load %arg8[%c0_78, %c0_79, %c0_80] : memref<1x5x128xf32, #tpu.memory_space<vmem>>, vector<1x5x128xf32>
    %104 = vector.shape_cast %103 : vector<1x5x128xf32> to vector<5x128xf32>
    %105 = vector.shape_cast %102 : vector<5x128xf32> to vector<1x5x128xf32>
    tpu.vector_store %arg8[%c0_78, %c0_79, %c0_80], %105 {strides = array<i32>} : memref<1x5x128xf32, #tpu.memory_space<vmem>>, vector<1x5x128xf32>,
    return
  }
  func.func @transform_0(%arg0: i32) -> (i32, i32, i32) {
    %c0_i32 = arith.constant 0 : i32
    %c0_i32_0 = arith.constant 0 : i32
    %c0_i32_1 = arith.constant 0 : i32
    return %arg0, %c0_i32, %c0_i32_0 : i32, i32, i32
  }
  func.func @transform_1(%arg0: i32) -> (i32, i32) {
    %c0_i32 = arith.constant 0 : i32
    %c0_i32_0 = arith.constant 0 : i32
    %c0_i32_1 = arith.constant 0 : i32
    return %c0_i32, %c0_i32_0 : i32, i32
  }
  func.func @transform_2(%arg0: i32) -> (i32, i32) {
    %c0_i32 = arith.constant 0 : i32
    %c0_i32_0 = arith.constant 0 : i32
    %c0_i32_1 = arith.constant 0 : i32
    return %c0_i32, %c0_i32_0 : i32, i32
  }
  func.func @transform_3(%arg0: i32) -> (i32, i32) {
    %c0_i32 = arith.constant 0 : i32
    %c0_i32_0 = arith.constant 0 : i32
    %c0_i32_1 = arith.constant 0 : i32
    return %c0_i32, %c0_i32_0 : i32, i32
  }
  func.func @transform_4(%arg0: i32) -> (i32, i32) {
    %c0_i32 = arith.constant 0 : i32
    %c0_i32_0 = arith.constant 0 : i32
    %c0_i32_1 = arith.constant 0 : i32
    return %c0_i32, %c0_i32_0 : i32, i32
  }
  func.func @transform_5(%arg0: i32) -> (i32, i32) {
    %c0_i32 = arith.constant 0 : i32
    %c0_i32_0 = arith.constant 0 : i32
    %c0_i32_1 = arith.constant 0 : i32
    return %c0_i32, %c0_i32_0 : i32, i32
  }
  func.func @transform_6(%arg0: i32) -> (i32, i32) {
    %c0_i32 = arith.constant 0 : i32
    %c0_i32_0 = arith.constant 0 : i32
    %c0_i32_1 = arith.constant 0 : i32
    return %c0_i32, %c0_i32_0 : i32, i32
  }
  func.func @transform_7(%arg0: i32) -> (i32, i32, i32) {
    %c0_i32 = arith.constant 0 : i32
    %c0_i32_0 = arith.constant 0 : i32
    %c0_i32_1 = arith.constant 0 : i32
    return %arg0, %c0_i32, %c0_i32_0 : i32, i32, i32
  }
}

</mosaic_0001>

<llo_original>
// kernel: _lambda_.1
$region0: #{_lambda_.1}
  #allocation0 [shape = 'u32[]', space=smem, size = 0x4, offset = 0x4, fixed_abs, tag = 'smem constant byte address 0x4 - core index']
  #allocation1 [shape = 'u32[144,128]{1,0:T(1,128)}', space=vmem, size = 0x12000, scoped, tag = 'internal scratch']
  #allocation2 [shape = 'f32[8,2560]{1,0:T(8,128)}', space=vmem, size = 0x14000, scoped, tag = 'scratch operand']
  #allocation3 [shape = 'f32[40,2048]{1,0:T(8,128)}', space=vmem, size = 0x50000, scoped, tag = 'scratch operand']
  #allocation4 [shape = 'f32[32,1536]{1,0:T(8,128)}', space=vmem, size = 0x30000, scoped, tag = 'scratch operand']
  #allocation5 [shape = 'f32[160,1024]{1,0:T(8,128)}', space=vmem, size = 0xa0000, scoped, tag = 'scratch operand']
  %s0 = inlined_call_operand.vmem [shape: f32[1,4,2048], index: 0, kind: input, shape index: {}]
  %s1 = inlined_call_operand.vmem [shape: f32[32,40], index: 1, kind: input, shape index: {}]
  %s2 = inlined_call_operand.vmem [shape: f32[32,1], index: 2, kind: input, shape index: {}]
  %s3 = inlined_call_operand.vmem [shape: f32[64,160], index: 3, kind: input, shape index: {}]
  %s4 = inlined_call_operand.vmem [shape: f32[64,1], index: 4, kind: input, shape index: {}]
  %s5 = inlined_call_operand.vmem [shape: f32[5,64], index: 5, kind: input, shape index: {}]
  %s6 = inlined_call_operand.vmem [shape: f32[5,1], index: 6, kind: input, shape index: {}]
  %s7 = inlined_call_operand.vmem [shape: f32[1,5,128], index: 7, kind: output, shape index: {}]
  %s8 = sld [smem:[#allocation0]]
  $region38: #{_lambda_.1} parent=0
    _
  %s10 = ssub.s32 1, %s8
  %s11 = scalar_select 0, %s10, %s8
  // Predicated region
  $region2: #{_lambda_.1} parent=0 // pred_check
    _
  $region3: #{_lambda_.1} parent=0 // pred_check_branch
    %13 = sbr.rel (0) target = $region5
  $region4: #{_lambda_.1} parent=0 // pred_region
    _
  $region5: #{_lambda_.1} parent=0 // pred_fallthru
    _
  // Predicated region
  $region6: #{_lambda_.1} parent=0 // pred_check
    _
  $region7: #{_lambda_.1} parent=0 // pred_check_branch
    %15 = sbr.rel (0) target = $region9
  $region8: #{_lambda_.1} parent=0 // pred_region
    _
  $region9: #{_lambda_.1} parent=0 // pred_fallthru
    _
  // Predicated region
  $region10: #{_lambda_.1} parent=0 // pred_check
    _
  $region11: #{_lambda_.1} parent=0 // pred_check_branch
    %17 = sbr.rel (0) target = $region13
  $region12: #{_lambda_.1} parent=0 // pred_region
    _
  $region13: #{_lambda_.1} parent=0 // pred_fallthru
    _
  // Predicated region
  $region14: #{_lambda_.1} parent=0 // pred_check
    _
  $region15: #{_lambda_.1} parent=0 // pred_check_branch
    %19 = sbr.rel (0) target = $region17
  $region16: #{_lambda_.1} parent=0 // pred_region
    _
  $region17: #{_lambda_.1} parent=0 // pred_fallthru
    _
  // Predicated region
  $region18: #{_lambda_.1} parent=0 // pred_check
    _
  $region19: #{_lambda_.1} parent=0 // pred_check_branch
    %21 = sbr.rel (0) target = $region21
  $region20: #{_lambda_.1} parent=0 // pred_region
    _
  $region21: #{_lambda_.1} parent=0 // pred_fallthru
    _
  // Predicated region
  $region22: #{_lambda_.1} parent=0 // pred_check
    _
  $region23: #{_lambda_.1} parent=0 // pred_check_branch
    %23 = sbr.rel (0) target = $region25
  $region24: #{_lambda_.1} parent=0 // pred_region
    _
  $region25: #{_lambda_.1} parent=0 // pred_fallthru
    _
  // Predicated region
  $region26: #{_lambda_.1} parent=0 // pred_check
    _
  $region27: #{_lambda_.1} parent=0 // pred_check_branch
    %25 = sbr.rel (0) target = $region29
  $region28: #{_lambda_.1} parent=0 // pred_region
    _
  $region29: #{_lambda_.1} parent=0 // pred_fallthru
    _
  %26 = vst [vmem:[#allocation2] sm:$0xf] 0.0
  %27 = vst [vmem:[#allocation2 + $0x8] sm:$0xf] 0.0
  %28 = vst [vmem:[#allocation2 + $0x90] sm:$0xf] 0.0
  %29 = vst [vmem:[#allocation2 + $0x98] sm:$0xf] 0.0
  %30 = vst [vmem:[#allocation2] sm:$0xf0] 0.0
  %31 = vst [vmem:[#allocation2 + $0x8] sm:$0xf0] 0.0
  %32 = vst [vmem:[#allocation2 + $0x10] sm:$0xf0] 0.0
  %33 = vst [vmem:[#allocation2 + $0x18] sm:$0xf0] 0.0
  %34 = vst [vmem:[#allocation2 + $0x20] sm:$0xf0] 0.0
  %35 = vst [vmem:[#allocation2 + $0x28] sm:$0xf0] 0.0
  %36 = vst [vmem:[#allocation2 + $0x30] sm:$0xf0] 0.0
  %37 = vst [vmem:[#allocation2 + $0x38] sm:$0xf0] 0.0
  %38 = vst [vmem:[#allocation2 + $0x40] sm:$0xf0] 0.0
  %39 = vst [vmem:[#allocation2 + $0x48] sm:$0xf0] 0.0
  %40 = vst [vmem:[#allocation2 + $0x50] sm:$0xf0] 0.0
  %41 = vst [vmem:[#allocation2 + $0x58] sm:$0xf0] 0.0
  %42 = vst [vmem:[#allocation2 + $0x60] sm:$0xf0] 0.0
  %43 = vst [vmem:[#allocation2 + $0x68] sm:$0xf0] 0.0
  %44 = vst [vmem:[#allocation2 + $0x70] sm:$0xf0] 0.0
  %45 = vst [vmem:[#allocation2 + $0x78] sm:$0xf0] 0.0
  %46 = vst [vmem:[#allocation2 + $0x80] sm:$0xf0] 0.0
  %47 = vst [vmem:[#allocation2 + $0x88] sm:$0xf0] 0.0
  %48 = vst [vmem:[#allocation2 + $0x90] sm:$0xf0] 0.0
  %49 = vst [vmem:[#allocation2 + $0x98] sm:$0xf0] 0.0
  %v50 = vld [vmem:[%s0] sm:$0xff]
  %v51 = vld [vmem:[%s0 + $0x8] sm:$0xff]
  %v52 = vld [vmem:[%s0 + $0x10] sm:$0xff]
  %v53 = vld [vmem:[%s0 + $0x18] sm:$0xff]
  %v54 = vld [vmem:[%s0 + $0x20] sm:$0xff]
  %v55 = vld [vmem:[%s0 + $0x28] sm:$0xff]
  %v56 = vld [vmem:[%s0 + $0x30] sm:$0xff]
  %v57 = vld [vmem:[%s0 + $0x38] sm:$0xff]
  %v66 = vcombine.high %v50, %v50
  %v67 = vcombine.high %v51, %v51
  %v68 = vcombine.high %v52, %v52
  %v69 = vcombine.high %v53, %v53
  %v70 = vcombine.high %v54, %v54
  %v71 = vcombine.high %v55, %v55
  %v72 = vcombine.high %v56, %v56
  %v73 = vcombine.high %v57, %v57
  %82 = vst [vmem:[#allocation2 + $0x10] sm:$0xf] %v50
  %83 = vst [vmem:[#allocation2 + $0x18] sm:$0xf] %v66
  %84 = vst [vmem:[#allocation2 + $0x20] sm:$0xf] %v51
  %85 = vst [vmem:[#allocation2 + $0x28] sm:$0xf] %v67
  %86 = vst [vmem:[#allocation2 + $0x30] sm:$0xf] %v52
  %87 = vst [vmem:[#allocation2 + $0x38] sm:$0xf] %v68
  %88 = vst [vmem:[#allocation2 + $0x40] sm:$0xf] %v53
  %89 = vst [vmem:[#allocation2 + $0x48] sm:$0xf] %v69
  %90 = vst [vmem:[#allocation2 + $0x50] sm:$0xf] %v54
  %91 = vst [vmem:[#allocation2 + $0x58] sm:$0xf] %v70
  %92 = vst [vmem:[#allocation2 + $0x60] sm:$0xf] %v55
  %93 = vst [vmem:[#allocation2 + $0x68] sm:$0xf] %v71
  %94 = vst [vmem:[#allocation2 + $0x70] sm:$0xf] %v56
  %95 = vst [vmem:[#allocation2 + $0x78] sm:$0xf] %v72
  %96 = vst [vmem:[#allocation2 + $0x80] sm:$0xf] %v57
  %97 = vst [vmem:[#allocation2 + $0x88] sm:$0xf] %v73
  %v98 = vld [vmem:[#allocation2] sm:$0xff]
  %v99 = vld [vmem:[#allocation2 + $0x8] sm:$0xff]
  %v100 = vld [vmem:[#allocation2 + $0x10] sm:$0xff]
  %v101 = vld [vmem:[#allocation2 + $0x18] sm:$0xff]
  %v102 = vld [vmem:[#allocation2 + $0x20] sm:$0xff]
  %v103 = vld [vmem:[#allocation2 + $0x28] sm:$0xff]
  %v104 = vld [vmem:[#allocation2 + $0x30] sm:$0xff]
  %v105 = vld [vmem:[#allocation2 + $0x38] sm:$0xff]
  %v106 = vld [vmem:[#allocation2 + $0x40] sm:$0xff]
  %v107 = vld [vmem:[#allocation2 + $0x48] sm:$0xff]
  %v108 = vld [vmem:[#allocation2 + $0x50] sm:$0xff]
  %v109 = vld [vmem:[#allocation2 + $0x58] sm:$0xff]
  %v110 = vld [vmem:[#allocation2 + $0x60] sm:$0xff]
  %v111 = vld [vmem:[#allocation2 + $0x68] sm:$0xff]
  %v112 = vld [vmem:[#allocation2 + $0x70] sm:$0xff]
  %v113 = vld [vmem:[#allocation2 + $0x78] sm:$0xff]
  %114 = vst [vmem:[#allocation3] sm:$0xff] %v98
  %115 = vst [vmem:[#allocation3 + $0x8] sm:$0xff] %v99
  %116 = vst [vmem:[#allocation3 + $0x10] sm:$0xff] %v100
  %117 = vst [vmem:[#allocation3 + $0x18] sm:$0xff] %v101
  %118 = vst [vmem:[#allocation3 + $0x20] sm:$0xff] %v102
  %119 = vst [vmem:[#allocation3 + $0x28] sm:$0xff] %v103
  %120 = vst [vmem:[#allocation3 + $0x30] sm:$0xff] %v104
  %121 = vst [vmem:[#allocation3 + $0x38] sm:$0xff] %v105
  %122 = vst [vmem:[#allocation3 + $0x40] sm:$0xff] %v106
  %123 = vst [vmem:[#allocation3 + $0x48] sm:$0xff] %v107
  %124 = vst [vmem:[#allocation3 + $0x50] sm:$0xff] %v108
  %125 = vst [vmem:[#allocation3 + $0x58] sm:$0xff] %v109
  %126 = vst [vmem:[#allocation3 + $0x60] sm:$0xff] %v110
  %127 = vst [vmem:[#allocation3 + $0x68] sm:$0xff] %v111
  %128 = vst [vmem:[#allocation3 + $0x70] sm:$0xff] %v112
  %129 = vst [vmem:[#allocation3 + $0x78] sm:$0xff] %v113
  %v130 = vld [vmem:[#allocation2 + $0x8] sm:$0xff]
  %v131 = vld [vmem:[#allocation2 + $0x10] sm:$0xff]
  %v132 = vld [vmem:[#allocation2 + $0x18] sm:$0xff]
  %v133 = vld [vmem:[#allocation2 + $0x20] sm:$0xff]
  %v134 = vld [vmem:[#allocation2 + $0x28] sm:$0xff]
  %v135 = vld [vmem:[#allocation2 + $0x30] sm:$0xff]
  %v136 = vld [vmem:[#allocation2 + $0x38] sm:$0xff]
  %v137 = vld [vmem:[#allocation2 + $0x40] sm:$0xff]
  %v138 = vld [vmem:[#allocation2 + $0x48] sm:$0xff]
  %v139 = vld [vmem:[#allocation2 + $0x50] sm:$0xff]
  %v140 = vld [vmem:[#allocation2 + $0x58] sm:$0xff]
  %v141 = vld [vmem:[#allocation2 + $0x60] sm:$0xff]
  %v142 = vld [vmem:[#allocation2 + $0x68] sm:$0xff]
  %v143 = vld [vmem:[#allocation2 + $0x70] sm:$0xff]
  %v144 = vld [vmem:[#allocation2 + $0x78] sm:$0xff]
  %v145 = vld [vmem:[#allocation2 + $0x80] sm:$0xff]
  %146 = vst [vmem:[#allocation3 + $0x80] sm:$0xff] %v130
  %147 = vst [vmem:[#allocation3 + $0x88] sm:$0xff] %v131
  %148 = vst [vmem:[#allocation3 + $0x90] sm:$0xff] %v132
  %149 = vst [vmem:[#allocation3 + $0x98] sm:$0xff] %v133
  %150 = vst [vmem:[#allocation3 + $0xa0] sm:$0xff] %v134
  %151 = vst [vmem:[#allocation3 + $0xa8] sm:$0xff] %v135
  %152 = vst [vmem:[#allocation3 + $0xb0] sm:$0xff] %v136
  %153 = vst [vmem:[#allocation3 + $0xb8] sm:$0xff] %v137
  %154 = vst [vmem:[#allocation3 + $0xc0] sm:$0xff] %v138
  %155 = vst [vmem:[#allocation3 + $0xc8] sm:$0xff] %v139
  %156 = vst [vmem:[#allocation3 + $0xd0] sm:$0xff] %v140
  %157 = vst [vmem:[#allocation3 + $0xd8] sm:$0xff] %v141
  %158 = vst [vmem:[#allocation3 + $0xe0] sm:$0xff] %v142
  %159 = vst [vmem:[#allocation3 + $0xe8] sm:$0xff] %v143
  %160 = vst [vmem:[#allocation3 + $0xf0] sm:$0xff] %v144
  %161 = vst [vmem:[#allocation3 + $0xf8] sm:$0xff] %v145
  %v162 = vld [vmem:[#allocation2 + $0x10] sm:$0xff]
  %v163 = vld [vmem:[#allocation2 + $0x18] sm:$0xff]
  %v164 = vld [vmem:[#allocation2 + $0x20] sm:$0xff]
  %v165 = vld [vmem:[#allocation2 + $0x28] sm:$0xff]
  %v166 = vld [vmem:[#allocation2 + $0x30] sm:$0xff]
  %v167 = vld [vmem:[#allocation2 + $0x38] sm:$0xff]
  %v168 = vld [vmem:[#allocation2 + $0x40] sm:$0xff]
  %v169 = vld [vmem:[#allocation2 + $0x48] sm:$0xff]
  %v170 = vld [vmem:[#allocation2 + $0x50] sm:$0xff]
  %v171 = vld [vmem:[#allocation2 + $0x58] sm:$0xff]
  %v172 = vld [vmem:[#allocation2 + $0x60] sm:$0xff]
  %v173 = vld [vmem:[#allocation2 + $0x68] sm:$0xff]
  %v174 = vld [vmem:[#allocation2 + $0x70] sm:$0xff]
  %v175 = vld [vmem:[#allocation2 + $0x78] sm:$0xff]
  %v176 = vld [vmem:[#allocation2 + $0x80] sm:$0xff]
  %v177 = vld [vmem:[#allocation2 + $0x88] sm:$0xff]
  %178 = vst [vmem:[#allocation3 + $0x100] sm:$0xff] %v162
  %179 = vst [vmem:[#allocation3 + $0x108] sm:$0xff] %v163
  %180 = vst [vmem:[#allocation3 + $0x110] sm:$0xff] %v164
  %181 = vst [vmem:[#allocation3 + $0x118] sm:$0xff] %v165
  %182 = vst [vmem:[#allocation3 + $0x120] sm:$0xff] %v166
  %183 = vst [vmem:[#allocation3 + $0x128] sm:$0xff] %v167
  %184 = vst [vmem:[#allocation3 + $0x130] sm:$0xff] %v168
  %185 = vst [vmem:[#allocation3 + $0x138] sm:$0xff] %v169
  %186 = vst [vmem:[#allocation3 + $0x140] sm:$0xff] %v170
  %187 = vst [vmem:[#allocation3 + $0x148] sm:$0xff] %v171
  %188 = vst [vmem:[#allocation3 + $0x150] sm:$0xff] %v172
  %189 = vst [vmem:[#allocation3 + $0x158] sm:$0xff] %v173
  %190 = vst [vmem:[#allocation3 + $0x160] sm:$0xff] %v174
  %191 = vst [vmem:[#allocation3 + $0x168] sm:$0xff] %v175
  %192 = vst [vmem:[#allocation3 + $0x170] sm:$0xff] %v176
  %193 = vst [vmem:[#allocation3 + $0x178] sm:$0xff] %v177
  %v194 = vld [vmem:[#allocation2 + $0x18] sm:$0xff]
  %v195 = vld [vmem:[#allocation2 + $0x20] sm:$0xff]
  %v196 = vld [vmem:[#allocation2 + $0x28] sm:$0xff]
  %v197 = vld [vmem:[#allocation2 + $0x30] sm:$0xff]
  %v198 = vld [vmem:[#allocation2 + $0x38] sm:$0xff]
  %v199 = vld [vmem:[#allocation2 + $0x40] sm:$0xff]
  %v200 = vld [vmem:[#allocation2 + $0x48] sm:$0xff]
  %v201 = vld [vmem:[#allocation2 + $0x50] sm:$0xff]
  %v202 = vld [vmem:[#allocation2 + $0x58] sm:$0xff]
  %v203 = vld [vmem:[#allocation2 + $0x60] sm:$0xff]
  %v204 = vld [vmem:[#allocation2 + $0x68] sm:$0xff]
  %v205 = vld [vmem:[#allocation2 + $0x70] sm:$0xff]
  %v206 = vld [vmem:[#allocation2 + $0x78] sm:$0xff]
  %v207 = vld [vmem:[#allocation2 + $0x80] sm:$0xff]
  %v208 = vld [vmem:[#allocation2 + $0x88] sm:$0xff]
  %v209 = vld [vmem:[#allocation2 + $0x90] sm:$0xff]
  %210 = vst [vmem:[#allocation3 + $0x180] sm:$0xff] %v194
  %211 = vst [vmem:[#allocation3 + $0x188] sm:$0xff] %v195
  %212 = vst [vmem:[#allocation3 + $0x190] sm:$0xff] %v196
  %213 = vst [vmem:[#allocation3 + $0x198] sm:$0xff] %v197
  %214 = vst [vmem:[#allocation3 + $0x1a0] sm:$0xff] %v198
  %215 = vst [vmem:[#allocation3 + $0x1a8] sm:$0xff] %v199
  %216 = vst [vmem:[#allocation3 + $0x1b0] sm:$0xff] %v200
  %217 = vst [vmem:[#allocation3 + $0x1b8] sm:$0xff] %v201
  %218 = vst [vmem:[#allocation3 + $0x1c0] sm:$0xff] %v202
  %219 = vst [vmem:[#allocation3 + $0x1c8] sm:$0xff] %v203
  %220 = vst [vmem:[#allocation3 + $0x1d0] sm:$0xff] %v204
  %221 = vst [vmem:[#allocation3 + $0x1d8] sm:$0xff] %v205
  %222 = vst [vmem:[#allocation3 + $0x1e0] sm:$0xff] %v206
  %223 = vst [vmem:[#allocation3 + $0x1e8] sm:$0xff] %v207
  %224 = vst [vmem:[#allocation3 + $0x1f0] sm:$0xff] %v208
  %225 = vst [vmem:[#allocation3 + $0x1f8] sm:$0xff] %v209
  %v226 = vld [vmem:[#allocation2 + $0x20] sm:$0xff]
  %v227 = vld [vmem:[#allocation2 + $0x28] sm:$0xff]
  %v228 = vld [vmem:[#allocation2 + $0x30] sm:$0xff]
  %v229 = vld [vmem:[#allocation2 + $0x38] sm:$0xff]
  %v230 = vld [vmem:[#allocation2 + $0x40] sm:$0xff]
  %v231 = vld [vmem:[#allocation2 + $0x48] sm:$0xff]
  %v232 = vld [vmem:[#allocation2 + $0x50] sm:$0xff]
  %v233 = vld [vmem:[#allocation2 + $0x58] sm:$0xff]
  %v234 = vld [vmem:[#allocation2 + $0x60] sm:$0xff]
  %v235 = vld [vmem:[#allocation2 + $0x68] sm:$0xff]
  %v236 = vld [vmem:[#allocation2 + $0x70] sm:$0xff]
  %v237 = vld [vmem:[#allocation2 + $0x78] sm:$0xff]
  %v238 = vld [vmem:[#allocation2 + $0x80] sm:$0xff]
  %v239 = vld [vmem:[#allocation2 + $0x88] sm:$0xff]
  %v240 = vld [vmem:[#allocation2 + $0x90] sm:$0xff]
  %v241 = vld [vmem:[#allocation2 + $0x98] sm:$0xff]
  %242 = vst [vmem:[#allocation3 + $0x200] sm:$0xff] %v226
  %243 = vst [vmem:[#allocation3 + $0x208] sm:$0xff] %v227
  %244 = vst [vmem:[#allocation3 + $0x210] sm:$0xff] %v228
  %245 = vst [vmem:[#allocation3 + $0x218] sm:$0xff] %v229
  %246 = vst [vmem:[#allocation3 + $0x220] sm:$0xff] %v230
  %247 = vst [vmem:[#allocation3 + $0x228] sm:$0xff] %v231
  %248 = vst [vmem:[#allocation3 + $0x230] sm:$0xff] %v232
  %249 = vst [vmem:[#allocation3 + $0x238] sm:$0xff] %v233
  %250 = vst [vmem:[#allocation3 + $0x240] sm:$0xff] %v234
  %251 = vst [vmem:[#allocation3 + $0x248] sm:$0xff] %v235
  %252 = vst [vmem:[#allocation3 + $0x250] sm:$0xff] %v236
  %253 = vst [vmem:[#allocation3 + $0x258] sm:$0xff] %v237
  %254 = vst [vmem:[#allocation3 + $0x260] sm:$0xff] %v238
  %255 = vst [vmem:[#allocation3 + $0x268] sm:$0xff] %v239
  %256 = vst [vmem:[#allocation3 + $0x270] sm:$0xff] %v240
  %257 = vst [vmem:[#allocation3 + $0x278] sm:$0xff] %v241
  %v258 = vld [vmem:[%s1] sm:$0xff]
  %v259 = vld [vmem:[%s1 + $0x8] sm:$0xff]
  %v260 = vld [vmem:[%s1 + $0x10] sm:$0xff]
  %v261 = vld [vmem:[%s1 + $0x18] sm:$0xff]
  %v262 = vld [vmem:[#allocation3] sm:$0xff]
  %v263 = vld [vmem:[#allocation3 + $0x8] sm:$0xff]
  %v264 = vld [vmem:[#allocation3 + $0x10] sm:$0xff]
  %v265 = vld [vmem:[#allocation3 + $0x18] sm:$0xff]
  %v266 = vld [vmem:[#allocation3 + $0x20] sm:$0xff]
  %v267 = vld [vmem:[#allocation3 + $0x28] sm:$0xff]
  %v268 = vld [vmem:[#allocation3 + $0x30] sm:$0xff]
  %v269 = vld [vmem:[#allocation3 + $0x38] sm:$0xff]
  %v270 = vld [vmem:[#allocation3 + $0x40] sm:$0xff]
  %v271 = vld [vmem:[#allocation3 + $0x48] sm:$0xff]
  %v272 = vld [vmem:[#allocation3 + $0x50] sm:$0xff]
  %v273 = vld [vmem:[#allocation3 + $0x58] sm:$0xff]
  %v274 = vld [vmem:[#allocation3 + $0x60] sm:$0xff]
  %v275 = vld [vmem:[#allocation3 + $0x68] sm:$0xff]
  %v276 = vld [vmem:[#allocation3 + $0x70] sm:$0xff]
  %v277 = vld [vmem:[#allocation3 + $0x78] sm:$0xff]
  %v278 = vld [vmem:[#allocation3 + $0x80] sm:$0xff]
  %v279 = vld [vmem:[#allocation3 + $0x88] sm:$0xff]
  %v280 = vld [vmem:[#allocation3 + $0x90] sm:$0xff]
  %v281 = vld [vmem:[#allocation3 + $0x98] sm:$0xff]
  %v282 = vld [vmem:[#allocation3 + $0xa0] sm:$0xff]
  %v283 = vld [vmem:[#allocation3 + $0xa8] sm:$0xff]
  %v284 = vld [vmem:[#allocation3 + $0xb0] sm:$0xff]
  %v285 = vld [vmem:[#allocation3 + $0xb8] sm:$0xff]
  %v286 = vld [vmem:[#allocation3 + $0xc0] sm:$0xff]
  %v287 = vld [vmem:[#allocation3 + $0xc8] sm:$0xff]
  %v288 = vld [vmem:[#allocation3 + $0xd0] sm:$0xff]
  %v289 = vld [vmem:[#allocation3 + $0xd8] sm:$0xff]
  %v290 = vld [vmem:[#allocation3 + $0xe0] sm:$0xff]
  %v291 = vld [vmem:[#allocation3 + $0xe8] sm:$0xff]
  %v292 = vld [vmem:[#allocation3 + $0xf0] sm:$0xff]
  %v293 = vld [vmem:[#allocation3 + $0xf8] sm:$0xff]
  %v294 = vld [vmem:[#allocation3 + $0x100] sm:$0xff]
  %v295 = vld [vmem:[#allocation3 + $0x108] sm:$0xff]
  %v296 = vld [vmem:[#allocation3 + $0x110] sm:$0xff]
  %v297 = vld [vmem:[#allocation3 + $0x118] sm:$0xff]
  %v298 = vld [vmem:[#allocation3 + $0x120] sm:$0xff]
  %v299 = vld [vmem:[#allocation3 + $0x128] sm:$0xff]
  %v300 = vld [vmem:[#allocation3 + $0x130] sm:$0xff]
  %v301 = vld [vmem:[#allocation3 + $0x138] sm:$0xff]
  %v302 = vld [vmem:[#allocation3 + $0x140] sm:$0xff]
  %v303 = vld [vmem:[#allocation3 + $0x148] sm:$0xff]
  %v304 = vld [vmem:[#allocation3 + $0x150] sm:$0xff]
  %v305 = vld [vmem:[#allocation3 + $0x158] sm:$0xff]
  %v306 = vld [vmem:[#allocation3 + $0x160] sm:$0xff]
  %v307 = vld [vmem:[#allocation3 + $0x168] sm:$0xff]
  %v308 = vld [vmem:[#allocation3 + $0x170] sm:$0xff]
  %v309 = vld [vmem:[#allocation3 + $0x178] sm:$0xff]
  %v310 = vld [vmem:[#allocation3 + $0x180] sm:$0xff]
  %v311 = vld [vmem:[#allocation3 + $0x188] sm:$0xff]
  %v312 = vld [vmem:[#allocation3 + $0x190] sm:$0xff]
  %v313 = vld [vmem:[#allocation3 + $0x198] sm:$0xff]
  %v314 = vld [vmem:[#allocation3 + $0x1a0] sm:$0xff]
  %v315 = vld [vmem:[#allocation3 + $0x1a8] sm:$0xff]
  %v316 = vld [vmem:[#allocation3 + $0x1b0] sm:$0xff]
  %v317 = vld [vmem:[#allocation3 + $0x1b8] sm:$0xff]
  %v318 = vld [vmem:[#allocation3 + $0x1c0] sm:$0xff]
  %v319 = vld [vmem:[#allocation3 + $0x1c8] sm:$0xff]
  %v320 = vld [vmem:[#allocation3 + $0x1d0] sm:$0xff]
  %v321 = vld [vmem:[#allocation3 + $0x1d8] sm:$0xff]
  %v322 = vld [vmem:[#allocation3 + $0x1e0] sm:$0xff]
  %v323 = vld [vmem:[#allocation3 + $0x1e8] sm:$0xff]
  %v324 = vld [vmem:[#allocation3 + $0x1f0] sm:$0xff]
  %v325 = vld [vmem:[#allocation3 + $0x1f8] sm:$0xff]
  %v326 = vld [vmem:[#allocation3 + $0x200] sm:$0xff]
  %v327 = vld [vmem:[#allocation3 + $0x208] sm:$0xff]
  %v328 = vld [vmem:[#allocation3 + $0x210] sm:$0xff]
  %v329 = vld [vmem:[#allocation3 + $0x218] sm:$0xff]
  %v330 = vld [vmem:[#allocation3 + $0x220] sm:$0xff]
  %v331 = vld [vmem:[#allocation3 + $0x228] sm:$0xff]
  %v332 = vld [vmem:[#allocation3 + $0x230] sm:$0xff]
  %v333 = vld [vmem:[#allocation3 + $0x238] sm:$0xff]
  %v334 = vld [vmem:[#allocation3 + $0x240] sm:$0xff]
  %v335 = vld [vmem:[#allocation3 + $0x248] sm:$0xff]
  %v336 = vld [vmem:[#allocation3 + $0x250] sm:$0xff]
  %v337 = vld [vmem:[#allocation3 + $0x258] sm:$0xff]
  %v338 = vld [vmem:[#allocation3 + $0x260] sm:$0xff]
  %v339 = vld [vmem:[#allocation3 + $0x268] sm:$0xff]
  %v340 = vld [vmem:[#allocation3 + $0x270] sm:$0xff]
  %v341 = vld [vmem:[#allocation3 + $0x278] sm:$0xff]
  %v342 = vld [vmem:[%s2] sm:$0xff]
  %v343 = vld [vmem:[%s2 + $0x8] sm:$0xff]
  %v344 = vld [vmem:[%s2 + $0x10] sm:$0xff]
  %v345 = vld [vmem:[%s2 + $0x18] sm:$0xff]
  %347 = vset.pattern.permute.xlu0 0
  %348 = vperm.xlu0 %347, %v342
  %v349 = vpop.permute.xlu0 %348
  %352 = vset.pattern.permute.xlu0 0
  %353 = vperm.xlu0 %352, %v343
  %v354 = vpop.permute.xlu0 %353
  %357 = vset.pattern.permute.xlu0 0
  %358 = vperm.xlu0 %357, %v344
  %v359 = vpop.permute.xlu0 %358
  %362 = vset.pattern.permute.xlu0 0
  %363 = vperm.xlu0 %362, %v345
  %v364 = vpop.permute.xlu0 %363
  %vm366 = vcmask 326656
  %v368 = vsel %vm366, %v258, 0
  %v371 = vsel %vm366, %v259, 0
  %v374 = vsel %vm366, %v260, 0
  %v377 = vsel %vm366, %v261, 0
  %379 = vmatprep.subr.mxu0 0.0
  %380 = vmatpush1.msra.mxu0 0.0
  %381 = vmatprep.subr.mxu0 0.0
  %382 = vmatpush1.msra.mxu0 0.0
  %383 = vmatprep.subr.mxu0 0.0
  %384 = vmatpush1.msra.mxu0 0.0
  %385 = vmatprep.subr.mxu0 0.0
  %386 = vmatpush1.msra.mxu0 0.0
  %387 = vmatprep.subr.mxu0 0.0
  %388 = vmatpush1.msra.mxu0 0.0
  %389 = vmatprep.subr.mxu0 0.0
  %390 = vmatpush1.msra.mxu0 0.0
  %391 = vmatprep.subr.mxu0 0.0
  %392 = vmatpush1.msra.mxu0 0.0
  %393 = vmatprep.subr.mxu0 0.0
  %394 = vmatpush1.msra.mxu0 0.0
  %395 = vmatprep.subr.mxu0 0.0
  %396 = vmatpush1.msra.mxu0 0.0
  %397 = vmatprep.subr.mxu0 0.0
  %398 = vmatpush1.msra.mxu0 0.0
  %399 = vmatprep.subr.mxu0 0.0
  %400 = vmatpush1.msra.mxu0 0.0
  %401 = vmatprep.subr.mxu0 %v327
  %402 = vmatpush1.msra.mxu0 %v326
  %403 = vmatprep.subr.mxu0 %v311
  %404 = vmatpush1.msra.mxu0 %v310
  %405 = vmatprep.subr.mxu0 %v295
  %406 = vmatpush1.msra.mxu0 %v294
  %407 = vmatprep.subr.mxu0 %v279
  %408 = vmatpush1.msra.mxu0 %v278
  %409 = vmatprep.subr.mxu0 %v263
  %410 = vmatpush1.msra.mxu0 %v262
  %411 = vmatprep.subr.mxu0 0.0
  %412 = vmatpush2.msra.mxu0 0.0
  %413 = vmatprep.subr.mxu0 0.0
  %414 = vmatpush2.msra.mxu0 0.0
  %415 = vmatprep.subr.mxu0 0.0
  %416 = vmatpush2.msra.mxu0 0.0
  %417 = vmatprep.subr.mxu0 0.0
  %418 = vmatpush2.msra.mxu0 0.0
  %419 = vmatprep.subr.mxu0 0.0
  %420 = vmatpush2.msra.mxu0 0.0
  %421 = vmatprep.subr.mxu0 0.0
  %422 = vmatpush2.msra.mxu0 0.0
  %423 = vmatprep.subr.mxu0 0.0
  %424 = vmatpush2.msra.mxu0 0.0
  %425 = vmatprep.subr.mxu0 0.0
  %426 = vmatpush2.msra.mxu0 0.0
  %427 = vmatprep.subr.mxu0 0.0
  %428 = vmatpush2.msra.mxu0 0.0
  %429 = vmatprep.subr.mxu0 0.0
  %430 = vmatpush2.msra.mxu0 0.0
  %431 = vmatprep.subr.mxu0 0.0
  %432 = vmatpush2.msra.mxu0 0.0
  %433 = vmatprep.subr.mxu0 0.0
  %434 = vmatpush2.msra.mxu0 0.0
  %435 = vmatprep.subr.mxu0 0.0
  %436 = vmatpush2.msra.mxu0 0.0
  %437 = vmatprep.subr.mxu0 0.0
  %438 = vmatpush2.msra.mxu0 0.0
  %439 = vmatprep.subr.mxu0 0.0
  %440 = vmatpush2.msra.mxu0 0.0
  %441 = vmatprep.subr.mxu0 0.0
  %442 = vmatpush2.msra.mxu0 0.0
  %443 = vmatprep.mubr.f32.mxu0 0.0
  %444 = vmatmul.mubr.f32.gmra.mxu0 %v368
  %v445 = vpop.f32.mrf.mxu0
  %v446 = vadd.f32 %v349, %v445
  %v447 = vpop.f32.mrf.mxu0
  %v448 = vadd.f32 %v349, %v447
  %449 = vmatprep.mubr.f32.mxu0 0.0
  %450 = vmatmul.mubr.f32.gmra.mxu0 %v371
  %v451 = vpop.f32.mrf.mxu0
  %v452 = vadd.f32 %v354, %v451
  %v453 = vpop.f32.mrf.mxu0
  %v454 = vadd.f32 %v354, %v453
  %455 = vmatprep.mubr.f32.mxu0 0.0
  %456 = vmatmul.mubr.f32.gmra.mxu0 %v374
  %v457 = vpop.f32.mrf.mxu0
  %v458 = vadd.f32 %v359, %v457
  %v459 = vpop.f32.mrf.mxu0
  %v460 = vadd.f32 %v359, %v459
  %461 = vmatprep.mubr.f32.mxu0 0.0
  %462 = vmatmul.mubr.f32.gmra.mxu0 %v377
  %v463 = vpop.f32.mrf.mxu0
  %v464 = vadd.f32 %v364, %v463
  %v465 = vpop.f32.mrf.mxu0
  %v466 = vadd.f32 %v364, %v465
  %467 = vdwg.mxu0
  %468 = vmatprep.subr.mxu0 0.0
  %469 = vmatpush1.msra.mxu0 0.0
  %470 = vmatprep.subr.mxu0 0.0
  %471 = vmatpush1.msra.mxu0 0.0
  %472 = vmatprep.subr.mxu0 0.0
  %473 = vmatpush1.msra.mxu0 0.0
  %474 = vmatprep.subr.mxu0 0.0
  %475 = vmatpush1.msra.mxu0 0.0
  %476 = vmatprep.subr.mxu0 0.0
  %477 = vmatpush1.msra.mxu0 0.0
  %478 = vmatprep.subr.mxu0 0.0
  %479 = vmatpush1.msra.mxu0 0.0
  %480 = vmatprep.subr.mxu0 0.0
  %481 = vmatpush1.msra.mxu0 0.0
  %482 = vmatprep.subr.mxu0 0.0
  %483 = vmatpush1.msra.mxu0 0.0
  %484 = vmatprep.subr.mxu0 0.0
  %485 = vmatpush1.msra.mxu0 0.0
  %486 = vmatprep.subr.mxu0 0.0
  %487 = vmatpush1.msra.mxu0 0.0
  %488 = vmatprep.subr.mxu0 0.0
  %489 = vmatpush1.msra.mxu0 0.0
  %490 = vmatprep.subr.mxu0 %v329
  %491 = vmatpush1.msra.mxu0 %v328
  %492 = vmatprep.subr.mxu0 %v313
  %493 = vmatpush1.msra.mxu0 %v312
  %494 = vmatprep.subr.mxu0 %v297
  %495 = vmatpush1.msra.mxu0 %v296
  %496 = vmatprep.subr.mxu0 %v281
  %497 = vmatpush1.msra.mxu0 %v280
  %498 = vmatprep.subr.mxu0 %v265
  %499 = vmatpush1.msra.mxu0 %v264
  %500 = vmatprep.subr.mxu0 0.0
  %501 = vmatpush2.msra.mxu0 0.0
  %502 = vmatprep.subr.mxu0 0.0
  %503 = vmatpush2.msra.mxu0 0.0
  %504 = vmatprep.subr.mxu0 0.0
  %505 = vmatpush2.msra.mxu0 0.0
  %506 = vmatprep.subr.mxu0 0.0
  %507 = vmatpush2.msra.mxu0 0.0
  %508 = vmatprep.subr.mxu0 0.0
  %509 = vmatpush2.msra.mxu0 0.0
  %510 = vmatprep.subr.mxu0 0.0
  %511 = vmatpush2.msra.mxu0 0.0
  %512 = vmatprep.subr.mxu0 0.0
  %513 = vmatpush2.msra.mxu0 0.0
  %514 = vmatprep.subr.mxu0 0.0
  %515 = vmatpush2.msra.mxu0 0.0
  %516 = vmatprep.subr.mxu0 0.0
  %517 = vmatpush2.msra.mxu0 0.0
  %518 = vmatprep.subr.mxu0 0.0
  %519 = vmatpush2.msra.mxu0 0.0
  %520 = vmatprep.subr.mxu0 0.0
  %521 = vmatpush2.msra.mxu0 0.0
  %522 = vmatprep.subr.mxu0 0.0
  %523 = vmatpush2.msra.mxu0 0.0
  %524 = vmatprep.subr.mxu0 0.0
  %525 = vmatpush2.msra.mxu0 0.0
  %526 = vmatprep.subr.mxu0 0.0
  %527 = vmatpush2.msra.mxu0 0.0
  %528 = vmatprep.subr.mxu0 0.0
  %529 = vmatpush2.msra.mxu0 0.0
  %530 = vmatprep.subr.mxu0 0.0
  %531 = vmatpush2.msra.mxu0 0.0
  %532 = vmatprep.mubr.f32.mxu0 0.0
  %533 = vmatmul.mubr.f32.gmra.mxu0 %v368
  %v534 = vpop.f32.mrf.mxu0
  %v535 = vadd.f32 %v349, %v534
  %v536 = vpop.f32.mrf.mxu0
  %v537 = vadd.f32 %v349, %v536
  %538 = vmatprep.mubr.f32.mxu0 0.0
  %539 = vmatmul.mubr.f32.gmra.mxu0 %v371
  %v540 = vpop.f32.mrf.mxu0
  %v541 = vadd.f32 %v354, %v540
  %v542 = vpop.f32.mrf.mxu0
  %v543 = vadd.f32 %v354, %v542
  %544 = vmatprep.mubr.f32.mxu0 0.0
  %545 = vmatmul.mubr.f32.gmra.mxu0 %v374
  %v546 = vpop.f32.mrf.mxu0
  %v547 = vadd.f32 %v359, %v546
  %v548 = vpop.f32.mrf.mxu0
  %v549 = vadd.f32 %v359, %v548
  %550 = vmatprep.mubr.f32.mxu0 0.0
  %551 = vmatmul.mubr.f32.gmra.mxu0 %v377
  %v552 = vpop.f32.mrf.mxu0
  %v553 = vadd.f32 %v364, %v552
  %v554 = vpop.f32.mrf.mxu0
  %v555 = vadd.f32 %v364, %v554
  %556 = vdwg.mxu0
  %557 = vmatprep.subr.mxu0 0.0
  %558 = vmatpush1.msra.mxu0 0.0
  %559 = vmatprep.subr.mxu0 0.0
  %560 = vmatpush1.msra.mxu0 0.0
  %561 = vmatprep.subr.mxu0 0.0
  %562 = vmatpush1.msra.mxu0 0.0
  %563 = vmatprep.subr.mxu0 0.0
  %564 = vmatpush1.msra.mxu0 0.0
  %565 = vmatprep.subr.mxu0 0.0
  %566 = vmatpush1.msra.mxu0 0.0
  %567 = vmatprep.subr.mxu0 0.0
  %568 = vmatpush1.msra.mxu0 0.0
  %569 = vmatprep.subr.mxu0 0.0
  %570 = vmatpush1.msra.mxu0 0.0
  %571 = vmatprep.subr.mxu0 0.0
  %572 = vmatpush1.msra.mxu0 0.0
  %573 = vmatprep.subr.mxu0 0.0
  %574 = vmatpush1.msra.mxu0 0.0
  %575 = vmatprep.subr.mxu0 0.0
  %576 = vmatpush1.msra.mxu0 0.0
  %577 = vmatprep.subr.mxu0 0.0
  %578 = vmatpush1.msra.mxu0 0.0
  %579 = vmatprep.subr.mxu0 %v331
  %580 = vmatpush1.msra.mxu0 %v330
  %581 = vmatprep.subr.mxu0 %v315
  %582 = vmatpush1.msra.mxu0 %v314
  %583 = vmatprep.subr.mxu0 %v299
  %584 = vmatpush1.msra.mxu0 %v298
  %585 = vmatprep.subr.mxu0 %v283
  %586 = vmatpush1.msra.mxu0 %v282
  %587 = vmatprep.subr.mxu0 %v267
  %588 = vmatpush1.msra.mxu0 %v266
  %589 = vmatprep.subr.mxu0 0.0
  %590 = vmatpush2.msra.mxu0 0.0
  %591 = vmatprep.subr.mxu0 0.0
  %592 = vmatpush2.msra.mxu0 0.0
  %593 = vmatprep.subr.mxu0 0.0
  %594 = vmatpush2.msra.mxu0 0.0
  %595 = vmatprep.subr.mxu0 0.0
  %596 = vmatpush2.msra.mxu0 0.0
  %597 = vmatprep.subr.mxu0 0.0
  %598 = vmatpush2.msra.mxu0 0.0
  %599 = vmatprep.subr.mxu0 0.0
  %600 = vmatpush2.msra.mxu0 0.0
  %601 = vmatprep.subr.mxu0 0.0
  %602 = vmatpush2.msra.mxu0 0.0
  %603 = vmatprep.subr.mxu0 0.0
  %604 = vmatpush2.msra.mxu0 0.0
  %605 = vmatprep.subr.mxu0 0.0
  %606 = vmatpush2.msra.mxu0 0.0
  %607 = vmatprep.subr.mxu0 0.0
  %608 = vmatpush2.msra.mxu0 0.0
  %609 = vmatprep.subr.mxu0 0.0
  %610 = vmatpush2.msra.mxu0 0.0
  %611 = vmatprep.subr.mxu0 0.0
  %612 = vmatpush2.msra.mxu0 0.0
  %613 = vmatprep.subr.mxu0 0.0
  %614 = vmatpush2.msra.mxu0 0.0
  %615 = vmatprep.subr.mxu0 0.0
  %616 = vmatpush2.msra.mxu0 0.0
  %617 = vmatprep.subr.mxu0 0.0
  %618 = vmatpush2.msra.mxu0 0.0
  %619 = vmatprep.subr.mxu0 0.0
  %620 = vmatpush2.msra.mxu0 0.0
  %621 = vmatprep.mubr.f32.mxu0 0.0
  %622 = vmatmul.mubr.f32.gmra.mxu0 %v368
  %v623 = vpop.f32.mrf.mxu0
  %v624 = vadd.f32 %v349, %v623
  %v625 = vpop.f32.mrf.mxu0
  %v626 = vadd.f32 %v349, %v625
  %627 = vmatprep.mubr.f32.mxu0 0.0
  %628 = vmatmul.mubr.f32.gmra.mxu0 %v371
  %v629 = vpop.f32.mrf.mxu0
  %v630 = vadd.f32 %v354, %v629
  %v631 = vpop.f32.mrf.mxu0
  %v632 = vadd.f32 %v354, %v631
  %633 = vmatprep.mubr.f32.mxu0 0.0
  %634 = vmatmul.mubr.f32.gmra.mxu0 %v374
  %v635 = vpop.f32.mrf.mxu0
  %v636 = vadd.f32 %v359, %v635
  %v637 = vpop.f32.mrf.mxu0
  %v638 = vadd.f32 %v359, %v637
  %639 = vmatprep.mubr.f32.mxu0 0.0
  %640 = vmatmul.mubr.f32.gmra.mxu0 %v377
  %v641 = vpop.f32.mrf.mxu0
  %v642 = vadd.f32 %v364, %v641
  %v643 = vpop.f32.mrf.mxu0
  %v644 = vadd.f32 %v364, %v643
  %645 = vdwg.mxu0
  %646 = vmatprep.subr.mxu0 0.0
  %647 = vmatpush1.msra.mxu0 0.0
  %648 = vmatprep.subr.mxu0 0.0
  %649 = vmatpush1.msra.mxu0 0.0
  %650 = vmatprep.subr.mxu0 0.0
  %651 = vmatpush1.msra.mxu0 0.0
  %652 = vmatprep.subr.mxu0 0.0
  %653 = vmatpush1.msra.mxu0 0.0
  %654 = vmatprep.subr.mxu0 0.0
  %655 = vmatpush1.msra.mxu0 0.0
  %656 = vmatprep.subr.mxu0 0.0
  %657 = vmatpush1.msra.mxu0 0.0
  %658 = vmatprep.subr.mxu0 0.0
  %659 = vmatpush1.msra.mxu0 0.0
  %660 = vmatprep.subr.mxu0 0.0
  %661 = vmatpush1.msra.mxu0 0.0
  %662 = vmatprep.subr.mxu0 0.0
  %663 = vmatpush1.msra.mxu0 0.0
  %664 = vmatprep.subr.mxu0 0.0
  %665 = vmatpush1.msra.mxu0 0.0
  %666 = vmatprep.subr.mxu0 0.0
  %667 = vmatpush1.msra.mxu0 0.0
  %668 = vmatprep.subr.mxu0 %v333
  %669 = vmatpush1.msra.mxu0 %v332
  %670 = vmatprep.subr.mxu0 %v317
  %671 = vmatpush1.msra.mxu0 %v316
  %672 = vmatprep.subr.mxu0 %v301
  %673 = vmatpush1.msra.mxu0 %v300
  %674 = vmatprep.subr.mxu0 %v285
  %675 = vmatpush1.msra.mxu0 %v284
  %676 = vmatprep.subr.mxu0 %v269
  %677 = vmatpush1.msra.mxu0 %v268
  %678 = vmatprep.subr.mxu0 0.0
  %679 = vmatpush2.msra.mxu0 0.0
  %680 = vmatprep.subr.mxu0 0.0
  %681 = vmatpush2.msra.mxu0 0.0
  %682 = vmatprep.subr.mxu0 0.0
  %683 = vmatpush2.msra.mxu0 0.0
  %684 = vmatprep.subr.mxu0 0.0
  %685 = vmatpush2.msra.mxu0 0.0
  %686 = vmatprep.subr.mxu0 0.0
  %687 = vmatpush2.msra.mxu0 0.0
  %688 = vmatprep.subr.mxu0 0.0
  %689 = vmatpush2.msra.mxu0 0.0
  %690 = vmatprep.subr.mxu0 0.0
  %691 = vmatpush2.msra.mxu0 0.0
  %692 = vmatprep.subr.mxu0 0.0
  %693 = vmatpush2.msra.mxu0 0.0
  %694 = vmatprep.subr.mxu0 0.0
  %695 = vmatpush2.msra.mxu0 0.0
  %696 = vmatprep.subr.mxu0 0.0
  %697 = vmatpush2.msra.mxu0 0.0
  %698 = vmatprep.subr.mxu0 0.0
  %699 = vmatpush2.msra.mxu0 0.0
  %700 = vmatprep.subr.mxu0 0.0
  %701 = vmatpush2.msra.mxu0 0.0
  %702 = vmatprep.subr.mxu0 0.0
  %703 = vmatpush2.msra.mxu0 0.0
  %704 = vmatprep.subr.mxu0 0.0
  %705 = vmatpush2.msra.mxu0 0.0
  %706 = vmatprep.subr.mxu0 0.0
  %707 = vmatpush2.msra.mxu0 0.0
  %708 = vmatprep.subr.mxu0 0.0
  %709 = vmatpush2.msra.mxu0 0.0
  %710 = vmatprep.mubr.f32.mxu0 0.0
  %711 = vmatmul.mubr.f32.gmra.mxu0 %v368
  %v712 = vpop.f32.mrf.mxu0
  %v713 = vadd.f32 %v349, %v712
  %v714 = vpop.f32.mrf.mxu0
  %v715 = vadd.f32 %v349, %v714
  %716 = vmatprep.mubr.f32.mxu0 0.0
  %717 = vmatmul.mubr.f32.gmra.mxu0 %v371
  %v718 = vpop.f32.mrf.mxu0
  %v719 = vadd.f32 %v354, %v718
  %v720 = vpop.f32.mrf.mxu0
  %v721 = vadd.f32 %v354, %v720
  %722 = vmatprep.mubr.f32.mxu0 0.0
  %723 = vmatmul.mubr.f32.gmra.mxu0 %v374
  %v724 = vpop.f32.mrf.mxu0
  %v725 = vadd.f32 %v359, %v724
  %v726 = vpop.f32.mrf.mxu0
  %v727 = vadd.f32 %v359, %v726
  %728 = vmatprep.mubr.f32.mxu0 0.0
  %729 = vmatmul.mubr.f32.gmra.mxu0 %v377
  %v730 = vpop.f32.mrf.mxu0
  %v731 = vadd.f32 %v364, %v730
  %v732 = vpop.f32.mrf.mxu0
  %v733 = vadd.f32 %v364, %v732
  %734 = vdwg.mxu0
  %735 = vmatprep.subr.mxu0 0.0
  %736 = vmatpush1.msra.mxu0 0.0
  %737 = vmatprep.subr.mxu0 0.0
  %738 = vmatpush1.msra.mxu0 0.0
  %739 = vmatprep.subr.mxu0 0.0
  %740 = vmatpush1.msra.mxu0 0.0
  %741 = vmatprep.subr.mxu0 0.0
  %742 = vmatpush1.msra.mxu0 0.0
  %743 = vmatprep.subr.mxu0 0.0
  %744 = vmatpush1.msra.mxu0 0.0
  %745 = vmatprep.subr.mxu0 0.0
  %746 = vmatpush1.msra.mxu0 0.0
  %747 = vmatprep.subr.mxu0 0.0
  %748 = vmatpush1.msra.mxu0 0.0
  %749 = vmatprep.subr.mxu0 0.0
  %750 = vmatpush1.msra.mxu0 0.0
  %751 = vmatprep.subr.mxu0 0.0
  %752 = vmatpush1.msra.mxu0 0.0
  %753 = vmatprep.subr.mxu0 0.0
  %754 = vmatpush1.msra.mxu0 0.0
  %755 = vmatprep.subr.mxu0 0.0
  %756 = vmatpush1.msra.mxu0 0.0
  %757 = vmatprep.subr.mxu0 %v335
  %758 = vmatpush1.msra.mxu0 %v334
  %759 = vmatprep.subr.mxu0 %v319
  %760 = vmatpush1.msra.mxu0 %v318
  %761 = vmatprep.subr.mxu0 %v303
  %762 = vmatpush1.msra.mxu0 %v302
  %763 = vmatprep.subr.mxu0 %v287
  %764 = vmatpush1.msra.mxu0 %v286
  %765 = vmatprep.subr.mxu0 %v271
  %766 = vmatpush1.msra.mxu0 %v270
  %767 = vmatprep.subr.mxu0 0.0
  %768 = vmatpush2.msra.mxu0 0.0
  %769 = vmatprep.subr.mxu0 0.0
  %770 = vmatpush2.msra.mxu0 0.0
  %771 = vmatprep.subr.mxu0 0.0
  %772 = vmatpush2.msra.mxu0 0.0
  %773 = vmatprep.subr.mxu0 0.0
  %774 = vmatpush2.msra.mxu0 0.0
  %775 = vmatprep.subr.mxu0 0.0
  %776 = vmatpush2.msra.mxu0 0.0
  %777 = vmatprep.subr.mxu0 0.0
  %778 = vmatpush2.msra.mxu0 0.0
  %779 = vmatprep.subr.mxu0 0.0
  %780 = vmatpush2.msra.mxu0 0.0
  %781 = vmatprep.subr.mxu0 0.0
  %782 = vmatpush2.msra.mxu0 0.0
  %783 = vmatprep.subr.mxu0 0.0
  %784 = vmatpush2.msra.mxu0 0.0
  %785 = vmatprep.subr.mxu0 0.0
  %786 = vmatpush2.msra.mxu0 0.0
  %787 = vmatprep.subr.mxu0 0.0
  %788 = vmatpush2.msra.mxu0 0.0
  %789 = vmatprep.subr.mxu0 0.0
  %790 = vmatpush2.msra.mxu0 0.0
  %791 = vmatprep.subr.mxu0 0.0
  %792 = vmatpush2.msra.mxu0 0.0
  %793 = vmatprep.subr.mxu0 0.0
  %794 = vmatpush2.msra.mxu0 0.0
  %795 = vmatprep.subr.mxu0 0.0
  %796 = vmatpush2.msra.mxu0 0.0
  %797 = vmatprep.subr.mxu0 0.0
  %798 = vmatpush2.msra.mxu0 0.0
  %799 = vmatprep.mubr.f32.mxu0 0.0
  %800 = vmatmul.mubr.f32.gmra.mxu0 %v368
  %v801 = vpop.f32.mrf.mxu0
  %v802 = vadd.f32 %v349, %v801
  %v803 = vpop.f32.mrf.mxu0
  %v804 = vadd.f32 %v349, %v803
  %805 = vmatprep.mubr.f32.mxu0 0.0
  %806 = vmatmul.mubr.f32.gmra.mxu0 %v371
  %v807 = vpop.f32.mrf.mxu0
  %v808 = vadd.f32 %v354, %v807
  %v809 = vpop.f32.mrf.mxu0
  %v810 = vadd.f32 %v354, %v809
  %811 = vmatprep.mubr.f32.mxu0 0.0
  %812 = vmatmul.mubr.f32.gmra.mxu0 %v374
  %v813 = vpop.f32.mrf.mxu0
  %v814 = vadd.f32 %v359, %v813
  %v815 = vpop.f32.mrf.mxu0
  %v816 = vadd.f32 %v359, %v815
  %817 = vmatprep.mubr.f32.mxu0 0.0
  %818 = vmatmul.mubr.f32.gmra.mxu0 %v377
  %v819 = vpop.f32.mrf.mxu0
  %v820 = vadd.f32 %v364, %v819
  %v821 = vpop.f32.mrf.mxu0
  %v822 = vadd.f32 %v364, %v821
  %823 = vdwg.mxu0
  %824 = vmatprep.subr.mxu0 0.0
  %825 = vmatpush1.msra.mxu0 0.0
  %826 = vmatprep.subr.mxu0 0.0
  %827 = vmatpush1.msra.mxu0 0.0
  %828 = vmatprep.subr.mxu0 0.0
  %829 = vmatpush1.msra.mxu0 0.0
  %830 = vmatprep.subr.mxu0 0.0
  %831 = vmatpush1.msra.mxu0 0.0
  %832 = vmatprep.subr.mxu0 0.0
  %833 = vmatpush1.msra.mxu0 0.0
  %834 = vmatprep.subr.mxu0 0.0
  %835 = vmatpush1.msra.mxu0 0.0
  %836 = vmatprep.subr.mxu0 0.0
  %837 = vmatpush1.msra.mxu0 0.0
  %838 = vmatprep.subr.mxu0 0.0
  %839 = vmatpush1.msra.mxu0 0.0
  %840 = vmatprep.subr.mxu0 0.0
  %841 = vmatpush1.msra.mxu0 0.0
  %842 = vmatprep.subr.mxu0 0.0
  %843 = vmatpush1.msra.mxu0 0.0
  %844 = vmatprep.subr.mxu0 0.0
  %845 = vmatpush1.msra.mxu0 0.0
  %846 = vmatprep.subr.mxu0 %v337
  %847 = vmatpush1.msra.mxu0 %v336
  %848 = vmatprep.subr.mxu0 %v321
  %849 = vmatpush1.msra.mxu0 %v320
  %850 = vmatprep.subr.mxu0 %v305
  %851 = vmatpush1.msra.mxu0 %v304
  %852 = vmatprep.subr.mxu0 %v289
  %853 = vmatpush1.msra.mxu0 %v288
  %854 = vmatprep.subr.mxu0 %v273
  %855 = vmatpush1.msra.mxu0 %v272
  %856 = vmatprep.subr.mxu0 0.0
  %857 = vmatpush2.msra.mxu0 0.0
  %858 = vmatprep.subr.mxu0 0.0
  %859 = vmatpush2.msra.mxu0 0.0
  %860 = vmatprep.subr.mxu0 0.0
  %861 = vmatpush2.msra.mxu0 0.0
  %862 = vmatprep.subr.mxu0 0.0
  %863 = vmatpush2.msra.mxu0 0.0
  %864 = vmatprep.subr.mxu0 0.0
  %865 = vmatpush2.msra.mxu0 0.0
  %866 = vmatprep.subr.mxu0 0.0
  %867 = vmatpush2.msra.mxu0 0.0
  %868 = vmatprep.subr.mxu0 0.0
  %869 = vmatpush2.msra.mxu0 0.0
  %870 = vmatprep.subr.mxu0 0.0
  %871 = vmatpush2.msra.mxu0 0.0
  %872 = vmatprep.subr.mxu0 0.0
  %873 = vmatpush2.msra.mxu0 0.0
  %874 = vmatprep.subr.mxu0 0.0
  %875 = vmatpush2.msra.mxu0 0.0
  %876 = vmatprep.subr.mxu0 0.0
  %877 = vmatpush2.msra.mxu0 0.0
  %878 = vmatprep.subr.mxu0 0.0
  %879 = vmatpush2.msra.mxu0 0.0
  %880 = vmatprep.subr.mxu0 0.0
  %881 = vmatpush2.msra.mxu0 0.0
  %882 = vmatprep.subr.mxu0 0.0
  %883 = vmatpush2.msra.mxu0 0.0
  %884 = vmatprep.subr.mxu0 0.0
  %885 = vmatpush2.msra.mxu0 0.0
  %886 = vmatprep.subr.mxu0 0.0
  %887 = vmatpush2.msra.mxu0 0.0
  %888 = vmatprep.mubr.f32.mxu0 0.0
  %889 = vmatmul.mubr.f32.gmra.mxu0 %v368
  %v890 = vpop.f32.mrf.mxu0
  %v891 = vadd.f32 %v349, %v890
  %v892 = vpop.f32.mrf.mxu0
  %v893 = vadd.f32 %v349, %v892
  %894 = vmatprep.mubr.f32.mxu0 0.0
  %895 = vmatmul.mubr.f32.gmra.mxu0 %v371
  %v896 = vpop.f32.mrf.mxu0
  %v897 = vadd.f32 %v354, %v896
  %v898 = vpop.f32.mrf.mxu0
  %v899 = vadd.f32 %v354, %v898
  %900 = vmatprep.mubr.f32.mxu0 0.0
  %901 = vmatmul.mubr.f32.gmra.mxu0 %v374
  %v902 = vpop.f32.mrf.mxu0
  %v903 = vadd.f32 %v359, %v902
  %v904 = vpop.f32.mrf.mxu0
  %v905 = vadd.f32 %v359, %v904
  %906 = vmatprep.mubr.f32.mxu0 0.0
  %907 = vmatmul.mubr.f32.gmra.mxu0 %v377
  %v908 = vpop.f32.mrf.mxu0
  %v909 = vadd.f32 %v364, %v908
  %v910 = vpop.f32.mrf.mxu0
  %v911 = vadd.f32 %v364, %v910
  %912 = vdwg.mxu0
  %913 = vmatprep.subr.mxu0 0.0
  %914 = vmatpush1.msra.mxu0 0.0
  %915 = vmatprep.subr.mxu0 0.0
  %916 = vmatpush1.msra.mxu0 0.0
  %917 = vmatprep.subr.mxu0 0.0
  %918 = vmatpush1.msra.mxu0 0.0
  %919 = vmatprep.subr.mxu0 0.0
  %920 = vmatpush1.msra.mxu0 0.0
  %921 = vmatprep.subr.mxu0 0.0
  %922 = vmatpush1.msra.mxu0 0.0
  %923 = vmatprep.subr.mxu0 0.0
  %924 = vmatpush1.msra.mxu0 0.0
  %925 = vmatprep.subr.mxu0 0.0
  %926 = vmatpush1.msra.mxu0 0.0
  %927 = vmatprep.subr.mxu0 0.0
  %928 = vmatpush1.msra.mxu0 0.0
  %929 = vmatprep.subr.mxu0 0.0
  %930 = vmatpush1.msra.mxu0 0.0
  %931 = vmatprep.subr.mxu0 0.0
  %932 = vmatpush1.msra.mxu0 0.0
  %933 = vmatprep.subr.mxu0 0.0
  %934 = vmatpush1.msra.mxu0 0.0
  %935 = vmatprep.subr.mxu0 %v339
  %936 = vmatpush1.msra.mxu0 %v338
  %937 = vmatprep.subr.mxu0 %v323
  %938 = vmatpush1.msra.mxu0 %v322
  %939 = vmatprep.subr.mxu0 %v307
  %940 = vmatpush1.msra.mxu0 %v306
  %941 = vmatprep.subr.mxu0 %v291
  %942 = vmatpush1.msra.mxu0 %v290
  %943 = vmatprep.subr.mxu0 %v275
  %944 = vmatpush1.msra.mxu0 %v274
  %945 = vmatprep.subr.mxu0 0.0
  %946 = vmatpush2.msra.mxu0 0.0
  %947 = vmatprep.subr.mxu0 0.0
  %948 = vmatpush2.msra.mxu0 0.0
  %949 = vmatprep.subr.mxu0 0.0
  %950 = vmatpush2.msra.mxu0 0.0
  %951 = vmatprep.subr.mxu0 0.0
  %952 = vmatpush2.msra.mxu0 0.0
  %953 = vmatprep.subr.mxu0 0.0
  %954 = vmatpush2.msra.mxu0 0.0
  %955 = vmatprep.subr.mxu0 0.0
  %956 = vmatpush2.msra.mxu0 0.0
  %957 = vmatprep.subr.mxu0 0.0
  %958 = vmatpush2.msra.mxu0 0.0
  %959 = vmatprep.subr.mxu0 0.0
  %960 = vmatpush2.msra.mxu0 0.0
  %961 = vmatprep.subr.mxu0 0.0
  %962 = vmatpush2.msra.mxu0 0.0
  %963 = vmatprep.subr.mxu0 0.0
  %964 = vmatpush2.msra.mxu0 0.0
  %965 = vmatprep.subr.mxu0 0.0
  %966 = vmatpush2.msra.mxu0 0.0
  %967 = vmatprep.subr.mxu0 0.0
  %968 = vmatpush2.msra.mxu0 0.0
  %969 = vmatprep.subr.mxu0 0.0
  %970 = vmatpush2.msra.mxu0 0.0
  %971 = vmatprep.subr.mxu0 0.0
  %972 = vmatpush2.msra.mxu0 0.0
  %973 = vmatprep.subr.mxu0 0.0
  %974 = vmatpush2.msra.mxu0 0.0
  %975 = vmatprep.subr.mxu0 0.0
  %976 = vmatpush2.msra.mxu0 0.0
  %977 = vmatprep.mubr.f32.mxu0 0.0
  %978 = vmatmul.mubr.f32.gmra.mxu0 %v368
  %v979 = vpop.f32.mrf.mxu0
  %v980 = vadd.f32 %v349, %v979
  %v981 = vpop.f32.mrf.mxu0
  %v982 = vadd.f32 %v349, %v981
  %983 = vmatprep.mubr.f32.mxu0 0.0
  %984 = vmatmul.mubr.f32.gmra.mxu0 %v371
  %v985 = vpop.f32.mrf.mxu0
  %v986 = vadd.f32 %v354, %v985
  %v987 = vpop.f32.mrf.mxu0
  %v988 = vadd.f32 %v354, %v987
  %989 = vmatprep.mubr.f32.mxu0 0.0
  %990 = vmatmul.mubr.f32.gmra.mxu0 %v374
  %v991 = vpop.f32.mrf.mxu0
  %v992 = vadd.f32 %v359, %v991
  %v993 = vpop.f32.mrf.mxu0
  %v994 = vadd.f32 %v359, %v993
  %995 = vmatprep.mubr.f32.mxu0 0.0
  %996 = vmatmul.mubr.f32.gmra.mxu0 %v377
  %v997 = vpop.f32.mrf.mxu0
  %v998 = vadd.f32 %v364, %v997
  %v999 = vpop.f32.mrf.mxu0
  %v1000 = vadd.f32 %v364, %v999
  %1001 = vdwg.mxu0
  %1002 = vmatprep.subr.mxu0 0.0
  %1003 = vmatpush1.msra.mxu0 0.0
  %1004 = vmatprep.subr.mxu0 0.0
  %1005 = vmatpush1.msra.mxu0 0.0
  %1006 = vmatprep.subr.mxu0 0.0
  %1007 = vmatpush1.msra.mxu0 0.0
  %1008 = vmatprep.subr.mxu0 0.0
  %1009 = vmatpush1.msra.mxu0 0.0
  %1010 = vmatprep.subr.mxu0 0.0
  %1011 = vmatpush1.msra.mxu0 0.0
  %1012 = vmatprep.subr.mxu0 0.0
  %1013 = vmatpush1.msra.mxu0 0.0
  %1014 = vmatprep.subr.mxu0 0.0
  %1015 = vmatpush1.msra.mxu0 0.0
  %1016 = vmatprep.subr.mxu0 0.0
  %1017 = vmatpush1.msra.mxu0 0.0
  %1018 = vmatprep.subr.mxu0 0.0
  %1019 = vmatpush1.msra.mxu0 0.0
  %1020 = vmatprep.subr.mxu0 0.0
  %1021 = vmatpush1.msra.mxu0 0.0
  %1022 = vmatprep.subr.mxu0 0.0
  %1023 = vmatpush1.msra.mxu0 0.0
  %1024 = vmatprep.subr.mxu0 %v341
  %1025 = vmatpush1.msra.mxu0 %v340
  %1026 = vmatprep.subr.mxu0 %v325
  %1027 = vmatpush1.msra.mxu0 %v324
  %1028 = vmatprep.subr.mxu0 %v309
  %1029 = vmatpush1.msra.mxu0 %v308
  %1030 = vmatprep.subr.mxu0 %v293
  %1031 = vmatpush1.msra.mxu0 %v292
  %1032 = vmatprep.subr.mxu0 %v277
  %1033 = vmatpush1.msra.mxu0 %v276
  %1034 = vmatprep.subr.mxu0 0.0
  %1035 = vmatpush2.msra.mxu0 0.0
  %1036 = vmatprep.subr.mxu0 0.0
  %1037 = vmatpush2.msra.mxu0 0.0
  %1038 = vmatprep.subr.mxu0 0.0
  %1039 = vmatpush2.msra.mxu0 0.0
  %1040 = vmatprep.subr.mxu0 0.0
  %1041 = vmatpush2.msra.mxu0 0.0
  %1042 = vmatprep.subr.mxu0 0.0
  %1043 = vmatpush2.msra.mxu0 0.0
  %1044 = vmatprep.subr.mxu0 0.0
  %1045 = vmatpush2.msra.mxu0 0.0
  %1046 = vmatprep.subr.mxu0 0.0
  %1047 = vmatpush2.msra.mxu0 0.0
  %1048 = vmatprep.subr.mxu0 0.0
  %1049 = vmatpush2.msra.mxu0 0.0
  %1050 = vmatprep.subr.mxu0 0.0
  %1051 = vmatpush2.msra.mxu0 0.0
  %1052 = vmatprep.subr.mxu0 0.0
  %1053 = vmatpush2.msra.mxu0 0.0
  %1054 = vmatprep.subr.mxu0 0.0
  %1055 = vmatpush2.msra.mxu0 0.0
  %1056 = vmatprep.subr.mxu0 0.0
  %1057 = vmatpush2.msra.mxu0 0.0
  %1058 = vmatprep.subr.mxu0 0.0
  %1059 = vmatpush2.msra.mxu0 0.0
  %1060 = vmatprep.subr.mxu0 0.0
  %1061 = vmatpush2.msra.mxu0 0.0
  %1062 = vmatprep.subr.mxu0 0.0
  %1063 = vmatpush2.msra.mxu0 0.0
  %1064 = vmatprep.subr.mxu0 0.0
  %1065 = vmatpush2.msra.mxu0 0.0
  %1066 = vmatprep.mubr.f32.mxu0 0.0
  %1067 = vmatmul.mubr.f32.gmra.mxu0 %v368
  %v1068 = vpop.f32.mrf.mxu0
  %v1069 = vadd.f32 %v349, %v1068
  %v1070 = vpop.f32.mrf.mxu0
  %v1071 = vadd.f32 %v349, %v1070
  %1072 = vmatprep.mubr.f32.mxu0 0.0
  %1073 = vmatmul.mubr.f32.gmra.mxu0 %v371
  %v1074 = vpop.f32.mrf.mxu0
  %v1075 = vadd.f32 %v354, %v1074
  %v1076 = vpop.f32.mrf.mxu0
  %v1077 = vadd.f32 %v354, %v1076
  %1078 = vmatprep.mubr.f32.mxu0 0.0
  %1079 = vmatmul.mubr.f32.gmra.mxu0 %v374
  %v1080 = vpop.f32.mrf.mxu0
  %v1081 = vadd.f32 %v359, %v1080
  %v1082 = vpop.f32.mrf.mxu0
  %v1083 = vadd.f32 %v359, %v1082
  %1084 = vmatprep.mubr.f32.mxu0 0.0
  %1085 = vmatmul.mubr.f32.gmra.mxu0 %v377
  %v1086 = vpop.f32.mrf.mxu0
  %v1087 = vadd.f32 %v364, %v1086
  %v1088 = vpop.f32.mrf.mxu0
  %v1089 = vadd.f32 %v364, %v1088
  %1090 = vdwg.mxu0
  %v1091 = vmax.f32 %v446, 0.0
  %v1092 = vmax.f32 %v448, 0.0
  %v1093 = vmax.f32 %v535, 0.0
  %v1094 = vmax.f32 %v537, 0.0
  %v1095 = vmax.f32 %v624, 0.0
  %v1096 = vmax.f32 %v626, 0.0
  %v1097 = vmax.f32 %v713, 0.0
  %v1098 = vmax.f32 %v715, 0.0
  %v1099 = vmax.f32 %v802, 0.0
  %v1100 = vmax.f32 %v804, 0.0
  %v1101 = vmax.f32 %v891, 0.0
  %v1102 = vmax.f32 %v893, 0.0
  %v1103 = vmax.f32 %v980, 0.0
  %v1104 = vmax.f32 %v982, 0.0
  %v1105 = vmax.f32 %v1069, 0.0
  %v1106 = vmax.f32 %v1071, 0.0
  %v1107 = vmax.f32 %v452, 0.0
  %v1108 = vmax.f32 %v454, 0.0
  %v1109 = vmax.f32 %v541, 0.0
  %v1110 = vmax.f32 %v543, 0.0
  %v1111 = vmax.f32 %v630, 0.0
  %v1112 = vmax.f32 %v632, 0.0
  %v1113 = vmax.f32 %v719, 0.0
  %v1114 = vmax.f32 %v721, 0.0
  %v1115 = vmax.f32 %v808, 0.0
  %v1116 = vmax.f32 %v810, 0.0
  %v1117 = vmax.f32 %v897, 0.0
  %v1118 = vmax.f32 %v899, 0.0
  %v1119 = vmax.f32 %v986, 0.0
  %v1120 = vmax.f32 %v988, 0.0
  %v1121 = vmax.f32 %v1075, 0.0
  %v1122 = vmax.f32 %v1077, 0.0
  %v1123 = vmax.f32 %v458, 0.0
  %v1124 = vmax.f32 %v460, 0.0
  %v1125 = vmax.f32 %v547, 0.0
  %v1126 = vmax.f32 %v549, 0.0
  %v1127 = vmax.f32 %v636, 0.0
  %v1128 = vmax.f32 %v638, 0.0
  %v1129 = vmax.f32 %v725, 0.0
  %v1130 = vmax.f32 %v727, 0.0
  %v1131 = vmax.f32 %v814, 0.0
  %v1132 = vmax.f32 %v816, 0.0
  %v1133 = vmax.f32 %v903, 0.0
  %v1134 = vmax.f32 %v905, 0.0
  %v1135 = vmax.f32 %v992, 0.0
  %v1136 = vmax.f32 %v994, 0.0
  %v1137 = vmax.f32 %v1081, 0.0
  %v1138 = vmax.f32 %v1083, 0.0
  %v1139 = vmax.f32 %v464, 0.0
  %v1140 = vmax.f32 %v466, 0.0
  %v1141 = vmax.f32 %v553, 0.0
  %v1142 = vmax.f32 %v555, 0.0
  %v1143 = vmax.f32 %v642, 0.0
  %v1144 = vmax.f32 %v644, 0.0
  %v1145 = vmax.f32 %v731, 0.0
  %v1146 = vmax.f32 %v733, 0.0
  %v1147 = vmax.f32 %v820, 0.0
  %v1148 = vmax.f32 %v822, 0.0
  %v1149 = vmax.f32 %v909, 0.0
  %v1150 = vmax.f32 %v911, 0.0
  %v1151 = vmax.f32 %v998, 0.0
  %v1152 = vmax.f32 %v1000, 0.0
  %v1153 = vmax.f32 %v1087, 0.0
  %v1154 = vmax.f32 %v1089, 0.0
  %1155 = vst [vmem:[#allocation4] sm:$0xff] 0.0
  %1156 = vst [vmem:[#allocation4 + $0x8] sm:$0xff] 0.0
  %1157 = vst [vmem:[#allocation4 + $0x60] sm:$0xff] 0.0
  %1158 = vst [vmem:[#allocation4 + $0x68] sm:$0xff] 0.0
  %1159 = vst [vmem:[#allocation4 + $0xc0] sm:$0xff] 0.0
  %1160 = vst [vmem:[#allocation4 + $0xc8] sm:$0xff] 0.0
  %1161 = vst [vmem:[#allocation4 + $0x120] sm:$0xff] 0.0
  %1162 = vst [vmem:[#allocation4 + $0x128] sm:$0xff] 0.0
  %1163 = vst [vmem:[#allocation4 + $0x50] sm:$0xff] 0.0
  %1164 = vst [vmem:[#allocation4 + $0x58] sm:$0xff] 0.0
  %1165 = vst [vmem:[#allocation4 + $0xb0] sm:$0xff] 0.0
  %1166 = vst [vmem:[#allocation4 + $0xb8] sm:$0xff] 0.0
  %1167 = vst [vmem:[#allocation4 + $0x110] sm:$0xff] 0.0
  %1168 = vst [vmem:[#allocation4 + $0x118] sm:$0xff] 0.0
  %1169 = vst [vmem:[#allocation4 + $0x170] sm:$0xff] 0.0
  %1170 = vst [vmem:[#allocation4 + $0x178] sm:$0xff] 0.0
  %v1171 = vmax.f32 %v1091, %v1092
  %v1172 = vmax.f32 %v1107, %v1108
  %v1173 = vmax.f32 %v1123, %v1124
  %v1174 = vmax.f32 %v1139, %v1140
  %1175 = vst [vmem:[#allocation4 + $0x10] sm:$0xff] %v1171
  %1176 = vst [vmem:[#allocation4 + $0x70] sm:$0xff] %v1172
  %1177 = vst [vmem:[#allocation4 + $0xd0] sm:$0xff] %v1173
  %1178 = vst [vmem:[#allocation4 + $0x130] sm:$0xff] %v1174
  %v1179 = vmax.f32 %v1093, %v1094
  %v1180 = vmax.f32 %v1109, %v1110
  %v1181 = vmax.f32 %v1125, %v1126
  %v1182 = vmax.f32 %v1141, %v1142
  %1183 = vst [vmem:[#allocation4 + $0x18] sm:$0xff] %v1179
  %1184 = vst [vmem:[#allocation4 + $0x78] sm:$0xff] %v1180
  %1185 = vst [vmem:[#allocation4 + $0xd8] sm:$0xff] %v1181
  %1186 = vst [vmem:[#allocation4 + $0x138] sm:$0xff] %v1182
  %v1187 = vmax.f32 %v1095, %v1096
  %v1188 = vmax.f32 %v1111, %v1112
  %v1189 = vmax.f32 %v1127, %v1128
  %v1190 = vmax.f32 %v1143, %v1144
  %1191 = vst [vmem:[#allocation4 + $0x20] sm:$0xff] %v1187
  %1192 = vst [vmem:[#allocation4 + $0x80] sm:$0xff] %v1188
  %1193 = vst [vmem:[#allocation4 + $0xe0] sm:$0xff] %v1189
  %1194 = vst [vmem:[#allocation4 + $0x140] sm:$0xff] %v1190
  %v1195 = vmax.f32 %v1097, %v1098
  %v1196 = vmax.f32 %v1113, %v1114
  %v1197 = vmax.f32 %v1129, %v1130
  %v1198 = vmax.f32 %v1145, %v1146
  %1199 = vst [vmem:[#allocation4 + $0x28] sm:$0xff] %v1195
  %1200 = vst [vmem:[#allocation4 + $0x88] sm:$0xff] %v1196
  %1201 = vst [vmem:[#allocation4 + $0xe8] sm:$0xff] %v1197
  %1202 = vst [vmem:[#allocation4 + $0x148] sm:$0xff] %v1198
  %v1203 = vmax.f32 %v1099, %v1100
  %v1204 = vmax.f32 %v1115, %v1116
  %v1205 = vmax.f32 %v1131, %v1132
  %v1206 = vmax.f32 %v1147, %v1148
  %1207 = vst [vmem:[#allocation4 + $0x30] sm:$0xff] %v1203
  %1208 = vst [vmem:[#allocation4 + $0x90] sm:$0xff] %v1204
  %1209 = vst [vmem:[#allocation4 + $0xf0] sm:$0xff] %v1205
  %1210 = vst [vmem:[#allocation4 + $0x150] sm:$0xff] %v1206
  %v1211 = vmax.f32 %v1101, %v1102
  %v1212 = vmax.f32 %v1117, %v1118
  %v1213 = vmax.f32 %v1133, %v1134
  %v1214 = vmax.f32 %v1149, %v1150
  %1215 = vst [vmem:[#allocation4 + $0x38] sm:$0xff] %v1211
  %1216 = vst [vmem:[#allocation4 + $0x98] sm:$0xff] %v1212
  %1217 = vst [vmem:[#allocation4 + $0xf8] sm:$0xff] %v1213
  %1218 = vst [vmem:[#allocation4 + $0x158] sm:$0xff] %v1214
  %v1219 = vmax.f32 %v1103, %v1104
  %v1220 = vmax.f32 %v1119, %v1120
  %v1221 = vmax.f32 %v1135, %v1136
  %v1222 = vmax.f32 %v1151, %v1152
  %1223 = vst [vmem:[#allocation4 + $0x40] sm:$0xff] %v1219
  %1224 = vst [vmem:[#allocation4 + $0xa0] sm:$0xff] %v1220
  %1225 = vst [vmem:[#allocation4 + $0x100] sm:$0xff] %v1221
  %1226 = vst [vmem:[#allocation4 + $0x160] sm:$0xff] %v1222
  %v1227 = vmax.f32 %v1105, %v1106
  %v1228 = vmax.f32 %v1121, %v1122
  %v1229 = vmax.f32 %v1137, %v1138
  %v1230 = vmax.f32 %v1153, %v1154
  %1231 = vst [vmem:[#allocation4 + $0x48] sm:$0xff] %v1227
  %1232 = vst [vmem:[#allocation4 + $0xa8] sm:$0xff] %v1228
  %1233 = vst [vmem:[#allocation4 + $0x108] sm:$0xff] %v1229
  %1234 = vst [vmem:[#allocation4 + $0x168] sm:$0xff] %v1230
  %v1235 = vld [vmem:[#allocation4] sm:$0xff]
  %v1236 = vld [vmem:[#allocation4 + $0x8] sm:$0xff]
  %v1237 = vld [vmem:[#allocation4 + $0x10] sm:$0xff]
  %v1238 = vld [vmem:[#allocation4 + $0x18] sm:$0xff]
  %v1239 = vld [vmem:[#allocation4 + $0x20] sm:$0xff]
  %v1240 = vld [vmem:[#allocation4 + $0x28] sm:$0xff]
  %v1241 = vld [vmem:[#allocation4 + $0x30] sm:$0xff]
  %v1242 = vld [vmem:[#allocation4 + $0x38] sm:$0xff]
  %v1243 = vld [vmem:[#allocation4 + $0x60] sm:$0xff]
  %v1244 = vld [vmem:[#allocation4 + $0x68] sm:$0xff]
  %v1245 = vld [vmem:[#allocation4 + $0x70] sm:$0xff]
  %v1246 = vld [vmem:[#allocation4 + $0x78] sm:$0xff]
  %v1247 = vld [vmem:[#allocation4 + $0x80] sm:$0xff]
  %v1248 = vld [vmem:[#allocation4 + $0x88] sm:$0xff]
  %v1249 = vld [vmem:[#allocation4 + $0x90] sm:$0xff]
  %v1250 = vld [vmem:[#allocation4 + $0x98] sm:$0xff]
  %v1251 = vld [vmem:[#allocation4 + $0xc0] sm:$0xff]
  %v1252 = vld [vmem:[#allocation4 + $0xc8] sm:$0xff]
  %v1253 = vld [vmem:[#allocation4 + $0xd0] sm:$0xff]
  %v1254 = vld [vmem:[#allocation4 + $0xd8] sm:$0xff]
  %v1255 = vld [vmem:[#allocation4 + $0xe0] sm:$0xff]
  %v1256 = vld [vmem:[#allocation4 + $0xe8] sm:$0xff]
  %v1257 = vld [vmem:[#allocation4 + $0xf0] sm:$0xff]
  %v1258 = vld [vmem:[#allocation4 + $0xf8] sm:$0xff]
  %v1259 = vld [vmem:[#allocation4 + $0x120] sm:$0xff]
  %v1260 = vld [vmem:[#allocation4 + $0x128] sm:$0xff]
  %v1261 = vld [vmem:[#allocation4 + $0x130] sm:$0xff]
  %v1262 = vld [vmem:[#allocation4 + $0x138] sm:$0xff]
  %v1263 = vld [vmem:[#allocation4 + $0x140] sm:$0xff]
  %v1264 = vld [vmem:[#allocation4 + $0x148] sm:$0xff]
  %v1265 = vld [vmem:[#allocation4 + $0x150] sm:$0xff]
  %v1266 = vld [vmem:[#allocation4 + $0x158] sm:$0xff]
  %1267 = vst [vmem:[#allocation5] sm:$0xff] %v1235
  %1268 = vst [vmem:[#allocation5 + $0x8] sm:$0xff] %v1236
  %1269 = vst [vmem:[#allocation5 + $0x10] sm:$0xff] %v1237
  %1270 = vst [vmem:[#allocation5 + $0x18] sm:$0xff] %v1238
  %1271 = vst [vmem:[#allocation5 + $0x20] sm:$0xff] %v1239
  %1272 = vst [vmem:[#allocation5 + $0x28] sm:$0xff] %v1240
  %1273 = vst [vmem:[#allocation5 + $0x30] sm:$0xff] %v1241
  %1274 = vst [vmem:[#allocation5 + $0x38] sm:$0xff] %v1242
  %1275 = vst [vmem:[#allocation5 + $0x40] sm:$0xff] %v1243
  %1276 = vst [vmem:[#allocation5 + $0x48] sm:$0xff] %v1244
  %1277 = vst [vmem:[#allocation5 + $0x50] sm:$0xff] %v1245
  %1278 = vst [vmem:[#allocation5 + $0x58] sm:$0xff] %v1246
  %1279 = vst [vmem:[#allocation5 + $0x60] sm:$0xff] %v1247
  %1280 = vst [vmem:[#allocation5 + $0x68] sm:$0xff] %v1248
  %1281 = vst [vmem:[#allocation5 + $0x70] sm:$0xff] %v1249
  %1282 = vst [vmem:[#allocation5 + $0x78] sm:$0xff] %v1250
  %1283 = vst [vmem:[#allocation5 + $0x80] sm:$0xff] %v1251
  %1284 = vst [vmem:[#allocation5 + $0x88] sm:$0xff] %v1252
  %1285 = vst [vmem:[#allocation5 + $0x90] sm:$0xff] %v1253
  %1286 = vst [vmem:[#allocation5 + $0x98] sm:$0xff] %v1254
  %1287 = vst [vmem:[#allocation5 + $0xa0] sm:$0xff] %v1255
  %1288 = vst [vmem:[#allocation5 + $0xa8] sm:$0xff] %v1256
  %1289 = vst [vmem:[#allocation5 + $0xb0] sm:$0xff] %v1257
  %1290 = vst [vmem:[#allocation5 + $0xb8] sm:$0xff] %v1258
  %1291 = vst [vmem:[#allocation5 + $0xc0] sm:$0xff] %v1259
  %1292 = vst [vmem:[#allocation5 + $0xc8] sm:$0xff] %v1260
  %1293 = vst [vmem:[#allocation5 + $0xd0] sm:$0xff] %v1261
  %1294 = vst [vmem:[#allocation5 + $0xd8] sm:$0xff] %v1262
  %1295 = vst [vmem:[#allocation5 + $0xe0] sm:$0xff] %v1263
  %1296 = vst [vmem:[#allocation5 + $0xe8] sm:$0xff] %v1264
  %1297 = vst [vmem:[#allocation5 + $0xf0] sm:$0xff] %v1265
  %1298 = vst [vmem:[#allocation5 + $0xf8] sm:$0xff] %v1266
  %v1299 = vld [vmem:[#allocation4 + $0x8] sm:$0xff]
  %v1300 = vld [vmem:[#allocation4 + $0x10] sm:$0xff]
  %v1301 = vld [vmem:[#allocation4 + $0x18] sm:$0xff]
  %v1302 = vld [vmem:[#allocation4 + $0x20] sm:$0xff]
  %v1303 = vld [vmem:[#allocation4 + $0x28] sm:$0xff]
  %v1304 = vld [vmem:[#allocation4 + $0x30] sm:$0xff]
  %v1305 = vld [vmem:[#allocation4 + $0x38] sm:$0xff]
  %v1306 = vld [vmem:[#allocation4 + $0x40] sm:$0xff]
  %v1307 = vld [vmem:[#allocation4 + $0x68] sm:$0xff]
  %v1308 = vld [vmem:[#allocation4 + $0x70] sm:$0xff]
  %v1309 = vld [vmem:[#allocation4 + $0x78] sm:$0xff]
  %v1310 = vld [vmem:[#allocation4 + $0x80] sm:$0xff]
  %v1311 = vld [vmem:[#allocation4 + $0x88] sm:$0xff]
  %v1312 = vld [vmem:[#allocation4 + $0x90] sm:$0xff]
  %v1313 = vld [vmem:[#allocation4 + $0x98] sm:$0xff]
  %v1314 = vld [vmem:[#allocation4 + $0xa0] sm:$0xff]
  %v1315 = vld [vmem:[#allocation4 + $0xc8] sm:$0xff]
  %v1316 = vld [vmem:[#allocation4 + $0xd0] sm:$0xff]
  %v1317 = vld [vmem:[#allocation4 + $0xd8] sm:$0xff]
  %v1318 = vld [vmem:[#allocation4 + $0xe0] sm:$0xff]
  %v1319 = vld [vmem:[#allocation4 + $0xe8] sm:$0xff]
  %v1320 = vld [vmem:[#allocation4 + $0xf0] sm:$0xff]
  %v1321 = vld [vmem:[#allocation4 + $0xf8] sm:$0xff]
  %v1322 = vld [vmem:[#allocation4 + $0x100] sm:$0xff]
  %v1323 = vld [vmem:[#allocation4 + $0x128] sm:$0xff]
  %v1324 = vld [vmem:[#allocation4 + $0x130] sm:$0xff]
  %v1325 = vld [vmem:[#allocation4 + $0x138] sm:$0xff]
  %v1326 = vld [vmem:[#allocation4 + $0x140] sm:$0xff]
  %v1327 = vld [vmem:[#allocation4 + $0x148] sm:$0xff]
  %v1328 = vld [vmem:[#allocation4 + $0x150] sm:$0xff]
  %v1329 = vld [vmem:[#allocation4 + $0x158] sm:$0xff]
  %v1330 = vld [vmem:[#allocation4 + $0x160] sm:$0xff]
  %1331 = vst [vmem:[#allocation5 + $0x100] sm:$0xff] %v1299
  %1332 = vst [vmem:[#allocation5 + $0x108] sm:$0xff] %v1300
  %1333 = vst [vmem:[#allocation5 + $0x110] sm:$0xff] %v1301
  %1334 = vst [vmem:[#allocation5 + $0x118] sm:$0xff] %v1302
  %1335 = vst [vmem:[#allocation5 + $0x120] sm:$0xff] %v1303
  %1336 = vst [vmem:[#allocation5 + $0x128] sm:$0xff] %v1304
  %1337 = vst [vmem:[#allocation5 + $0x130] sm:$0xff] %v1305
  %1338 = vst [vmem:[#allocation5 + $0x138] sm:$0xff] %v1306
  %1339 = vst [vmem:[#allocation5 + $0x140] sm:$0xff] %v1307
  %1340 = vst [vmem:[#allocation5 + $0x148] sm:$0xff] %v1308
  %1341 = vst [vmem:[#allocation5 + $0x150] sm:$0xff] %v1309
  %1342 = vst [vmem:[#allocation5 + $0x158] sm:$0xff] %v1310
  %1343 = vst [vmem:[#allocation5 + $0x160] sm:$0xff] %v1311
  %1344 = vst [vmem:[#allocation5 + $0x168] sm:$0xff] %v1312
  %1345 = vst [vmem:[#allocation5 + $0x170] sm:$0xff] %v1313
  %1346 = vst [vmem:[#allocation5 + $0x178] sm:$0xff] %v1314
  %1347 = vst [vmem:[#allocation5 + $0x180] sm:$0xff] %v1315
  %1348 = vst [vmem:[#allocation5 + $0x188] sm:$0xff] %v1316
  %1349 = vst [vmem:[#allocation5 + $0x190] sm:$0xff] %v1317
  %1350 = vst [vmem:[#allocation5 + $0x198] sm:$0xff] %v1318
  %1351 = vst [vmem:[#allocation5 + $0x1a0] sm:$0xff] %v1319
  %1352 = vst [vmem:[#allocation5 + $0x1a8] sm:$0xff] %v1320
  %1353 = vst [vmem:[#allocation5 + $0x1b0] sm:$0xff] %v1321
  %1354 = vst [vmem:[#allocation5 + $0x1b8] sm:$0xff] %v1322
  %1355 = vst [vmem:[#allocation5 + $0x1c0] sm:$0xff] %v1323
  %1356 = vst [vmem:[#allocation5 + $0x1c8] sm:$0xff] %v1324
  %1357 = vst [vmem:[#allocation5 + $0x1d0] sm:$0xff] %v1325
  %1358 = vst [vmem:[#allocation5 + $0x1d8] sm:$0xff] %v1326
  %1359 = vst [vmem:[#allocation5 + $0x1e0] sm:$0xff] %v1327
  %1360 = vst [vmem:[#allocation5 + $0x1e8] sm:$0xff] %v1328
  %1361 = vst [vmem:[#allocation5 + $0x1f0] sm:$0xff] %v1329
  %1362 = vst [vmem:[#allocation5 + $0x1f8] sm:$0xff] %v1330
  %v1363 = vld [vmem:[#allocation4 + $0x10] sm:$0xff]
  %v1364 = vld [vmem:[#allocation4 + $0x18] sm:$0xff]
  %v1365 = vld [vmem:[#allocation4 + $0x20] sm:$0xff]
  %v1366 = vld [vmem:[#allocation4 + $0x28] sm:$0xff]
  %v1367 = vld [vmem:[#allocation4 + $0x30] sm:$0xff]
  %v1368 = vld [vmem:[#allocation4 + $0x38] sm:$0xff]
  %v1369 = vld [vmem:[#allocation4 + $0x40] sm:$0xff]
  %v1370 = vld [vmem:[#allocation4 + $0x48] sm:$0xff]
  %v1371 = vld [vmem:[#allocation4 + $0x70] sm:$0xff]
  %v1372 = vld [vmem:[#allocation4 + $0x78] sm:$0xff]
  %v1373 = vld [vmem:[#allocation4 + $0x80] sm:$0xff]
  %v1374 = vld [vmem:[#allocation4 + $0x88] sm:$0xff]
  %v1375 = vld [vmem:[#allocation4 + $0x90] sm:$0xff]
  %v1376 = vld [vmem:[#allocation4 + $0x98] sm:$0xff]
  %v1377 = vld [vmem:[#allocation4 + $0xa0] sm:$0xff]
  %v1378 = vld [vmem:[#allocation4 + $0xa8] sm:$0xff]
  %v1379 = vld [vmem:[#allocation4 + $0xd0] sm:$0xff]
  %v1380 = vld [vmem:[#allocation4 + $0xd8] sm:$0xff]
  %v1381 = vld [vmem:[#allocation4 + $0xe0] sm:$0xff]
  %v1382 = vld [vmem:[#allocation4 + $0xe8] sm:$0xff]
  %v1383 = vld [vmem:[#allocation4 + $0xf0] sm:$0xff]
  %v1384 = vld [vmem:[#allocation4 + $0xf8] sm:$0xff]
  %v1385 = vld [vmem:[#allocation4 + $0x100] sm:$0xff]
  %v1386 = vld [vmem:[#allocation4 + $0x108] sm:$0xff]
  %v1387 = vld [vmem:[#allocation4 + $0x130] sm:$0xff]
  %v1388 = vld [vmem:[#allocation4 + $0x138] sm:$0xff]
  %v1389 = vld [vmem:[#allocation4 + $0x140] sm:$0xff]
  %v1390 = vld [vmem:[#allocation4 + $0x148] sm:$0xff]
  %v1391 = vld [vmem:[#allocation4 + $0x150] sm:$0xff]
  %v1392 = vld [vmem:[#allocation4 + $0x158] sm:$0xff]
  %v1393 = vld [vmem:[#allocation4 + $0x160] sm:$0xff]
  %v1394 = vld [vmem:[#allocation4 + $0x168] sm:$0xff]
  %1395 = vst [vmem:[#allocation5 + $0x200] sm:$0xff] %v1363
  %1396 = vst [vmem:[#allocation5 + $0x208] sm:$0xff] %v1364
  %1397 = vst [vmem:[#allocation5 + $0x210] sm:$0xff] %v1365
  %1398 = vst [vmem:[#allocation5 + $0x218] sm:$0xff] %v1366
  %1399 = vst [vmem:[#allocation5 + $0x220] sm:$0xff] %v1367
  %1400 = vst [vmem:[#allocation5 + $0x228] sm:$0xff] %v1368
  %1401 = vst [vmem:[#allocation5 + $0x230] sm:$0xff] %v1369
  %1402 = vst [vmem:[#allocation5 + $0x238] sm:$0xff] %v1370
  %1403 = vst [vmem:[#allocation5 + $0x240] sm:$0xff] %v1371
  %1404 = vst [vmem:[#allocation5 + $0x248] sm:$0xff] %v1372
  %1405 = vst [vmem:[#allocation5 + $0x250] sm:$0xff] %v1373
  %1406 = vst [vmem:[#allocation5 + $0x258] sm:$0xff] %v1374
  %1407 = vst [vmem:[#allocation5 + $0x260] sm:$0xff] %v1375
  %1408 = vst [vmem:[#allocation5 + $0x268] sm:$0xff] %v1376
  %1409 = vst [vmem:[#allocation5 + $0x270] sm:$0xff] %v1377
  %1410 = vst [vmem:[#allocation5 + $0x278] sm:$0xff] %v1378
  %1411 = vst [vmem:[#allocation5 + $0x280] sm:$0xff] %v1379
  %1412 = vst [vmem:[#allocation5 + $0x288] sm:$0xff] %v1380
  %1413 = vst [vmem:[#allocation5 + $0x290] sm:$0xff] %v1381
  %1414 = vst [vmem:[#allocation5 + $0x298] sm:$0xff] %v1382
  %1415 = vst [vmem:[#allocation5 + $0x2a0] sm:$0xff] %v1383
  %1416 = vst [vmem:[#allocation5 + $0x2a8] sm:$0xff] %v1384
  %1417 = vst [vmem:[#allocation5 + $0x2b0] sm:$0xff] %v1385
  %1418 = vst [vmem:[#allocation5 + $0x2b8] sm:$0xff] %v1386
  %1419 = vst [vmem:[#allocation5 + $0x2c0] sm:$0xff] %v1387
  %1420 = vst [vmem:[#allocation5 + $0x2c8] sm:$0xff] %v1388
  %1421 = vst [vmem:[#allocation5 + $0x2d0] sm:$0xff] %v1389
  %1422 = vst [vmem:[#allocation5 + $0x2d8] sm:$0xff] %v1390
  %1423 = vst [vmem:[#allocation5 + $0x2e0] sm:$0xff] %v1391
  %1424 = vst [vmem:[#allocation5 + $0x2e8] sm:$0xff] %v1392
  %1425 = vst [vmem:[#allocation5 + $0x2f0] sm:$0xff] %v1393
  %1426 = vst [vmem:[#allocation5 + $0x2f8] sm:$0xff] %v1394
  %v1427 = vld [vmem:[#allocation4 + $0x18] sm:$0xff]
  %v1428 = vld [vmem:[#allocation4 + $0x20] sm:$0xff]
  %v1429 = vld [vmem:[#allocation4 + $0x28] sm:$0xff]
  %v1430 = vld [vmem:[#allocation4 + $0x30] sm:$0xff]
  %v1431 = vld [vmem:[#allocation4 + $0x38] sm:$0xff]
  %v1432 = vld [vmem:[#allocation4 + $0x40] sm:$0xff]
  %v1433 = vld [vmem:[#allocation4 + $0x48] sm:$0xff]
  %v1434 = vld [vmem:[#allocation4 + $0x50] sm:$0xff]
  %v1435 = vld [vmem:[#allocation4 + $0x78] sm:$0xff]
  %v1436 = vld [vmem:[#allocation4 + $0x80] sm:$0xff]
  %v1437 = vld [vmem:[#allocation4 + $0x88] sm:$0xff]
  %v1438 = vld [vmem:[#allocation4 + $0x90] sm:$0xff]
  %v1439 = vld [vmem:[#allocation4 + $0x98] sm:$0xff]
  %v1440 = vld [vmem:[#allocation4 + $0xa0] sm:$0xff]
  %v1441 = vld [vmem:[#allocation4 + $0xa8] sm:$0xff]
  %v1442 = vld [vmem:[#allocation4 + $0xb0] sm:$0xff]
  %v1443 = vld [vmem:[#allocation4 + $0xd8] sm:$0xff]
  %v1444 = vld [vmem:[#allocation4 + $0xe0] sm:$0xff]
  %v1445 = vld [vmem:[#allocation4 + $0xe8] sm:$0xff]
  %v1446 = vld [vmem:[#allocation4 + $0xf0] sm:$0xff]
  %v1447 = vld [vmem:[#allocation4 + $0xf8] sm:$0xff]
  %v1448 = vld [vmem:[#allocation4 + $0x100] sm:$0xff]
  %v1449 = vld [vmem:[#allocation4 + $0x108] sm:$0xff]
  %v1450 = vld [vmem:[#allocation4 + $0x110] sm:$0xff]
  %v1451 = vld [vmem:[#allocation4 + $0x138] sm:$0xff]
  %v1452 = vld [vmem:[#allocation4 + $0x140] sm:$0xff]
  %v1453 = vld [vmem:[#allocation4 + $0x148] sm:$0xff]
  %v1454 = vld [vmem:[#allocation4 + $0x150] sm:$0xff]
  %v1455 = vld [vmem:[#allocation4 + $0x158] sm:$0xff]
  %v1456 = vld [vmem:[#allocation4 + $0x160] sm:$0xff]
  %v1457 = vld [vmem:[#allocation4 + $0x168] sm:$0xff]
  %v1458 = vld [vmem:[#allocation4 + $0x170] sm:$0xff]
  %1459 = vst [vmem:[#allocation5 + $0x300] sm:$0xff] %v1427
  %1460 = vst [vmem:[#allocation5 + $0x308] sm:$0xff] %v1428
  %1461 = vst [vmem:[#allocation5 + $0x310] sm:$0xff] %v1429
  %1462 = vst [vmem:[#allocation5 + $0x318] sm:$0xff] %v1430
  %1463 = vst [vmem:[#allocation5 + $0x320] sm:$0xff] %v1431
  %1464 = vst [vmem:[#allocation5 + $0x328] sm:$0xff] %v1432
  %1465 = vst [vmem:[#allocation5 + $0x330] sm:$0xff] %v1433
  %1466 = vst [vmem:[#allocation5 + $0x338] sm:$0xff] %v1434
  %1467 = vst [vmem:[#allocation5 + $0x340] sm:$0xff] %v1435
  %1468 = vst [vmem:[#allocation5 + $0x348] sm:$0xff] %v1436
  %1469 = vst [vmem:[#allocation5 + $0x350] sm:$0xff] %v1437
  %1470 = vst [vmem:[#allocation5 + $0x358] sm:$0xff] %v1438
  %1471 = vst [vmem:[#allocation5 + $0x360] sm:$0xff] %v1439
  %1472 = vst [vmem:[#allocation5 + $0x368] sm:$0xff] %v1440
  %1473 = vst [vmem:[#allocation5 + $0x370] sm:$0xff] %v1441
  %1474 = vst [vmem:[#allocation5 + $0x378] sm:$0xff] %v1442
  %1475 = vst [vmem:[#allocation5 + $0x380] sm:$0xff] %v1443
  %1476 = vst [vmem:[#allocation5 + $0x388] sm:$0xff] %v1444
  %1477 = vst [vmem:[#allocation5 + $0x390] sm:$0xff] %v1445
  %1478 = vst [vmem:[#allocation5 + $0x398] sm:$0xff] %v1446
  %1479 = vst [vmem:[#allocation5 + $0x3a0] sm:$0xff] %v1447
  %1480 = vst [vmem:[#allocation5 + $0x3a8] sm:$0xff] %v1448
  %1481 = vst [vmem:[#allocation5 + $0x3b0] sm:$0xff] %v1449
  %1482 = vst [vmem:[#allocation5 + $0x3b8] sm:$0xff] %v1450
  %1483 = vst [vmem:[#allocation5 + $0x3c0] sm:$0xff] %v1451
  %1484 = vst [vmem:[#allocation5 + $0x3c8] sm:$0xff] %v1452
  %1485 = vst [vmem:[#allocation5 + $0x3d0] sm:$0xff] %v1453
  %1486 = vst [vmem:[#allocation5 + $0x3d8] sm:$0xff] %v1454
  %1487 = vst [vmem:[#allocation5 + $0x3e0] sm:$0xff] %v1455
  %1488 = vst [vmem:[#allocation5 + $0x3e8] sm:$0xff] %v1456
  %1489 = vst [vmem:[#allocation5 + $0x3f0] sm:$0xff] %v1457
  %1490 = vst [vmem:[#allocation5 + $0x3f8] sm:$0xff] %v1458
  %v1491 = vld [vmem:[#allocation4 + $0x20] sm:$0xff]
  %v1492 = vld [vmem:[#allocation4 + $0x28] sm:$0xff]
  %v1493 = vld [vmem:[#allocation4 + $0x30] sm:$0xff]
  %v1494 = vld [vmem:[#allocation4 + $0x38] sm:$0xff]
  %v1495 = vld [vmem:[#allocation4 + $0x40] sm:$0xff]
  %v1496 = vld [vmem:[#allocation4 + $0x48] sm:$0xff]
  %v1497 = vld [vmem:[#allocation4 + $0x50] sm:$0xff]
  %v1498 = vld [vmem:[#allocation4 + $0x58] sm:$0xff]
  %v1499 = vld [vmem:[#allocation4 + $0x80] sm:$0xff]
  %v1500 = vld [vmem:[#allocation4 + $0x88] sm:$0xff]
  %v1501 = vld [vmem:[#allocation4 + $0x90] sm:$0xff]
  %v1502 = vld [vmem:[#allocation4 + $0x98] sm:$0xff]
  %v1503 = vld [vmem:[#allocation4 + $0xa0] sm:$0xff]
  %v1504 = vld [vmem:[#allocation4 + $0xa8] sm:$0xff]
  %v1505 = vld [vmem:[#allocation4 + $0xb0] sm:$0xff]
  %v1506 = vld [vmem:[#allocation4 + $0xb8] sm:$0xff]
  %v1507 = vld [vmem:[#allocation4 + $0xe0] sm:$0xff]
  %v1508 = vld [vmem:[#allocation4 + $0xe8] sm:$0xff]
  %v1509 = vld [vmem:[#allocation4 + $0xf0] sm:$0xff]
  %v1510 = vld [vmem:[#allocation4 + $0xf8] sm:$0xff]
  %v1511 = vld [vmem:[#allocation4 + $0x100] sm:$0xff]
  %v1512 = vld [vmem:[#allocation4 + $0x108] sm:$0xff]
  %v1513 = vld [vmem:[#allocation4 + $0x110] sm:$0xff]
  %v1514 = vld [vmem:[#allocation4 + $0x118] sm:$0xff]
  %v1515 = vld [vmem:[#allocation4 + $0x140] sm:$0xff]
  %v1516 = vld [vmem:[#allocation4 + $0x148] sm:$0xff]
  %v1517 = vld [vmem:[#allocation4 + $0x150] sm:$0xff]
  %v1518 = vld [vmem:[#allocation4 + $0x158] sm:$0xff]
  %v1519 = vld [vmem:[#allocation4 + $0x160] sm:$0xff]
  %v1520 = vld [vmem:[#allocation4 + $0x168] sm:$0xff]
  %v1521 = vld [vmem:[#allocation4 + $0x170] sm:$0xff]
  %v1522 = vld [vmem:[#allocation4 + $0x178] sm:$0xff]
  %1523 = vst [vmem:[#allocation5 + $0x400] sm:$0xff] %v1491
  %1524 = vst [vmem:[#allocation5 + $0x408] sm:$0xff] %v1492
  %1525 = vst [vmem:[#allocation5 + $0x410] sm:$0xff] %v1493
  %1526 = vst [vmem:[#allocation5 + $0x418] sm:$0xff] %v1494
  %1527 = vst [vmem:[#allocation5 + $0x420] sm:$0xff] %v1495
  %1528 = vst [vmem:[#allocation5 + $0x428] sm:$0xff] %v1496
  %1529 = vst [vmem:[#allocation5 + $0x430] sm:$0xff] %v1497
  %1530 = vst [vmem:[#allocation5 + $0x438] sm:$0xff] %v1498
  %1531 = vst [vmem:[#allocation5 + $0x440] sm:$0xff] %v1499
  %1532 = vst [vmem:[#allocation5 + $0x448] sm:$0xff] %v1500
  %1533 = vst [vmem:[#allocation5 + $0x450] sm:$0xff] %v1501
  %1534 = vst [vmem:[#allocation5 + $0x458] sm:$0xff] %v1502
  %1535 = vst [vmem:[#allocation5 + $0x460] sm:$0xff] %v1503
  %1536 = vst [vmem:[#allocation5 + $0x468] sm:$0xff] %v1504
  %1537 = vst [vmem:[#allocation5 + $0x470] sm:$0xff] %v1505
  %1538 = vst [vmem:[#allocation5 + $0x478] sm:$0xff] %v1506
  %1539 = vst [vmem:[#allocation5 + $0x480] sm:$0xff] %v1507
  %1540 = vst [vmem:[#allocation5 + $0x488] sm:$0xff] %v1508
  %1541 = vst [vmem:[#allocation5 + $0x490] sm:$0xff] %v1509
  %1542 = vst [vmem:[#allocation5 + $0x498] sm:$0xff] %v1510
  %1543 = vst [vmem:[#allocation5 + $0x4a0] sm:$0xff] %v1511
  %1544 = vst [vmem:[#allocation5 + $0x4a8] sm:$0xff] %v1512
  %1545 = vst [vmem:[#allocation5 + $0x4b0] sm:$0xff] %v1513
  %1546 = vst [vmem:[#allocation5 + $0x4b8] sm:$0xff] %v1514
  %1547 = vst [vmem:[#allocation5 + $0x4c0] sm:$0xff] %v1515
  %1548 = vst [vmem:[#allocation5 + $0x4c8] sm:$0xff] %v1516
  %1549 = vst [vmem:[#allocation5 + $0x4d0] sm:$0xff] %v1517
  %1550 = vst [vmem:[#allocation5 + $0x4d8] sm:$0xff] %v1518
  %1551 = vst [vmem:[#allocation5 + $0x4e0] sm:$0xff] %v1519
  %1552 = vst [vmem:[#allocation5 + $0x4e8] sm:$0xff] %v1520
  %1553 = vst [vmem:[#allocation5 + $0x4f0] sm:$0xff] %v1521
  %1554 = vst [vmem:[#allocation5 + $0x4f8] sm:$0xff] %v1522
  %v1555 = vld [vmem:[%s3] sm:$0xff]
  %v1556 = vld [vmem:[%s3 + $0x8] sm:$0xff]
  %v1557 = vld [vmem:[%s3 + $0x10] sm:$0xff]
  %v1558 = vld [vmem:[%s3 + $0x18] sm:$0xff]
  %v1559 = vld [vmem:[%s3 + $0x20] sm:$0xff]
  %v1560 = vld [vmem:[%s3 + $0x28] sm:$0xff]
  %v1561 = vld [vmem:[%s3 + $0x30] sm:$0xff]
  %v1562 = vld [vmem:[%s3 + $0x38] sm:$0xff]
  %v1563 = vld [vmem:[%s3 + $0x40] sm:$0xff]
  %v1564 = vld [vmem:[%s3 + $0x48] sm:$0xff]
  %v1565 = vld [vmem:[%s3 + $0x50] sm:$0xff]
  %v1566 = vld [vmem:[%s3 + $0x58] sm:$0xff]
  %v1567 = vld [vmem:[%s3 + $0x60] sm:$0xff]
  %v1568 = vld [vmem:[%s3 + $0x68] sm:$0xff]
  %v1569 = vld [vmem:[%s3 + $0x70] sm:$0xff]
  %v1570 = vld [vmem:[%s3 + $0x78] sm:$0xff]
  %v1571 = vld [vmem:[#allocation5] sm:$0xff]
  %v1572 = vld [vmem:[#allocation5 + $0x8] sm:$0xff]
  %v1573 = vld [vmem:[#allocation5 + $0x10] sm:$0xff]
  %v1574 = vld [vmem:[#allocation5 + $0x18] sm:$0xff]
  %v1575 = vld [vmem:[#allocation5 + $0x20] sm:$0xff]
  %v1576 = vld [vmem:[#allocation5 + $0x28] sm:$0xff]
  %v1577 = vld [vmem:[#allocation5 + $0x30] sm:$0xff]
  %v1578 = vld [vmem:[#allocation5 + $0x38] sm:$0xff]
  %v1579 = vld [vmem:[#allocation5 + $0x40] sm:$0xff]
  %v1580 = vld [vmem:[#allocation5 + $0x48] sm:$0xff]
  %v1581 = vld [vmem:[#allocation5 + $0x50] sm:$0xff]
  %v1582 = vld [vmem:[#allocation5 + $0x58] sm:$0xff]
  %v1583 = vld [vmem:[#allocation5 + $0x60] sm:$0xff]
  %v1584 = vld [vmem:[#allocation5 + $0x68] sm:$0xff]
  %v1585 = vld [vmem:[#allocation5 + $0x70] sm:$0xff]
  %v1586 = vld [vmem:[#allocation5 + $0x78] sm:$0xff]
  %v1587 = vld [vmem:[#allocation5 + $0x80] sm:$0xff]
  %v1588 = vld [vmem:[#allocation5 + $0x88] sm:$0xff]
  %v1589 = vld [vmem:[#allocation5 + $0x90] sm:$0xff]
  %v1590 = vld [vmem:[#allocation5 + $0x98] sm:$0xff]
  %v1591 = vld [vmem:[#allocation5 + $0xa0] sm:$0xff]
  %v1592 = vld [vmem:[#allocation5 + $0xa8] sm:$0xff]
  %v1593 = vld [vmem:[#allocation5 + $0xb0] sm:$0xff]
  %v1594 = vld [vmem:[#allocation5 + $0xb8] sm:$0xff]
  %v1595 = vld [vmem:[#allocation5 + $0xc0] sm:$0xff]
  %v1596 = vld [vmem:[#allocation5 + $0xc8] sm:$0xff]
  %v1597 = vld [vmem:[#allocation5 + $0xd0] sm:$0xff]
  %v1598 = vld [vmem:[#allocation5 + $0xd8] sm:$0xff]
  %v1599 = vld [vmem:[#allocation5 + $0xe0] sm:$0xff]
  %v1600 = vld [vmem:[#allocation5 + $0xe8] sm:$0xff]
  %v1601 = vld [vmem:[#allocation5 + $0xf0] sm:$0xff]
  %v1602 = vld [vmem:[#allocation5 + $0xf8] sm:$0xff]
  %v1603 = vld [vmem:[#allocation5 + $0x100] sm:$0xff]
  %v1604 = vld [vmem:[#allocation5 + $0x108] sm:$0xff]
  %v1605 = vld [vmem:[#allocation5 + $0x110] sm:$0xff]
  %v1606 = vld [vmem:[#allocation5 + $0x118] sm:$0xff]
  %v1607 = vld [vmem:[#allocation5 + $0x120] sm:$0xff]
  %v1608 = vld [vmem:[#allocation5 + $0x128] sm:$0xff]
  %v1609 = vld [vmem:[#allocation5 + $0x130] sm:$0xff]
  %v1610 = vld [vmem:[#allocation5 + $0x138] sm:$0xff]
  %v1611 = vld [vmem:[#allocation5 + $0x140] sm:$0xff]
  %v1612 = vld [vmem:[#allocation5 + $0x148] sm:$0xff]
  %v1613 = vld [vmem:[#allocation5 + $0x150] sm:$0xff]
  %v1614 = vld [vmem:[#allocation5 + $0x158] sm:$0xff]
  %v1615 = vld [vmem:[#allocation5 + $0x160] sm:$0xff]
  %v1616 = vld [vmem:[#allocation5 + $0x168] sm:$0xff]
  %v1617 = vld [vmem:[#allocation5 + $0x170] sm:$0xff]
  %v1618 = vld [vmem:[#allocation5 + $0x178] sm:$0xff]
  %v1619 = vld [vmem:[#allocation5 + $0x180] sm:$0xff]
  %v1620 = vld [vmem:[#allocation5 + $0x188] sm:$0xff]
  %v1621 = vld [vmem:[#allocation5 + $0x190] sm:$0xff]
  %v1622 = vld [vmem:[#allocation5 + $0x198] sm:$0xff]
  %v1623 = vld [vmem:[#allocation5 + $0x1a0] sm:$0xff]
  %v1624 = vld [vmem:[#allocation5 + $0x1a8] sm:$0xff]
  %v1625 = vld [vmem:[#allocation5 + $0x1b0] sm:$0xff]
  %v1626 = vld [vmem:[#allocation5 + $0x1b8] sm:$0xff]
  %v1627 = vld [vmem:[#allocation5 + $0x1c0] sm:$0xff]
  %v1628 = vld [vmem:[#allocation5 + $0x1c8] sm:$0xff]
  %v1629 = vld [vmem:[#allocation5 + $0x1d0] sm:$0xff]
  %v1630 = vld [vmem:[#allocation5 + $0x1d8] sm:$0xff]
  %v1631 = vld [vmem:[#allocation5 + $0x1e0] sm:$0xff]
  %v1632 = vld [vmem:[#allocation5 + $0x1e8] sm:$0xff]
  %v1633 = vld [vmem:[#allocation5 + $0x1f0] sm:$0xff]
  %v1634 = vld [vmem:[#allocation5 + $0x1f8] sm:$0xff]
  %v1635 = vld [vmem:[#allocation5 + $0x200] sm:$0xff]
  %v1636 = vld [vmem:[#allocation5 + $0x208] sm:$0xff]
  %v1637 = vld [vmem:[#allocation5 + $0x210] sm:$0xff]
  %v1638 = vld [vmem:[#allocation5 + $0x218] sm:$0xff]
  %v1639 = vld [vmem:[#allocation5 + $0x220] sm:$0xff]
  %v1640 = vld [vmem:[#allocation5 + $0x228] sm:$0xff]
  %v1641 = vld [vmem:[#allocation5 + $0x230] sm:$0xff]
  %v1642 = vld [vmem:[#allocation5 + $0x238] sm:$0xff]
  %v1643 = vld [vmem:[#allocation5 + $0x240] sm:$0xff]
  %v1644 = vld [vmem:[#allocation5 + $0x248] sm:$0xff]
  %v1645 = vld [vmem:[#allocation5 + $0x250] sm:$0xff]
  %v1646 = vld [vmem:[#allocation5 + $0x258] sm:$0xff]
  %v1647 = vld [vmem:[#allocation5 + $0x260] sm:$0xff]
  %v1648 = vld [vmem:[#allocation5 + $0x268] sm:$0xff]
  %v1649 = vld [vmem:[#allocation5 + $0x270] sm:$0xff]
  %v1650 = vld [vmem:[#allocation5 + $0x278] sm:$0xff]
  %v1651 = vld [vmem:[#allocation5 + $0x280] sm:$0xff]
  %v1652 = vld [vmem:[#allocation5 + $0x288] sm:$0xff]
  %v1653 = vld [vmem:[#allocation5 + $0x290] sm:$0xff]
  %v1654 = vld [vmem:[#allocation5 + $0x298] sm:$0xff]
  %v1655 = vld [vmem:[#allocation5 + $0x2a0] sm:$0xff]
  %v1656 = vld [vmem:[#allocation5 + $0x2a8] sm:$0xff]
  %v1657 = vld [vmem:[#allocation5 + $0x2b0] sm:$0xff]
  %v1658 = vld [vmem:[#allocation5 + $0x2b8] sm:$0xff]
  %v1659 = vld [vmem:[#allocation5 + $0x2c0] sm:$0xff]
  %v1660 = vld [vmem:[#allocation5 + $0x2c8] sm:$0xff]
  %v1661 = vld [vmem:[#allocation5 + $0x2d0] sm:$0xff]
  %v1662 = vld [vmem:[#allocation5 + $0x2d8] sm:$0xff]
  %v1663 = vld [vmem:[#allocation5 + $0x2e0] sm:$0xff]
  %v1664 = vld [vmem:[#allocation5 + $0x2e8] sm:$0xff]
  %v1665 = vld [vmem:[#allocation5 + $0x2f0] sm:$0xff]
  %v1666 = vld [vmem:[#allocation5 + $0x2f8] sm:$0xff]
  %v1667 = vld [vmem:[#allocation5 + $0x300] sm:$0xff]
  %v1668 = vld [vmem:[#allocation5 + $0x308] sm:$0xff]
  %v1669 = vld [vmem:[#allocation5 + $0x310] sm:$0xff]
  %v1670 = vld [vmem:[#allocation5 + $0x318] sm:$0xff]
  %v1671 = vld [vmem:[#allocation5 + $0x320] sm:$0xff]
  %v1672 = vld [vmem:[#allocation5 + $0x328] sm:$0xff]
  %v1673 = vld [vmem:[#allocation5 + $0x330] sm:$0xff]
  %v1674 = vld [vmem:[#allocation5 + $0x338] sm:$0xff]
  %v1675 = vld [vmem:[#allocation5 + $0x340] sm:$0xff]
  %v1676 = vld [vmem:[#allocation5 + $0x348] sm:$0xff]
  %v1677 = vld [vmem:[#allocation5 + $0x350] sm:$0xff]
  %v1678 = vld [vmem:[#allocation5 + $0x358] sm:$0xff]
  %v1679 = vld [vmem:[#allocation5 + $0x360] sm:$0xff]
  %v1680 = vld [vmem:[#allocation5 + $0x368] sm:$0xff]
  %v1681 = vld [vmem:[#allocation5 + $0x370] sm:$0xff]
  %v1682 = vld [vmem:[#allocation5 + $0x378] sm:$0xff]
  %v1683 = vld [vmem:[#allocation5 + $0x380] sm:$0xff]
  %v1684 = vld [vmem:[#allocation5 + $0x388] sm:$0xff]
  %v1685 = vld [vmem:[#allocation5 + $0x390] sm:$0xff]
  %v1686 = vld [vmem:[#allocation5 + $0x398] sm:$0xff]
  %v1687 = vld [vmem:[#allocation5 + $0x3a0] sm:$0xff]
  %v1688 = vld [vmem:[#allocation5 + $0x3a8] sm:$0xff]
  %v1689 = vld [vmem:[#allocation5 + $0x3b0] sm:$0xff]
  %v1690 = vld [vmem:[#allocation5 + $0x3b8] sm:$0xff]
  %v1691 = vld [vmem:[#allocation5 + $0x3c0] sm:$0xff]
  %v1692 = vld [vmem:[#allocation5 + $0x3c8] sm:$0xff]
  %v1693 = vld [vmem:[#allocation5 + $0x3d0] sm:$0xff]
  %v1694 = vld [vmem:[#allocation5 + $0x3d8] sm:$0xff]
  %v1695 = vld [vmem:[#allocation5 + $0x3e0] sm:$0xff]
  %v1696 = vld [vmem:[#allocation5 + $0x3e8] sm:$0xff]
  %v1697 = vld [vmem:[#allocation5 + $0x3f0] sm:$0xff]
  %v1698 = vld [vmem:[#allocation5 + $0x3f8] sm:$0xff]
  %v1699 = vld [vmem:[#allocation5 + $0x400] sm:$0xff]
  %v1700 = vld [vmem:[#allocation5 + $0x408] sm:$0xff]
  %v1701 = vld [vmem:[#allocation5 + $0x410] sm:$0xff]
  %v1702 = vld [vmem:[#allocation5 + $0x418] sm:$0xff]
  %v1703 = vld [vmem:[#allocation5 + $0x420] sm:$0xff]
  %v1704 = vld [vmem:[#allocation5 + $0x428] sm:$0xff]
  %v1705 = vld [vmem:[#allocation5 + $0x430] sm:$0xff]
  %v1706 = vld [vmem:[#allocation5 + $0x438] sm:$0xff]
  %v1707 = vld [vmem:[#allocation5 + $0x440] sm:$0xff]
  %v1708 = vld [vmem:[#allocation5 + $0x448] sm:$0xff]
  %v1709 = vld [vmem:[#allocation5 + $0x450] sm:$0xff]
  %v1710 = vld [vmem:[#allocation5 + $0x458] sm:$0xff]
  %v1711 = vld [vmem:[#allocation5 + $0x460] sm:$0xff]
  %v1712 = vld [vmem:[#allocation5 + $0x468] sm:$0xff]
  %v1713 = vld [vmem:[#allocation5 + $0x470] sm:$0xff]
  %v1714 = vld [vmem:[#allocation5 + $0x478] sm:$0xff]
  %v1715 = vld [vmem:[#allocation5 + $0x480] sm:$0xff]
  %v1716 = vld [vmem:[#allocation5 + $0x488] sm:$0xff]
  %v1717 = vld [vmem:[#allocation5 + $0x490] sm:$0xff]
  %v1718 = vld [vmem:[#allocation5 + $0x498] sm:$0xff]
  %v1719 = vld [vmem:[#allocation5 + $0x4a0] sm:$0xff]
  %v1720 = vld [vmem:[#allocation5 + $0x4a8] sm:$0xff]
  %v1721 = vld [vmem:[#allocation5 + $0x4b0] sm:$0xff]
  %v1722 = vld [vmem:[#allocation5 + $0x4b8] sm:$0xff]
  %v1723 = vld [vmem:[#allocation5 + $0x4c0] sm:$0xff]
  %v1724 = vld [vmem:[#allocation5 + $0x4c8] sm:$0xff]
  %v1725 = vld [vmem:[#allocation5 + $0x4d0] sm:$0xff]
  %v1726 = vld [vmem:[#allocation5 + $0x4d8] sm:$0xff]
  %v1727 = vld [vmem:[#allocation5 + $0x4e0] sm:$0xff]
  %v1728 = vld [vmem:[#allocation5 + $0x4e8] sm:$0xff]
  %v1729 = vld [vmem:[#allocation5 + $0x4f0] sm:$0xff]
  %v1730 = vld [vmem:[#allocation5 + $0x4f8] sm:$0xff]
  %v1731 = vld [vmem:[%s4] sm:$0xff]
  %v1732 = vld [vmem:[%s4 + $0x8] sm:$0xff]
  %v1733 = vld [vmem:[%s4 + $0x10] sm:$0xff]
  %v1734 = vld [vmem:[%s4 + $0x18] sm:$0xff]
  %v1735 = vld [vmem:[%s4 + $0x20] sm:$0xff]
  %v1736 = vld [vmem:[%s4 + $0x28] sm:$0xff]
  %v1737 = vld [vmem:[%s4 + $0x30] sm:$0xff]
  %v1738 = vld [vmem:[%s4 + $0x38] sm:$0xff]
  %1740 = vset.pattern.permute.xlu0 0
  %1741 = vperm.xlu0 %1740, %v1731
  %v1742 = vpop.permute.xlu0 %1741
  %1745 = vset.pattern.permute.xlu0 0
  %1746 = vperm.xlu0 %1745, %v1732
  %v1747 = vpop.permute.xlu0 %1746
  %1750 = vset.pattern.permute.xlu0 0
  %1751 = vperm.xlu0 %1750, %v1733
  %v1752 = vpop.permute.xlu0 %1751
  %1755 = vset.pattern.permute.xlu0 0
  %1756 = vperm.xlu0 %1755, %v1734
  %v1757 = vpop.permute.xlu0 %1756
  %1760 = vset.pattern.permute.xlu0 0
  %1761 = vperm.xlu0 %1760, %v1735
  %v1762 = vpop.permute.xlu0 %1761
  %1765 = vset.pattern.permute.xlu0 0
  %1766 = vperm.xlu0 %1765, %v1736
  %v1767 = vpop.permute.xlu0 %1766
  %1770 = vset.pattern.permute.xlu0 0
  %1771 = vperm.xlu0 %1770, %v1737
  %v1772 = vpop.permute.xlu0 %1771
  %1775 = vset.pattern.permute.xlu0 0
  %1776 = vperm.xlu0 %1775, %v1738
  %v1777 = vpop.permute.xlu0 %1776
  %vm1779 = vcmask 261120
  %v1781 = vsel %vm1779, %v1556, 0
  %v1784 = vsel %vm1779, %v1558, 0
  %v1787 = vsel %vm1779, %v1560, 0
  %v1790 = vsel %vm1779, %v1562, 0
  %v1793 = vsel %vm1779, %v1564, 0
  %v1796 = vsel %vm1779, %v1566, 0
  %v1799 = vsel %vm1779, %v1568, 0
  %v1802 = vsel %vm1779, %v1570, 0
  %1804 = vmatprep.subr.mxu0 %v1692
  %1805 = vmatpush1.msra.mxu0 %v1691
  %1806 = vmatprep.subr.mxu0 %v1684
  %1807 = vmatpush1.msra.mxu0 %v1683
  %1808 = vmatprep.subr.mxu0 %v1676
  %1809 = vmatpush1.msra.mxu0 %v1675
  %1810 = vmatprep.subr.mxu0 %v1668
  %1811 = vmatpush1.msra.mxu0 %v1667
  %1812 = vmatprep.subr.mxu0 %v1660
  %1813 = vmatpush1.msra.mxu0 %v1659
  %1814 = vmatprep.subr.mxu0 %v1652
  %1815 = vmatpush1.msra.mxu0 %v1651
  %1816 = vmatprep.subr.mxu0 %v1644
  %1817 = vmatpush1.msra.mxu0 %v1643
  %1818 = vmatprep.subr.mxu0 %v1636
  %1819 = vmatpush1.msra.mxu0 %v1635
  %1820 = vmatprep.subr.mxu0 %v1628
  %1821 = vmatpush1.msra.mxu0 %v1627
  %1822 = vmatprep.subr.mxu0 %v1620
  %1823 = vmatpush1.msra.mxu0 %v1619
  %1824 = vmatprep.subr.mxu0 %v1612
  %1825 = vmatpush1.msra.mxu0 %v1611
  %1826 = vmatprep.subr.mxu0 %v1604
  %1827 = vmatpush1.msra.mxu0 %v1603
  %1828 = vmatprep.subr.mxu0 %v1596
  %1829 = vmatpush1.msra.mxu0 %v1595
  %1830 = vmatprep.subr.mxu0 %v1588
  %1831 = vmatpush1.msra.mxu0 %v1587
  %1832 = vmatprep.subr.mxu0 %v1580
  %1833 = vmatpush1.msra.mxu0 %v1579
  %1834 = vmatprep.subr.mxu0 %v1572
  %1835 = vmatpush1.msra.mxu0 %v1571
  %1836 = vmatprep.subr.mxu0 0.0
  %1837 = vmatpush2.msra.mxu0 0.0
  %1838 = vmatprep.subr.mxu0 0.0
  %1839 = vmatpush2.msra.mxu0 0.0
  %1840 = vmatprep.subr.mxu0 0.0
  %1841 = vmatpush2.msra.mxu0 0.0
  %1842 = vmatprep.subr.mxu0 0.0
  %1843 = vmatpush2.msra.mxu0 0.0
  %1844 = vmatprep.subr.mxu0 0.0
  %1845 = vmatpush2.msra.mxu0 0.0
  %1846 = vmatprep.subr.mxu0 0.0
  %1847 = vmatpush2.msra.mxu0 0.0
  %1848 = vmatprep.subr.mxu0 0.0
  %1849 = vmatpush2.msra.mxu0 0.0
  %1850 = vmatprep.subr.mxu0 0.0
  %1851 = vmatpush2.msra.mxu0 0.0
  %1852 = vmatprep.subr.mxu0 0.0
  %1853 = vmatpush2.msra.mxu0 0.0
  %1854 = vmatprep.subr.mxu0 0.0
  %1855 = vmatpush2.msra.mxu0 0.0
  %1856 = vmatprep.subr.mxu0 0.0
  %1857 = vmatpush2.msra.mxu0 0.0
  %1858 = vmatprep.subr.mxu0 0.0
  %1859 = vmatpush2.msra.mxu0 0.0
  %1860 = vmatprep.subr.mxu0 %v1724
  %1861 = vmatpush2.msra.mxu0 %v1723
  %1862 = vmatprep.subr.mxu0 %v1716
  %1863 = vmatpush2.msra.mxu0 %v1715
  %1864 = vmatprep.subr.mxu0 %v1708
  %1865 = vmatpush2.msra.mxu0 %v1707
  %1866 = vmatprep.subr.mxu0 %v1700
  %1867 = vmatpush2.msra.mxu0 %v1699
  %1868 = vmatprep.mubr.f32.mxu0 %v1781
  %1869 = vmatmul.mubr.f32.gmra.mxu0 %v1555
  %v1870 = vpop.f32.mrf.mxu0
  %v1871 = vadd.f32 %v1742, %v1870
  %v1872 = vpop.f32.mrf.mxu0
  %v1873 = vadd.f32 %v1742, %v1872
  %1874 = vmatprep.mubr.f32.mxu0 %v1784
  %1875 = vmatmul.mubr.f32.gmra.mxu0 %v1557
  %v1876 = vpop.f32.mrf.mxu0
  %v1877 = vadd.f32 %v1747, %v1876
  %v1878 = vpop.f32.mrf.mxu0
  %v1879 = vadd.f32 %v1747, %v1878
  %1880 = vmatprep.mubr.f32.mxu0 %v1787
  %1881 = vmatmul.mubr.f32.gmra.mxu0 %v1559
  %v1882 = vpop.f32.mrf.mxu0
  %v1883 = vadd.f32 %v1752, %v1882
  %v1884 = vpop.f32.mrf.mxu0
  %v1885 = vadd.f32 %v1752, %v1884
  %1886 = vmatprep.mubr.f32.mxu0 %v1790
  %1887 = vmatmul.mubr.f32.gmra.mxu0 %v1561
  %v1888 = vpop.f32.mrf.mxu0
  %v1889 = vadd.f32 %v1757, %v1888
  %v1890 = vpop.f32.mrf.mxu0
  %v1891 = vadd.f32 %v1757, %v1890
  %1892 = vmatprep.mubr.f32.mxu0 %v1793
  %1893 = vmatmul.mubr.f32.gmra.mxu0 %v1563
  %v1894 = vpop.f32.mrf.mxu0
  %v1895 = vadd.f32 %v1762, %v1894
  %v1896 = vpop.f32.mrf.mxu0
  %v1897 = vadd.f32 %v1762, %v1896
  %1898 = vmatprep.mubr.f32.mxu0 %v1796
  %1899 = vmatmul.mubr.f32.gmra.mxu0 %v1565
  %v1900 = vpop.f32.mrf.mxu0
  %v1901 = vadd.f32 %v1767, %v1900
  %v1902 = vpop.f32.mrf.mxu0
  %v1903 = vadd.f32 %v1767, %v1902
  %1904 = vmatprep.mubr.f32.mxu0 %v1799
  %1905 = vmatmul.mubr.f32.gmra.mxu0 %v1567
  %v1906 = vpop.f32.mrf.mxu0
  %v1907 = vadd.f32 %v1772, %v1906
  %v1908 = vpop.f32.mrf.mxu0
  %v1909 = vadd.f32 %v1772, %v1908
  %1910 = vmatprep.mubr.f32.mxu0 %v1802
  %1911 = vmatmul.mubr.f32.gmra.mxu0 %v1569
  %v1912 = vpop.f32.mrf.mxu0
  %v1913 = vadd.f32 %v1777, %v1912
  %v1914 = vpop.f32.mrf.mxu0
  %v1915 = vadd.f32 %v1777, %v1914
  %1916 = vdwg.mxu0
  %1917 = vmatprep.subr.mxu0 %v1694
  %1918 = vmatpush1.msra.mxu0 %v1693
  %1919 = vmatprep.subr.mxu0 %v1686
  %1920 = vmatpush1.msra.mxu0 %v1685
  %1921 = vmatprep.subr.mxu0 %v1678
  %1922 = vmatpush1.msra.mxu0 %v1677
  %1923 = vmatprep.subr.mxu0 %v1670
  %1924 = vmatpush1.msra.mxu0 %v1669
  %1925 = vmatprep.subr.mxu0 %v1662
  %1926 = vmatpush1.msra.mxu0 %v1661
  %1927 = vmatprep.subr.mxu0 %v1654
  %1928 = vmatpush1.msra.mxu0 %v1653
  %1929 = vmatprep.subr.mxu0 %v1646
  %1930 = vmatpush1.msra.mxu0 %v1645
  %1931 = vmatprep.subr.mxu0 %v1638
  %1932 = vmatpush1.msra.mxu0 %v1637
  %1933 = vmatprep.subr.mxu0 %v1630
  %1934 = vmatpush1.msra.mxu0 %v1629
  %1935 = vmatprep.subr.mxu0 %v1622
  %1936 = vmatpush1.msra.mxu0 %v1621
  %1937 = vmatprep.subr.mxu0 %v1614
  %1938 = vmatpush1.msra.mxu0 %v1613
  %1939 = vmatprep.subr.mxu0 %v1606
  %1940 = vmatpush1.msra.mxu0 %v1605
  %1941 = vmatprep.subr.mxu0 %v1598
  %1942 = vmatpush1.msra.mxu0 %v1597
  %1943 = vmatprep.subr.mxu0 %v1590
  %1944 = vmatpush1.msra.mxu0 %v1589
  %1945 = vmatprep.subr.mxu0 %v1582
  %1946 = vmatpush1.msra.mxu0 %v1581
  %1947 = vmatprep.subr.mxu0 %v1574
  %1948 = vmatpush1.msra.mxu0 %v1573
  %1949 = vmatprep.subr.mxu0 0.0
  %1950 = vmatpush2.msra.mxu0 0.0
  %1951 = vmatprep.subr.mxu0 0.0
  %1952 = vmatpush2.msra.mxu0 0.0
  %1953 = vmatprep.subr.mxu0 0.0
  %1954 = vmatpush2.msra.mxu0 0.0
  %1955 = vmatprep.subr.mxu0 0.0
  %1956 = vmatpush2.msra.mxu0 0.0
  %1957 = vmatprep.subr.mxu0 0.0
  %1958 = vmatpush2.msra.mxu0 0.0
  %1959 = vmatprep.subr.mxu0 0.0
  %1960 = vmatpush2.msra.mxu0 0.0
  %1961 = vmatprep.subr.mxu0 0.0
  %1962 = vmatpush2.msra.mxu0 0.0
  %1963 = vmatprep.subr.mxu0 0.0
  %1964 = vmatpush2.msra.mxu0 0.0
  %1965 = vmatprep.subr.mxu0 0.0
  %1966 = vmatpush2.msra.mxu0 0.0
  %1967 = vmatprep.subr.mxu0 0.0
  %1968 = vmatpush2.msra.mxu0 0.0
  %1969 = vmatprep.subr.mxu0 0.0
  %1970 = vmatpush2.msra.mxu0 0.0
  %1971 = vmatprep.subr.mxu0 0.0
  %1972 = vmatpush2.msra.mxu0 0.0
  %1973 = vmatprep.subr.mxu0 %v1726
  %1974 = vmatpush2.msra.mxu0 %v1725
  %1975 = vmatprep.subr.mxu0 %v1718
  %1976 = vmatpush2.msra.mxu0 %v1717
  %1977 = vmatprep.subr.mxu0 %v1710
  %1978 = vmatpush2.msra.mxu0 %v1709
  %1979 = vmatprep.subr.mxu0 %v1702
  %1980 = vmatpush2.msra.mxu0 %v1701
  %1981 = vmatprep.mubr.f32.mxu0 %v1781
  %1982 = vmatmul.mubr.f32.gmra.mxu0 %v1555
  %v1983 = vpop.f32.mrf.mxu0
  %v1984 = vadd.f32 %v1742, %v1983
  %v1985 = vpop.f32.mrf.mxu0
  %v1986 = vadd.f32 %v1742, %v1985
  %1987 = vmatprep.mubr.f32.mxu0 %v1784
  %1988 = vmatmul.mubr.f32.gmra.mxu0 %v1557
  %v1989 = vpop.f32.mrf.mxu0
  %v1990 = vadd.f32 %v1747, %v1989
  %v1991 = vpop.f32.mrf.mxu0
  %v1992 = vadd.f32 %v1747, %v1991
  %1993 = vmatprep.mubr.f32.mxu0 %v1787
  %1994 = vmatmul.mubr.f32.gmra.mxu0 %v1559
  %v1995 = vpop.f32.mrf.mxu0
  %v1996 = vadd.f32 %v1752, %v1995
  %v1997 = vpop.f32.mrf.mxu0
  %v1998 = vadd.f32 %v1752, %v1997
  %1999 = vmatprep.mubr.f32.mxu0 %v1790
  %2000 = vmatmul.mubr.f32.gmra.mxu0 %v1561
  %v2001 = vpop.f32.mrf.mxu0
  %v2002 = vadd.f32 %v1757, %v2001
  %v2003 = vpop.f32.mrf.mxu0
  %v2004 = vadd.f32 %v1757, %v2003
  %2005 = vmatprep.mubr.f32.mxu0 %v1793
  %2006 = vmatmul.mubr.f32.gmra.mxu0 %v1563
  %v2007 = vpop.f32.mrf.mxu0
  %v2008 = vadd.f32 %v1762, %v2007
  %v2009 = vpop.f32.mrf.mxu0
  %v2010 = vadd.f32 %v1762, %v2009
  %2011 = vmatprep.mubr.f32.mxu0 %v1796
  %2012 = vmatmul.mubr.f32.gmra.mxu0 %v1565
  %v2013 = vpop.f32.mrf.mxu0
  %v2014 = vadd.f32 %v1767, %v2013
  %v2015 = vpop.f32.mrf.mxu0
  %v2016 = vadd.f32 %v1767, %v2015
  %2017 = vmatprep.mubr.f32.mxu0 %v1799
  %2018 = vmatmul.mubr.f32.gmra.mxu0 %v1567
  %v2019 = vpop.f32.mrf.mxu0
  %v2020 = vadd.f32 %v1772, %v2019
  %v2021 = vpop.f32.mrf.mxu0
  %v2022 = vadd.f32 %v1772, %v2021
  %2023 = vmatprep.mubr.f32.mxu0 %v1802
  %2024 = vmatmul.mubr.f32.gmra.mxu0 %v1569
  %v2025 = vpop.f32.mrf.mxu0
  %v2026 = vadd.f32 %v1777, %v2025
  %v2027 = vpop.f32.mrf.mxu0
  %v2028 = vadd.f32 %v1777, %v2027
  %2029 = vdwg.mxu0
  %2030 = vmatprep.subr.mxu0 %v1696
  %2031 = vmatpush1.msra.mxu0 %v1695
  %2032 = vmatprep.subr.mxu0 %v1688
  %2033 = vmatpush1.msra.mxu0 %v1687
  %2034 = vmatprep.subr.mxu0 %v1680
  %2035 = vmatpush1.msra.mxu0 %v1679
  %2036 = vmatprep.subr.mxu0 %v1672
  %2037 = vmatpush1.msra.mxu0 %v1671
  %2038 = vmatprep.subr.mxu0 %v1664
  %2039 = vmatpush1.msra.mxu0 %v1663
  %2040 = vmatprep.subr.mxu0 %v1656
  %2041 = vmatpush1.msra.mxu0 %v1655
  %2042 = vmatprep.subr.mxu0 %v1648
  %2043 = vmatpush1.msra.mxu0 %v1647
  %2044 = vmatprep.subr.mxu0 %v1640
  %2045 = vmatpush1.msra.mxu0 %v1639
  %2046 = vmatprep.subr.mxu0 %v1632
  %2047 = vmatpush1.msra.mxu0 %v1631
  %2048 = vmatprep.subr.mxu0 %v1624
  %2049 = vmatpush1.msra.mxu0 %v1623
  %2050 = vmatprep.subr.mxu0 %v1616
  %2051 = vmatpush1.msra.mxu0 %v1615
  %2052 = vmatprep.subr.mxu0 %v1608
  %2053 = vmatpush1.msra.mxu0 %v1607
  %2054 = vmatprep.subr.mxu0 %v1600
  %2055 = vmatpush1.msra.mxu0 %v1599
  %2056 = vmatprep.subr.mxu0 %v1592
  %2057 = vmatpush1.msra.mxu0 %v1591
  %2058 = vmatprep.subr.mxu0 %v1584
  %2059 = vmatpush1.msra.mxu0 %v1583
  %2060 = vmatprep.subr.mxu0 %v1576
  %2061 = vmatpush1.msra.mxu0 %v1575
  %2062 = vmatprep.subr.mxu0 0.0
  %2063 = vmatpush2.msra.mxu0 0.0
  %2064 = vmatprep.subr.mxu0 0.0
  %2065 = vmatpush2.msra.mxu0 0.0
  %2066 = vmatprep.subr.mxu0 0.0
  %2067 = vmatpush2.msra.mxu0 0.0
  %2068 = vmatprep.subr.mxu0 0.0
  %2069 = vmatpush2.msra.mxu0 0.0
  %2070 = vmatprep.subr.mxu0 0.0
  %2071 = vmatpush2.msra.mxu0 0.0
  %2072 = vmatprep.subr.mxu0 0.0
  %2073 = vmatpush2.msra.mxu0 0.0
  %2074 = vmatprep.subr.mxu0 0.0
  %2075 = vmatpush2.msra.mxu0 0.0
  %2076 = vmatprep.subr.mxu0 0.0
  %2077 = vmatpush2.msra.mxu0 0.0
  %2078 = vmatprep.subr.mxu0 0.0
  %2079 = vmatpush2.msra.mxu0 0.0
  %2080 = vmatprep.subr.mxu0 0.0
  %2081 = vmatpush2.msra.mxu0 0.0
  %2082 = vmatprep.subr.mxu0 0.0
  %2083 = vmatpush2.msra.mxu0 0.0
  %2084 = vmatprep.subr.mxu0 0.0
  %2085 = vmatpush2.msra.mxu0 0.0
  %2086 = vmatprep.subr.mxu0 %v1728
  %2087 = vmatpush2.msra.mxu0 %v1727
  %2088 = vmatprep.subr.mxu0 %v1720
  %2089 = vmatpush2.msra.mxu0 %v1719
  %2090 = vmatprep.subr.mxu0 %v1712
  %2091 = vmatpush2.msra.mxu0 %v1711
  %2092 = vmatprep.subr.mxu0 %v1704
  %2093 = vmatpush2.msra.mxu0 %v1703
  %2094 = vmatprep.mubr.f32.mxu0 %v1781
  %2095 = vmatmul.mubr.f32.gmra.mxu0 %v1555
  %v2096 = vpop.f32.mrf.mxu0
  %v2097 = vadd.f32 %v1742, %v2096
  %v2098 = vpop.f32.mrf.mxu0
  %v2099 = vadd.f32 %v1742, %v2098
  %2100 = vmatprep.mubr.f32.mxu0 %v1784
  %2101 = vmatmul.mubr.f32.gmra.mxu0 %v1557
  %v2102 = vpop.f32.mrf.mxu0
  %v2103 = vadd.f32 %v1747, %v2102
  %v2104 = vpop.f32.mrf.mxu0
  %v2105 = vadd.f32 %v1747, %v2104
  %2106 = vmatprep.mubr.f32.mxu0 %v1787
  %2107 = vmatmul.mubr.f32.gmra.mxu0 %v1559
  %v2108 = vpop.f32.mrf.mxu0
  %v2109 = vadd.f32 %v1752, %v2108
  %v2110 = vpop.f32.mrf.mxu0
  %v2111 = vadd.f32 %v1752, %v2110
  %2112 = vmatprep.mubr.f32.mxu0 %v1790
  %2113 = vmatmul.mubr.f32.gmra.mxu0 %v1561
  %v2114 = vpop.f32.mrf.mxu0
  %v2115 = vadd.f32 %v1757, %v2114
  %v2116 = vpop.f32.mrf.mxu0
  %v2117 = vadd.f32 %v1757, %v2116
  %2118 = vmatprep.mubr.f32.mxu0 %v1793
  %2119 = vmatmul.mubr.f32.gmra.mxu0 %v1563
  %v2120 = vpop.f32.mrf.mxu0
  %v2121 = vadd.f32 %v1762, %v2120
  %v2122 = vpop.f32.mrf.mxu0
  %v2123 = vadd.f32 %v1762, %v2122
  %2124 = vmatprep.mubr.f32.mxu0 %v1796
  %2125 = vmatmul.mubr.f32.gmra.mxu0 %v1565
  %v2126 = vpop.f32.mrf.mxu0
  %v2127 = vadd.f32 %v1767, %v2126
  %v2128 = vpop.f32.mrf.mxu0
  %v2129 = vadd.f32 %v1767, %v2128
  %2130 = vmatprep.mubr.f32.mxu0 %v1799
  %2131 = vmatmul.mubr.f32.gmra.mxu0 %v1567
  %v2132 = vpop.f32.mrf.mxu0
  %v2133 = vadd.f32 %v1772, %v2132
  %v2134 = vpop.f32.mrf.mxu0
  %v2135 = vadd.f32 %v1772, %v2134
  %2136 = vmatprep.mubr.f32.mxu0 %v1802
  %2137 = vmatmul.mubr.f32.gmra.mxu0 %v1569
  %v2138 = vpop.f32.mrf.mxu0
  %v2139 = vadd.f32 %v1777, %v2138
  %v2140 = vpop.f32.mrf.mxu0
  %v2141 = vadd.f32 %v1777, %v2140
  %2142 = vdwg.mxu0
  %2143 = vmatprep.subr.mxu0 %v1698
  %2144 = vmatpush1.msra.mxu0 %v1697
  %2145 = vmatprep.subr.mxu0 %v1690
  %2146 = vmatpush1.msra.mxu0 %v1689
  %2147 = vmatprep.subr.mxu0 %v1682
  %2148 = vmatpush1.msra.mxu0 %v1681
  %2149 = vmatprep.subr.mxu0 %v1674
  %2150 = vmatpush1.msra.mxu0 %v1673
  %2151 = vmatprep.subr.mxu0 %v1666
  %2152 = vmatpush1.msra.mxu0 %v1665
  %2153 = vmatprep.subr.mxu0 %v1658
  %2154 = vmatpush1.msra.mxu0 %v1657
  %2155 = vmatprep.subr.mxu0 %v1650
  %2156 = vmatpush1.msra.mxu0 %v1649
  %2157 = vmatprep.subr.mxu0 %v1642
  %2158 = vmatpush1.msra.mxu0 %v1641
  %2159 = vmatprep.subr.mxu0 %v1634
  %2160 = vmatpush1.msra.mxu0 %v1633
  %2161 = vmatprep.subr.mxu0 %v1626
  %2162 = vmatpush1.msra.mxu0 %v1625
  %2163 = vmatprep.subr.mxu0 %v1618
  %2164 = vmatpush1.msra.mxu0 %v1617
  %2165 = vmatprep.subr.mxu0 %v1610
  %2166 = vmatpush1.msra.mxu0 %v1609
  %2167 = vmatprep.subr.mxu0 %v1602
  %2168 = vmatpush1.msra.mxu0 %v1601
  %2169 = vmatprep.subr.mxu0 %v1594
  %2170 = vmatpush1.msra.mxu0 %v1593
  %2171 = vmatprep.subr.mxu0 %v1586
  %2172 = vmatpush1.msra.mxu0 %v1585
  %2173 = vmatprep.subr.mxu0 %v1578
  %2174 = vmatpush1.msra.mxu0 %v1577
  %2175 = vmatprep.subr.mxu0 0.0
  %2176 = vmatpush2.msra.mxu0 0.0
  %2177 = vmatprep.subr.mxu0 0.0
  %2178 = vmatpush2.msra.mxu0 0.0
  %2179 = vmatprep.subr.mxu0 0.0
  %2180 = vmatpush2.msra.mxu0 0.0
  %2181 = vmatprep.subr.mxu0 0.0
  %2182 = vmatpush2.msra.mxu0 0.0
  %2183 = vmatprep.subr.mxu0 0.0
  %2184 = vmatpush2.msra.mxu0 0.0
  %2185 = vmatprep.subr.mxu0 0.0
  %2186 = vmatpush2.msra.mxu0 0.0
  %2187 = vmatprep.subr.mxu0 0.0
  %2188 = vmatpush2.msra.mxu0 0.0
  %2189 = vmatprep.subr.mxu0 0.0
  %2190 = vmatpush2.msra.mxu0 0.0
  %2191 = vmatprep.subr.mxu0 0.0
  %2192 = vmatpush2.msra.mxu0 0.0
  %2193 = vmatprep.subr.mxu0 0.0
  %2194 = vmatpush2.msra.mxu0 0.0
  %2195 = vmatprep.subr.mxu0 0.0
  %2196 = vmatpush2.msra.mxu0 0.0
  %2197 = vmatprep.subr.mxu0 0.0
  %2198 = vmatpush2.msra.mxu0 0.0
  %2199 = vmatprep.subr.mxu0 %v1730
  %2200 = vmatpush2.msra.mxu0 %v1729
  %2201 = vmatprep.subr.mxu0 %v1722
  %2202 = vmatpush2.msra.mxu0 %v1721
  %2203 = vmatprep.subr.mxu0 %v1714
  %2204 = vmatpush2.msra.mxu0 %v1713
  %2205 = vmatprep.subr.mxu0 %v1706
  %2206 = vmatpush2.msra.mxu0 %v1705
  %2207 = vmatprep.mubr.f32.mxu0 %v1781
  %2208 = vmatmul.mubr.f32.gmra.mxu0 %v1555
  %v2209 = vpop.f32.mrf.mxu0
  %v2210 = vadd.f32 %v1742, %v2209
  %v2211 = vpop.f32.mrf.mxu0
  %v2212 = vadd.f32 %v1742, %v2211
  %2213 = vmatprep.mubr.f32.mxu0 %v1784
  %2214 = vmatmul.mubr.f32.gmra.mxu0 %v1557
  %v2215 = vpop.f32.mrf.mxu0
  %v2216 = vadd.f32 %v1747, %v2215
  %v2217 = vpop.f32.mrf.mxu0
  %v2218 = vadd.f32 %v1747, %v2217
  %2219 = vmatprep.mubr.f32.mxu0 %v1787
  %2220 = vmatmul.mubr.f32.gmra.mxu0 %v1559
  %v2221 = vpop.f32.mrf.mxu0
  %v2222 = vadd.f32 %v1752, %v2221
  %v2223 = vpop.f32.mrf.mxu0
  %v2224 = vadd.f32 %v1752, %v2223
  %2225 = vmatprep.mubr.f32.mxu0 %v1790
  %2226 = vmatmul.mubr.f32.gmra.mxu0 %v1561
  %v2227 = vpop.f32.mrf.mxu0
  %v2228 = vadd.f32 %v1757, %v2227
  %v2229 = vpop.f32.mrf.mxu0
  %v2230 = vadd.f32 %v1757, %v2229
  %2231 = vmatprep.mubr.f32.mxu0 %v1793
  %2232 = vmatmul.mubr.f32.gmra.mxu0 %v1563
  %v2233 = vpop.f32.mrf.mxu0
  %v2234 = vadd.f32 %v1762, %v2233
  %v2235 = vpop.f32.mrf.mxu0
  %v2236 = vadd.f32 %v1762, %v2235
  %2237 = vmatprep.mubr.f32.mxu0 %v1796
  %2238 = vmatmul.mubr.f32.gmra.mxu0 %v1565
  %v2239 = vpop.f32.mrf.mxu0
  %v2240 = vadd.f32 %v1767, %v2239
  %v2241 = vpop.f32.mrf.mxu0
  %v2242 = vadd.f32 %v1767, %v2241
  %2243 = vmatprep.mubr.f32.mxu0 %v1799
  %2244 = vmatmul.mubr.f32.gmra.mxu0 %v1567
  %v2245 = vpop.f32.mrf.mxu0
  %v2246 = vadd.f32 %v1772, %v2245
  %v2247 = vpop.f32.mrf.mxu0
  %v2248 = vadd.f32 %v1772, %v2247
  %2249 = vmatprep.mubr.f32.mxu0 %v1802
  %2250 = vmatmul.mubr.f32.gmra.mxu0 %v1569
  %v2251 = vpop.f32.mrf.mxu0
  %v2252 = vadd.f32 %v1777, %v2251
  %v2253 = vpop.f32.mrf.mxu0
  %v2254 = vadd.f32 %v1777, %v2253
  %2255 = vdwg.mxu0
  %v2256 = vmax.f32 %v1871, 0.0
  %v2257 = vmax.f32 %v1873, 0.0
  %v2258 = vmax.f32 %v1984, 0.0
  %v2259 = vmax.f32 %v1986, 0.0
  %v2260 = vmax.f32 %v2097, 0.0
  %v2261 = vmax.f32 %v2099, 0.0
  %v2262 = vmax.f32 %v2210, 0.0
  %v2263 = vmax.f32 %v2212, 0.0
  %v2264 = vmax.f32 %v1877, 0.0
  %v2265 = vmax.f32 %v1879, 0.0
  %v2266 = vmax.f32 %v1990, 0.0
  %v2267 = vmax.f32 %v1992, 0.0
  %v2268 = vmax.f32 %v2103, 0.0
  %v2269 = vmax.f32 %v2105, 0.0
  %v2270 = vmax.f32 %v2216, 0.0
  %v2271 = vmax.f32 %v2218, 0.0
  %v2272 = vmax.f32 %v1883, 0.0
  %v2273 = vmax.f32 %v1885, 0.0
  %v2274 = vmax.f32 %v1996, 0.0
  %v2275 = vmax.f32 %v1998, 0.0
  %v2276 = vmax.f32 %v2109, 0.0
  %v2277 = vmax.f32 %v2111, 0.0
  %v2278 = vmax.f32 %v2222, 0.0
  %v2279 = vmax.f32 %v2224, 0.0
  %v2280 = vmax.f32 %v1889, 0.0
  %v2281 = vmax.f32 %v1891, 0.0
  %v2282 = vmax.f32 %v2002, 0.0
  %v2283 = vmax.f32 %v2004, 0.0
  %v2284 = vmax.f32 %v2115, 0.0
  %v2285 = vmax.f32 %v2117, 0.0
  %v2286 = vmax.f32 %v2228, 0.0
  %v2287 = vmax.f32 %v2230, 0.0
  %v2288 = vmax.f32 %v1895, 0.0
  %v2289 = vmax.f32 %v1897, 0.0
  %v2290 = vmax.f32 %v2008, 0.0
  %v2291 = vmax.f32 %v2010, 0.0
  %v2292 = vmax.f32 %v2121, 0.0
  %v2293 = vmax.f32 %v2123, 0.0
  %v2294 = vmax.f32 %v2234, 0.0
  %v2295 = vmax.f32 %v2236, 0.0
  %v2296 = vmax.f32 %v1901, 0.0
  %v2297 = vmax.f32 %v1903, 0.0
  %v2298 = vmax.f32 %v2014, 0.0
  %v2299 = vmax.f32 %v2016, 0.0
  %v2300 = vmax.f32 %v2127, 0.0
  %v2301 = vmax.f32 %v2129, 0.0
  %v2302 = vmax.f32 %v2240, 0.0
  %v2303 = vmax.f32 %v2242, 0.0
  %v2304 = vmax.f32 %v1907, 0.0
  %v2305 = vmax.f32 %v1909, 0.0
  %v2306 = vmax.f32 %v2020, 0.0
  %v2307 = vmax.f32 %v2022, 0.0
  %v2308 = vmax.f32 %v2133, 0.0
  %v2309 = vmax.f32 %v2135, 0.0
  %v2310 = vmax.f32 %v2246, 0.0
  %v2311 = vmax.f32 %v2248, 0.0
  %v2312 = vmax.f32 %v1913, 0.0
  %v2313 = vmax.f32 %v1915, 0.0
  %v2314 = vmax.f32 %v2026, 0.0
  %v2315 = vmax.f32 %v2028, 0.0
  %v2316 = vmax.f32 %v2139, 0.0
  %v2317 = vmax.f32 %v2141, 0.0
  %v2318 = vmax.f32 %v2252, 0.0
  %v2319 = vmax.f32 %v2254, 0.0
  %v2320 = vadd.f32 %v2256, %v2257
  %v2321 = vadd.f32 %v2264, %v2265
  %v2322 = vadd.f32 %v2272, %v2273
  %v2323 = vadd.f32 %v2280, %v2281
  %v2324 = vadd.f32 %v2288, %v2289
  %v2325 = vadd.f32 %v2296, %v2297
  %v2326 = vadd.f32 %v2304, %v2305
  %v2327 = vadd.f32 %v2312, %v2313
  %v2328 = vadd.f32 %v2258, %v2259
  %v2329 = vadd.f32 %v2266, %v2267
  %v2330 = vadd.f32 %v2274, %v2275
  %v2331 = vadd.f32 %v2282, %v2283
  %v2332 = vadd.f32 %v2290, %v2291
  %v2333 = vadd.f32 %v2298, %v2299
  %v2334 = vadd.f32 %v2306, %v2307
  %v2335 = vadd.f32 %v2314, %v2315
  %v2336 = vadd.f32 %v2260, %v2261
  %v2337 = vadd.f32 %v2268, %v2269
  %v2338 = vadd.f32 %v2276, %v2277
  %v2339 = vadd.f32 %v2284, %v2285
  %v2340 = vadd.f32 %v2292, %v2293
  %v2341 = vadd.f32 %v2300, %v2301
  %v2342 = vadd.f32 %v2308, %v2309
  %v2343 = vadd.f32 %v2316, %v2317
  %v2344 = vadd.f32 %v2262, %v2263
  %v2345 = vadd.f32 %v2270, %v2271
  %v2346 = vadd.f32 %v2278, %v2279
  %v2347 = vadd.f32 %v2286, %v2287
  %v2348 = vadd.f32 %v2294, %v2295
  %v2349 = vadd.f32 %v2302, %v2303
  %v2350 = vadd.f32 %v2310, %v2311
  %v2351 = vadd.f32 %v2318, %v2319
  %v2352 = vadd.f32 %v2320, %v2328
  %v2353 = vadd.f32 %v2321, %v2329
  %v2354 = vadd.f32 %v2322, %v2330
  %v2355 = vadd.f32 %v2323, %v2331
  %v2356 = vadd.f32 %v2324, %v2332
  %v2357 = vadd.f32 %v2325, %v2333
  %v2358 = vadd.f32 %v2326, %v2334
  %v2359 = vadd.f32 %v2327, %v2335
  %v2360 = vadd.f32 %v2336, %v2344
  %v2361 = vadd.f32 %v2337, %v2345
  %v2362 = vadd.f32 %v2338, %v2346
  %v2363 = vadd.f32 %v2339, %v2347
  %v2364 = vadd.f32 %v2340, %v2348
  %v2365 = vadd.f32 %v2341, %v2349
  %v2366 = vadd.f32 %v2342, %v2350
  %v2367 = vadd.f32 %v2343, %v2351
  %v2368 = vadd.f32 %v2352, %v2360
  %v2369 = vadd.f32 %v2353, %v2361
  %v2370 = vadd.f32 %v2354, %v2362
  %v2371 = vadd.f32 %v2355, %v2363
  %v2372 = vadd.f32 %v2356, %v2364
  %v2373 = vadd.f32 %v2357, %v2365
  %v2374 = vadd.f32 %v2358, %v2366
  %v2375 = vadd.f32 %v2359, %v2367
  %v2376 = vmul.f32 %v2368, 0.125
  %v2377 = vmul.f32 %v2369, 0.125
  %v2378 = vmul.f32 %v2370, 0.125
  %v2379 = vmul.f32 %v2371, 0.125
  %v2380 = vmul.f32 %v2372, 0.125
  %v2381 = vmul.f32 %v2373, 0.125
  %v2382 = vmul.f32 %v2374, 0.125
  %v2383 = vmul.f32 %v2375, 0.125
  %v2384 = vld [vmem:[%s5] sm:$0x1f]
  %v2385 = vld [vmem:[%s6] sm:$0x1f]
  %2387 = vset.pattern.permute.xlu0 0
  %2388 = vperm.xlu0 %2387, %v2385
  %v2389 = vpop.permute.xlu0 %2388
  %vm2391 = vcmask 523264
  %v2393 = vsel %vm2391, %v2384, 0
  %2395 = vmatprep.subr.mxu0 0.0
  %2396 = vmatpush1.msra.mxu0 0.0
  %2397 = vmatprep.subr.mxu0 0.0
  %2398 = vmatpush1.msra.mxu0 0.0
  %2399 = vmatprep.subr.mxu0 0.0
  %2400 = vmatpush1.msra.mxu0 0.0
  %2401 = vmatprep.subr.mxu0 0.0
  %2402 = vmatpush1.msra.mxu0 0.0
  %2403 = vmatprep.subr.mxu0 0.0
  %2404 = vmatpush1.msra.mxu0 0.0
  %2405 = vmatprep.subr.mxu0 0.0
  %2406 = vmatpush1.msra.mxu0 0.0
  %2407 = vmatprep.subr.mxu0 0.0
  %2408 = vmatpush1.msra.mxu0 0.0
  %2409 = vmatprep.subr.mxu0 0.0
  %2410 = vmatpush1.msra.mxu0 0.0
  %2411 = vmatprep.subr.mxu0 0.0
  %2412 = vmatpush1.msra.mxu0 %v2383
  %2413 = vmatprep.subr.mxu0 0.0
  %2414 = vmatpush1.msra.mxu0 %v2382
  %2415 = vmatprep.subr.mxu0 0.0
  %2416 = vmatpush1.msra.mxu0 %v2381
  %2417 = vmatprep.subr.mxu0 0.0
  %2418 = vmatpush1.msra.mxu0 %v2380
  %2419 = vmatprep.subr.mxu0 0.0
  %2420 = vmatpush1.msra.mxu0 %v2379
  %2421 = vmatprep.subr.mxu0 0.0
  %2422 = vmatpush1.msra.mxu0 %v2378
  %2423 = vmatprep.subr.mxu0 0.0
  %2424 = vmatpush1.msra.mxu0 %v2377
  %2425 = vmatprep.subr.mxu0 0.0
  %2426 = vmatpush1.msra.mxu0 %v2376
  %2427 = vmatprep.subr.mxu0 0.0
  %2428 = vmatpush2.msra.mxu0 0.0
  %2429 = vmatprep.subr.mxu0 0.0
  %2430 = vmatpush2.msra.mxu0 0.0
  %2431 = vmatprep.subr.mxu0 0.0
  %2432 = vmatpush2.msra.mxu0 0.0
  %2433 = vmatprep.subr.mxu0 0.0
  %2434 = vmatpush2.msra.mxu0 0.0
  %2435 = vmatprep.subr.mxu0 0.0
  %2436 = vmatpush2.msra.mxu0 0.0
  %2437 = vmatprep.subr.mxu0 0.0
  %2438 = vmatpush2.msra.mxu0 0.0
  %2439 = vmatprep.subr.mxu0 0.0
  %2440 = vmatpush2.msra.mxu0 0.0
  %2441 = vmatprep.subr.mxu0 0.0
  %2442 = vmatpush2.msra.mxu0 0.0
  %2443 = vmatprep.subr.mxu0 0.0
  %2444 = vmatpush2.msra.mxu0 0.0
  %2445 = vmatprep.subr.mxu0 0.0
  %2446 = vmatpush2.msra.mxu0 0.0
  %2447 = vmatprep.subr.mxu0 0.0
  %2448 = vmatpush2.msra.mxu0 0.0
  %2449 = vmatprep.subr.mxu0 0.0
  %2450 = vmatpush2.msra.mxu0 0.0
  %2451 = vmatprep.subr.mxu0 0.0
  %2452 = vmatpush2.msra.mxu0 0.0
  %2453 = vmatprep.subr.mxu0 0.0
  %2454 = vmatpush2.msra.mxu0 0.0
  %2455 = vmatprep.subr.mxu0 0.0
  %2456 = vmatpush2.msra.mxu0 0.0
  %2457 = vmatprep.subr.mxu0 0.0
  %2458 = vmatpush2.msra.mxu0 0.0
  %2459 = vmatprep.mubr.f32.mxu0 0.0
  %2460 = vmatmul.mubr.f32.gmra.mxu0 %v2393
  %v2461 = vpop.f32.mrf.mxu0
  %v2462 = vadd.f32 %v2389, %v2461
  %v2463 = vpop.f32.mrf.mxu0
  %2464 = vdwg.mxu0
  %2465 = vst [vmem:[%s7] sm:$0x1f] %v2462
  // Predicated region
  $region30: #{_lambda_.1} parent=0 // pred_check
    _
  $region31: #{_lambda_.1} parent=0 // pred_check_branch
    %2467 = sbr.rel (0) target = $region33
  $region32: #{_lambda_.1} parent=0 // pred_region
    _
  $region33: #{_lambda_.1} parent=0 // pred_fallthru
    _
  // Predicated region
  $region34: #{_lambda_.1} parent=0 // pred_check
    _
  $region35: #{_lambda_.1} parent=0 // pred_check_branch
    %2469 = sbr.rel (0) target = $region37
  $region36: #{_lambda_.1} parent=0 // pred_region
    _
  $region37: #{_lambda_.1} parent=0 // pred_fallthru
    _

</llo_original>
